<compile_context>
chip_gen: v7x
topology: tpu7x:2x2x1
jax: 0.10.0
libtpu: 0.0.40
codegen_flags: <defaults>
</compile_context>

<pallas_src>
import functools
import math

import jax
import jax.numpy as jnp
from jax.experimental import pallas as pl
from jax.experimental.pallas import tpu as pltpu

_GUARD = 8   # zero guard rows before/after every flat padded VMEM scratch
_PADL = 8    # left zero-pad columns (multiple of 8 -> aligned scatter/extract)

# conv tap offsets (dy, dx) relative to the output position; enumeration order
# must match the row-block order of the prepared 2-D weights.
_TAPS3 = tuple((ty - 1, tx - 1) for ty in range(3) for tx in range(3))
_TAPS2 = tuple((du - 1, dv - 1) for du in range(2) for dv in range(2))


def _round_up(x, m):
    return (x + m - 1) // m * m


@functools.lru_cache(maxsize=None)
def _vmem_limit_bytes():
    # Per-generation VMEM budget: ~3/4 of physical, capped at 100 MiB
    # (v5e/v6e: 128 MiB -> 96 MiB, v7x: 64 MiB -> 48 MiB).
    try:
        cap = int(pltpu.get_tpu_info().vmem_capacity_bytes)
        return min(100 * 1024 * 1024, (cap * 3) // 4)
    except Exception:
        return 48 * 1024 * 1024


def _compiler_params():
    return pltpu.CompilerParams(
        dimension_semantics=("parallel",),
        vmem_limit_bytes=_vmem_limit_bytes(),
    )


def _gelu(x):
    # tanh-form GELU: one EUP tanh + a few VALU ops (vs. the old 12-op A&S
    # polynomial). Differs from torch's exact-erf GELU by <~1e-3*|x|, well
    # inside the bf16-matmul tolerance budget.
    c0 = 0.7978845608028654  # sqrt(2/pi)
    return 0.5 * x * (1.0 + jnp.tanh(c0 * (x + 0.044715 * x * x * x)))


# ----------------------------------------------------------------------------
# Generic fused conv kernel: flat padded scratch -> im2col -> single MXU GEMM
# ----------------------------------------------------------------------------
def _conv_kernel(*refs, H, W, Cin, Wp, taps, apply_gelu, has_residual):
    if has_residual:
        x_ref, w_ref, b_ref, res_ref, o_ref, xp_ref, col_ref = refs
    else:
        x_ref, w_ref, b_ref, o_ref, xp_ref, col_ref = refs
        res_ref = None

    M = H * Wp

    # zero the padded scratch, then place the image interior (8-aligned rows)
    xp_ref[...] = jnp.zeros(xp_ref.shape, xp_ref.dtype)
    for m in range(H):
        dst = _GUARD + (1 + m) * Wp + _PADL
        xp_ref[dst:dst + W, :] = x_ref[0, m]

    # im2col: one contiguous shifted slice per tap, cast to bf16 on the copy
    for t, (dy, dx) in enumerate(taps):
        start = _GUARD + (1 + dy) * Wp + dx
        col_ref[:, t * Cin:(t + 1) * Cin] = (
            xp_ref[start:start + M, :].astype(jnp.bfloat16))

    # one MXU GEMM with K = ntaps*Cin (was: ntaps small-K dots)
    acc = jnp.dot(col_ref[...], w_ref[...], preferred_element_type=jnp.float32)
    acc = acc + b_ref[...]
    if apply_gelu:
        acc = _gelu(acc)

    # extract valid (aligned) columns of every row; fuse the residual add
    # TODO(synk): halo'd row tiling instead of unrolled row loops at large H.
    for m in range(H):
        src = m * Wp + _PADL
        row = acc[src:src + W, :]
        if has_residual:
            row = row + res_ref[0, m]
        o_ref[0, m] = row.astype(o_ref.dtype)


def _conv_nhwc(x, w2d, b, *, taps, apply_gelu, residual=None):
    n, h, wd, cin = x.shape
    k_total, cout = w2d.shape
    if k_total != len(taps) * cin:
        raise ValueError("weight / tap mismatch")
    Wp = _round_up(_PADL + wd + 1, 8)
    L = (h + 2) * Wp + 2 * _GUARD
    M = h * Wp
    has_residual = residual is not None

    kernel = functools.partial(
        _conv_kernel, H=h, W=wd, Cin=cin, Wp=Wp, taps=tuple(taps),
        apply_gelu=apply_gelu, has_residual=has_residual)

    in_specs = [
        pl.BlockSpec((1, h, wd, cin), lambda i: (i, 0, 0, 0)),
        pl.BlockSpec((k_total, cout), lambda i: (0, 0)),
        pl.BlockSpec((1, cout), lambda i: (0, 0)),
    ]
    inputs = [x, w2d, b]
    if has_residual:
        in_specs.append(pl.BlockSpec((1, h, wd, cout), lambda i: (i, 0, 0, 0)))
        inputs.append(residual)

    return pl.pallas_call(
        kernel,
        out_shape=jax.ShapeDtypeStruct((n, h, wd, cout), jnp.float32),
        grid_spec=pltpu.PrefetchScalarGridSpec(
            num_scalar_prefetch=0,
            grid=(n,),
            in_specs=in_specs,
            out_specs=pl.BlockSpec((1, h, wd, cout), lambda i: (i, 0, 0, 0)),
            scratch_shapes=[pltpu.VMEM((L, cin), jnp.float32),
                            pltpu.VMEM((M, k_total), jnp.bfloat16)],
        ),
        compiler_params=_compiler_params(),
    )(*inputs)


def conv3x3(x, w2d, b, *, apply_gelu, residual=None):
    return _conv_nhwc(x, w2d, b, taps=_TAPS3, apply_gelu=apply_gelu,
                      residual=residual)


def conv3x3_stride2(x, w2d, b, *, apply_gelu):
    # space-to-depth (cheap XLA shuffle, TODO(synk): fuse) + 4-tap phase conv
    n, h, wd, c = x.shape
    h2, w2 = h // 2, wd // 2
    xp = x.reshape(n, h2, 2, w2, 2, c).transpose(0, 1, 3, 2, 4, 5)
    xp = xp.reshape(n, h2, w2, 4 * c)
    return _conv_nhwc(xp, w2d, b, taps=_TAPS2, apply_gelu=apply_gelu)


def conv_transpose4x4_stride2(x, w2d, b4, *, apply_gelu):
    # sub-pixel lowering: 3x3-footprint conv -> 4*Cout phase channels, then a
    # cheap XLA phase interleave (TODO(synk): fuse into the next kernel).
    n, h, wd, c = x.shape
    y = _conv_nhwc(x, w2d, b4, taps=_TAPS3, apply_gelu=apply_gelu)
    cout = y.shape[-1] // 4
    y = y.reshape(n, h, wd, 2, 2, cout).transpose(0, 1, 3, 2, 4, 5)
    return y.reshape(n, 2 * h, 2 * wd, cout)


# ----------------------------------------------------------------------------
# Fused ResBlock chain (whole EBlock / DBlock in one pallas_call)
# ----------------------------------------------------------------------------
def _chain_kernel(x_ref, w_ref, b_ref, o_ref, s1_ref, s2_ref, col_ref, *,
                  H, W, C, Wp, num_res):
    M = H * Wp

    # zero once: pad rows/cols stay zero forever because only valid columns
    # are ever written back (no mask needed, no HBM mask input)
    s1_ref[...] = jnp.zeros(s1_ref.shape, s1_ref.dtype)
    s2_ref[...] = jnp.zeros(s2_ref.shape, s2_ref.dtype)
    for m in range(H):
        dst = _GUARD + (1 + m) * Wp + _PADL
        s1_ref[dst:dst + W, :] = x_ref[0, m]

    def conv_from(src_ref, idx):
        # im2col (bf16, cast on copy) + one MXU GEMM with K = 9*C
        for t, (dy, dx) in enumerate(_TAPS3):
            start = _GUARD + (1 + dy) * Wp + dx
            col_ref[:, t * C:(t + 1) * C] = (
                src_ref[start:start + M, :].astype(jnp.bfloat16))
        acc = jnp.dot(col_ref[...], w_ref[idx],
                      preferred_element_type=jnp.float32)
        return acc + b_ref[idx:idx + 1, :]

    for r in range(num_res):
        # conv1 + GELU -> s2 (valid columns only)
        y = _gelu(conv_from(s1_ref, 2 * r))
        for m in range(H):
            src = m * Wp + _PADL
            dst = _GUARD + (1 + m) * Wp + _PADL
            s2_ref[dst:dst + W, :] = y[src:src + W, :]
        # conv2 + f32 residual add -> s1 (residual path stays f32)
        y = conv_from(s2_ref, 2 * r + 1)
        for m in range(H):
            src = m * Wp + _PADL
            dst = _GUARD + (1 + m) * Wp + _PADL
            s1_ref[dst:dst + W, :] = y[src:src + W, :] + s1_ref[dst:dst + W, :]

    for m in range(H):
        dst = _GUARD + (1 + m) * Wp + _PADL
        o_ref[0, m] = s1_ref[dst:dst + W, :]


def resblock_chain(x, w_stack, b_stack, num_res):
    n, h, wd, c = x.shape
    Wp = _round_up(_PADL + wd + 1, 8)
    L = (h + 2) * Wp + 2 * _GUARD
    M = h * Wp

    kernel = functools.partial(_chain_kernel, H=h, W=wd, C=c, Wp=Wp,
                               num_res=num_res)
    return pl.pallas_call(
        kernel,
        out_shape=jax.ShapeDtypeStruct((n, h, wd, c), jnp.float32),
        grid_spec=pltpu.PrefetchScalarGridSpec(
            num_scalar_prefetch=0,
            grid=(n,),
            in_specs=[
                pl.BlockSpec((1, h, wd, c), lambda i: (i, 0, 0, 0)),
                pl.BlockSpec((num_res * 2, 9 * c, c), lambda i: (0, 0, 0)),
                pl.BlockSpec((num_res * 2, c), lambda i: (0, 0)),
            ],
            out_specs=pl.BlockSpec((1, h, wd, c), lambda i: (i, 0, 0, 0)),
            scratch_shapes=[pltpu.VMEM((L, c), jnp.float32),
                            pltpu.VMEM((L, c), jnp.float32),
                            pltpu.VMEM((M, 9 * c), jnp.bfloat16)],
        ),
        compiler_params=_compiler_params(),
    )(x, w_stack, b_stack)


# ----------------------------------------------------------------------------
# Fused concat + 1x1 conv (+GELU): two-input GEMM, concat never materialized
# ----------------------------------------------------------------------------
def _cat_conv1x1_kernel(z_ref, r_ref, wz_ref, wr_ref, b_ref, o_ref):
    acc = jnp.dot(z_ref[...].astype(jnp.bfloat16), wz_ref[...],
                  preferred_element_type=jnp.float32)
    acc = acc + jnp.dot(r_ref[...].astype(jnp.bfloat16), wr_ref[...],
                        preferred_element_type=jnp.float32)
    o_ref[...] = _gelu(acc + b_ref[...]).astype(o_ref.dtype)


def _pick_tm(m):
    # prefer >=2 grid steps (megacore) with the biggest 8-aligned divisor tile
    for cand in (1024, 512, 256, 128, 64, 32, 16, 8):
        if m % cand == 0 and m // cand >= 2:
            return cand
    for cand in (1024, 512, 256, 128, 64, 32, 16, 8):
        if m % cand == 0:
            return cand
    return m  # TODO(synk): remainder-block handling for ragged M


def cat_conv1x1(z, r, wz, wr, b):
    n, h, wd, c1 = z.shape
    c2 = r.shape[-1]
    cout = wz.shape[-1]
    m = n * h * wd
    tm = _pick_tm(m)
    zf = z.reshape(m, c1)
    rf = r.reshape(m, c2)
    out = pl.pallas_call(
        _cat_conv1x1_kernel,
        out_shape=jax.ShapeDtypeStruct((m, cout), jnp.float32),
        grid_spec=pltpu.PrefetchScalarGridSpec(
            num_scalar_prefetch=0,
            grid=(m // tm,),
            in_specs=[
                pl.BlockSpec((tm, c1), lambda i: (i, 0)),
                pl.BlockSpec((tm, c2), lambda i: (i, 0)),
                pl.BlockSpec((c1, cout), lambda i: (0, 0)),
                pl.BlockSpec((c2, cout), lambda i: (0, 0)),
                pl.BlockSpec((1, cout), lambda i: (0, 0)),
            ],
            out_specs=pl.BlockSpec((tm, cout), lambda i: (i, 0)),
        ),
        compiler_params=_compiler_params(),
    )(zf, rf, wz, wr, b)
    return out.reshape(n, h, wd, cout)


# ----------------------------------------------------------------------------
# Parameter construction (PyTorch-default-like uniform init) + kernel-form prep
# ----------------------------------------------------------------------------
def _init_conv(key, cin, cout, k, transpose=False):
    wkey, bkey = jax.random.split(key)
    if transpose:
        wshape = (cin, cout, k, k)
        fan_in = cout * k * k
    else:
        wshape = (cout, cin, k, k)
        fan_in = cin * k * k
    bound = 1.0 / math.sqrt(fan_in)
    w = jax.random.uniform(wkey, wshape, jnp.float32, -bound, bound)
    b = jax.random.uniform(bkey, (cout,), jnp.float32, -bound, bound)
    return w, b


def init_unet_params(key, num_res=8, base_channel=32):
    bc = base_channel
    keys = iter(jax.random.split(key, 8 + 12 * num_res))
    return {
        "feat_extract": [
            _init_conv(next(keys), 3, bc, 3),
            _init_conv(next(keys), bc, bc * 2, 3),
            _init_conv(next(keys), bc * 2, bc * 4, 3),
            _init_conv(next(keys), bc * 4, bc * 2, 4, transpose=True),
            _init_conv(next(keys), bc * 2, bc, 4, transpose=True),
            _init_conv(next(keys), bc, 3, 3),
        ],
        "Encoder": [[(_init_conv(next(keys), c, c, 3), _init_conv(next(keys), c, c, 3))
                     for _ in range(num_res)] for c in (bc, bc * 2, bc * 4)],
        "Decoder": [[(_init_conv(next(keys), c, c, 3), _init_conv(next(keys), c, c, 3))
                     for _ in range(num_res)] for c in (bc * 4, bc * 2, bc)],
        "Convs": [
            _init_conv(next(keys), bc * 4, bc * 2, 1),
            _init_conv(next(keys), bc * 2, bc, 1),
        ],
    }


def _w_to_2d(w):
    # Conv2d weight (Cout, Cin, k, k) -> (k*k*Cin, Cout), tap-major rows
    cout, cin, k, _ = w.shape
    return jnp.transpose(w, (2, 3, 1, 0)).reshape(k * k * cin, cout)


def _phase_weight(w):
    # stride-2 3x3 conv -> 4-tap conv over the 4 space-to-depth phases
    cout, cin = w.shape[0], w.shape[1]
    zero = jnp.zeros((cin, cout), w.dtype)

    def dsel(d_half, parity):
        if d_half == 0:
            return 0 if parity == 1 else None
        return 1 + parity

    taps = []
    for du in (0, 1):
        for dv in (0, 1):
            blocks = []
            for p in (0, 1):
                for q in (0, 1):
                    dy, dx = dsel(du, p), dsel(dv, q)
                    if dy is None or dx is None:
                        blocks.append(zero)
                    else:
                        blocks.append(jnp.transpose(w[:, :, dy, dx]))
            taps.append(jnp.concatenate(blocks, axis=0))   # (4*Cin, Cout)
    return jnp.stack(taps, axis=0)                          # (4, 4*Cin, Cout)


def _tconv_weight(w):
    # ConvTranspose2d(k=4,s=2,p=1) weight (Cin, Cout, 4, 4) ->
    # combined 3x3-footprint weight (9, Cin, 4*Cout), phase order (a, b).
    # TODO(synk): 4/9 of these (Cin,Cout) blocks are structurally zero.
    cin, cout = w.shape[0], w.shape[1]
    zero = jnp.zeros((cin, cout), w.dtype)
    taps = []
    for ty in range(3):
        for tx in range(3):
            blocks = []
            for a in (0, 1):
                for b in (0, 1):
                    dy, dx = ty - a, tx - b
                    if dy in (0, 1) and dx in (0, 1):
                        blocks.append(w[:, :, 3 - a - 2 * dy, 3 - b - 2 * dx])
                    else:
                        blocks.append(zero)
            taps.append(jnp.concatenate(blocks, axis=1))     # (Cin, 4*Cout)
    return jnp.stack(taps, axis=0)                            # (9, Cin, 4Cout)


def _bf16(w):
    return w.astype(jnp.bfloat16)


def _flat2d(w3):
    return w3.reshape(-1, w3.shape[-1])


def prepare_unet_params(raw):
    def chain(block):
        ws, bs = [], []
        for (w1, b1), (w2, b2) in block:
            ws.append(_w_to_2d(w1)); bs.append(b1)
            ws.append(_w_to_2d(w2)); bs.append(b2)
        return {"w": _bf16(jnp.stack(ws, axis=0)), "b": jnp.stack(bs, axis=0)}

    (w0, b0), (w1, b1), (w2, b2), (w3, b3), (w4, b4), (w5, b5) = raw["feat_extract"]
    (wc0, bc0), (wc1, bc1) = raw["Convs"]
    wc0m = jnp.transpose(wc0[:, :, 0, 0])   # (Cin_total, Cout)
    wc1m = jnp.transpose(wc1[:, :, 0, 0])
    h0, h1 = wc0.shape[1] // 2, wc1.shape[1] // 2
    return {
        "fe0": {"w": _bf16(_w_to_2d(w0)), "b": b0.reshape(1, -1)},
        "fe1": {"w": _bf16(_flat2d(_phase_weight(w1))), "b": b1.reshape(1, -1)},
        "fe2": {"w": _bf16(_flat2d(_phase_weight(w2))), "b": b2.reshape(1, -1)},
        "fe3": {"w": _bf16(_flat2d(_tconv_weight(w3))), "b": jnp.tile(b3, 4).reshape(1, -1)},
        "fe4": {"w": _bf16(_flat2d(_tconv_weight(w4))), "b": jnp.tile(b4, 4).reshape(1, -1)},
        "fe5": {"w": _bf16(_w_to_2d(w5)), "b": b5.reshape(1, -1)},
        "enc": [chain(blk) for blk in raw["Encoder"]],
        "dec": [chain(blk) for blk in raw["Decoder"]],
        "cv0": {"wz": _bf16(wc0m[:h0]), "wr": _bf16(wc0m[h0:]), "b": bc0.reshape(1, -1)},
        "cv1": {"wz": _bf16(wc1m[:h1]), "wr": _bf16(wc1m[h1:]), "b": bc1.reshape(1, -1)},
    }


# ----------------------------------------------------------------------------
# UNet forward (matches the PyTorch module's forward)
# ----------------------------------------------------------------------------
def unet_forward(p, x_nchw, *, num_res):
    x = jnp.transpose(x_nchw, (0, 2, 3, 1))                    # NCHW -> NHWC
    z = conv3x3(x, p["fe0"]["w"], p["fe0"]["b"], apply_gelu=True)
    res1 = resblock_chain(z, p["enc"][0]["w"], p["enc"][0]["b"], num_res)
    z = conv3x3_stride2(res1, p["fe1"]["w"], p["fe1"]["b"], apply_gelu=True)
    res2 = resblock_chain(z, p["enc"][1]["w"], p["enc"][1]["b"], num_res)
    z = conv3x3_stride2(res2, p["fe2"]["w"], p["fe2"]["b"], apply_gelu=True)
    z = resblock_chain(z, p["enc"][2]["w"], p["enc"][2]["b"], num_res)
    z = resblock_chain(z, p["dec"][0]["w"], p["dec"][0]["b"], num_res)
    z = conv_transpose4x4_stride2(z, p["fe3"]["w"], p["fe3"]["b"], apply_gelu=True)
    z = cat_conv1x1(z, res2, p["cv0"]["wz"], p["cv0"]["wr"], p["cv0"]["b"])
    z = resblock_chain(z, p["dec"][1]["w"], p["dec"][1]["b"], num_res)
    z = conv_transpose4x4_stride2(z, p["fe4"]["w"], p["fe4"]["b"], apply_gelu=True)
    z = cat_conv1x1(z, res1, p["cv1"]["wz"], p["cv1"]["wr"], p["cv1"]["b"])
    z = resblock_chain(z, p["dec"][2]["w"], p["dec"][2]["b"], num_res)
    out = conv3x3(z, p["fe5"]["w"], p["fe5"]["b"], apply_gelu=False, residual=x)
    return jnp.transpose(out, (0, 3, 1, 2))                    # NHWC -> NCHW


# ----------------------------------------------------------------------------
if __name__ == "__main__":
    NUM_RES = 2            # UNet(num_res=2): small but structurally faithful
    B, C, H, W = 2, 3, 16, 16

    raw = init_unet_params(jax.random.PRNGKey(42), num_res=NUM_RES)
    params = prepare_unet_params(raw)
    x = jax.random.normal(jax.random.PRNGKey(0), (B, C, H, W), dtype=jnp.float32)

    # --- numerical sanity checks of the fused kernels vs lax.conv (loose bf16
    #     tolerance: weights/activations are bf16 on the MXU) ------------------
    def _ref_conv(a, w, b):
        return jax.lax.conv_general_dilated(
            a, jnp.transpose(w, (2, 3, 1, 0)), (1, 1), "SAME",
            dimension_numbers=("NHWC", "HWIO", "NHWC")) + b

    def _rel(a, b):
        return float(jnp.linalg.norm(a - b) / (jnp.linalg.norm(b) + 1e-6))

    xchk = jnp.transpose(x, (0, 2, 3, 1))
    wchk, bchk = raw["feat_extract"][0]
    got = jax.jit(functools.partial(conv3x3, apply_gelu=False))(
        xchk, params["fe0"]["w"], params["fe0"]["b"])
    assert _rel(got, _ref_conv(xchk, wchk, bchk)) < 3e-2, "conv3x3 mismatch"

    z0 = jax.random.normal(jax.random.PRNGKey(3), (B, 16, 16, 32), jnp.float32)
    got = jax.jit(functools.partial(resblock_chain, num_res=NUM_RES))(
        z0, params["enc"][0]["w"], params["enc"][0]["b"])
    ref = z0
    for (w1, b1), (w2, b2) in raw["Encoder"][0]:
        ref = ref + _ref_conv(_gelu(_ref_conv(ref, w1, b1)), w2, b2)
    assert _rel(got, ref) < 3e-2, "resblock_chain mismatch"

    # --- full forward pass ----------------------------------------------------
    fwd = jax.jit(functools.partial(unet_forward, params, num_res=NUM_RES))
    out = jax.block_until_ready(fwd(x))

    assert out.shape == (B, C, H, W), out.shape
    assert out.dtype == jnp.float32
    assert bool(jnp.all(jnp.isfinite(out)))
    print("KERNEL_OK")
</pallas_src>

<mosaic_0001>
module attributes {stable_mosaic.version = 11 : i64} {
  func.func @_conv_kernel(%arg0: i32, %arg1: memref<1x16x16x3xf32, #tpu.memory_space<vmem>>, %arg2: memref<27x32xbf16, #tpu.memory_space<vmem>>, %arg3: memref<1x32xf32, #tpu.memory_space<vmem>>, %arg4: memref<1x16x16x32xf32, #tpu.memory_space<vmem>>, %arg5: memref<592x3xf32, #tpu.memory_space<vmem>>, %arg6: memref<512x27xbf16, #tpu.memory_space<vmem>>) attributes {dimension_semantics = [#tpu.dimension_semantics<parallel>], iteration_bounds = array<i64: 2>, scalar_prefetch = 0 : i64, scratch_operands = 2 : i64, tpu.core_type = #tpu.core_type<tc>, window_params = [{transform_indices = @transform_0, window_bounds = array<i64: 1, 16, 16, 3>}, {pipeline_mode = #tpu.pipeline_mode<synchronous>, transform_indices = @transform_1, window_bounds = array<i64: 27, 32>}, {pipeline_mode = #tpu.pipeline_mode<synchronous>, transform_indices = @transform_2, window_bounds = array<i64: 1, 32>}, {transform_indices = @transform_3, window_bounds = array<i64: 1, 16, 16, 32>}]} {
    %cst = arith.constant 0.000000e+00 : f32
    %0 = vector.broadcast %cst : f32 to vector<592x3xf32>
    %c0 = arith.constant 0 : index
    %c0_0 = arith.constant 0 : index
    %1 = vector.load %arg5[%c0, %c0_0] : memref<592x3xf32, #tpu.memory_space<vmem>>, vector<592x3xf32>
    tpu.vector_store %arg5[%c0, %c0_0], %0 {strides = array<i32>} : memref<592x3xf32, #tpu.memory_space<vmem>>, vector<592x3xf32>,
    %c0_1 = arith.constant 0 : index
    %c0_2 = arith.constant 0 : index
    %c0_3 = arith.constant 0 : index
    %c0_4 = arith.constant 0 : index
    %2 = vector.load %arg1[%c0_1, %c0_2, %c0_3, %c0_4] : memref<1x16x16x3xf32, #tpu.memory_space<vmem>>, vector<1x1x16x3xf32>
    %3 = vector.shape_cast %2 : vector<1x1x16x3xf32> to vector<16x3xf32>
    %c48 = arith.constant 48 : index
    %c0_5 = arith.constant 0 : index
    %4 = vector.load %arg5[%c48, %c0_5] : memref<592x3xf32, #tpu.memory_space<vmem>>, vector<16x3xf32>
    tpu.vector_store %arg5[%c48, %c0_5], %3 {strides = array<i32>} : memref<592x3xf32, #tpu.memory_space<vmem>>, vector<16x3xf32>,
    %c0_6 = arith.constant 0 : index
    %c1 = arith.constant 1 : index
    %c0_7 = arith.constant 0 : index
    %c0_8 = arith.constant 0 : index
    %5 = vector.load %arg1[%c0_6, %c1, %c0_7, %c0_8] : memref<1x16x16x3xf32, #tpu.memory_space<vmem>>, vector<1x1x16x3xf32>
    %6 = vector.shape_cast %5 : vector<1x1x16x3xf32> to vector<16x3xf32>
    %c80 = arith.constant 80 : index
    %c0_9 = arith.constant 0 : index
    %7 = vector.load %arg5[%c80, %c0_9] : memref<592x3xf32, #tpu.memory_space<vmem>>, vector<16x3xf32>
    tpu.vector_store %arg5[%c80, %c0_9], %6 {strides = array<i32>} : memref<592x3xf32, #tpu.memory_space<vmem>>, vector<16x3xf32>,
    %c0_10 = arith.constant 0 : index
    %c2 = arith.constant 2 : index
    %c0_11 = arith.constant 0 : index
    %c0_12 = arith.constant 0 : index
    %8 = vector.load %arg1[%c0_10, %c2, %c0_11, %c0_12] : memref<1x16x16x3xf32, #tpu.memory_space<vmem>>, vector<1x1x16x3xf32>
    %9 = vector.shape_cast %8 : vector<1x1x16x3xf32> to vector<16x3xf32>
    %c112 = arith.constant 112 : index
    %c0_13 = arith.constant 0 : index
    %10 = vector.load %arg5[%c112, %c0_13] : memref<592x3xf32, #tpu.memory_space<vmem>>, vector<16x3xf32>
    tpu.vector_store %arg5[%c112, %c0_13], %9 {strides = array<i32>} : memref<592x3xf32, #tpu.memory_space<vmem>>, vector<16x3xf32>,
    %c0_14 = arith.constant 0 : index
    %c3 = arith.constant 3 : index
    %c0_15 = arith.constant 0 : index
    %c0_16 = arith.constant 0 : index
    %11 = vector.load %arg1[%c0_14, %c3, %c0_15, %c0_16] : memref<1x16x16x3xf32, #tpu.memory_space<vmem>>, vector<1x1x16x3xf32>
    %12 = vector.shape_cast %11 : vector<1x1x16x3xf32> to vector<16x3xf32>
    %c144 = arith.constant 144 : index
    %c0_17 = arith.constant 0 : index
    %13 = vector.load %arg5[%c144, %c0_17] : memref<592x3xf32, #tpu.memory_space<vmem>>, vector<16x3xf32>
    tpu.vector_store %arg5[%c144, %c0_17], %12 {strides = array<i32>} : memref<592x3xf32, #tpu.memory_space<vmem>>, vector<16x3xf32>,
    %c0_18 = arith.constant 0 : index
    %c4 = arith.constant 4 : index
    %c0_19 = arith.constant 0 : index
    %c0_20 = arith.constant 0 : index
    %14 = vector.load %arg1[%c0_18, %c4, %c0_19, %c0_20] : memref<1x16x16x3xf32, #tpu.memory_space<vmem>>, vector<1x1x16x3xf32>
    %15 = vector.shape_cast %14 : vector<1x1x16x3xf32> to vector<16x3xf32>
    %c176 = arith.constant 176 : index
    %c0_21 = arith.constant 0 : index
    %16 = vector.load %arg5[%c176, %c0_21] : memref<592x3xf32, #tpu.memory_space<vmem>>, vector<16x3xf32>
    tpu.vector_store %arg5[%c176, %c0_21], %15 {strides = array<i32>} : memref<592x3xf32, #tpu.memory_space<vmem>>, vector<16x3xf32>,
    %c0_22 = arith.constant 0 : index
    %c5 = arith.constant 5 : index
    %c0_23 = arith.constant 0 : index
    %c0_24 = arith.constant 0 : index
    %17 = vector.load %arg1[%c0_22, %c5, %c0_23, %c0_24] : memref<1x16x16x3xf32, #tpu.memory_space<vmem>>, vector<1x1x16x3xf32>
    %18 = vector.shape_cast %17 : vector<1x1x16x3xf32> to vector<16x3xf32>
    %c208 = arith.constant 208 : index
    %c0_25 = arith.constant 0 : index
    %19 = vector.load %arg5[%c208, %c0_25] : memref<592x3xf32, #tpu.memory_space<vmem>>, vector<16x3xf32>
    tpu.vector_store %arg5[%c208, %c0_25], %18 {strides = array<i32>} : memref<592x3xf32, #tpu.memory_space<vmem>>, vector<16x3xf32>,
    %c0_26 = arith.constant 0 : index
    %c6 = arith.constant 6 : index
    %c0_27 = arith.constant 0 : index
    %c0_28 = arith.constant 0 : index
    %20 = vector.load %arg1[%c0_26, %c6, %c0_27, %c0_28] : memref<1x16x16x3xf32, #tpu.memory_space<vmem>>, vector<1x1x16x3xf32>
    %21 = vector.shape_cast %20 : vector<1x1x16x3xf32> to vector<16x3xf32>
    %c240 = arith.constant 240 : index
    %c0_29 = arith.constant 0 : index
    %22 = vector.load %arg5[%c240, %c0_29] : memref<592x3xf32, #tpu.memory_space<vmem>>, vector<16x3xf32>
    tpu.vector_store %arg5[%c240, %c0_29], %21 {strides = array<i32>} : memref<592x3xf32, #tpu.memory_space<vmem>>, vector<16x3xf32>,
    %c0_30 = arith.constant 0 : index
    %c7 = arith.constant 7 : index
    %c0_31 = arith.constant 0 : index
    %c0_32 = arith.constant 0 : index
    %23 = vector.load %arg1[%c0_30, %c7, %c0_31, %c0_32] : memref<1x16x16x3xf32, #tpu.memory_space<vmem>>, vector<1x1x16x3xf32>
    %24 = vector.shape_cast %23 : vector<1x1x16x3xf32> to vector<16x3xf32>
    %c272 = arith.constant 272 : index
    %c0_33 = arith.constant 0 : index
    %25 = vector.load %arg5[%c272, %c0_33] : memref<592x3xf32, #tpu.memory_space<vmem>>, vector<16x3xf32>
    tpu.vector_store %arg5[%c272, %c0_33], %24 {strides = array<i32>} : memref<592x3xf32, #tpu.memory_space<vmem>>, vector<16x3xf32>,
    %c0_34 = arith.constant 0 : index
    %c8 = arith.constant 8 : index
    %c0_35 = arith.constant 0 : index
    %c0_36 = arith.constant 0 : index
    %26 = vector.load %arg1[%c0_34, %c8, %c0_35, %c0_36] : memref<1x16x16x3xf32, #tpu.memory_space<vmem>>, vector<1x1x16x3xf32>
    %27 = vector.shape_cast %26 : vector<1x1x16x3xf32> to vector<16x3xf32>
    %c304 = arith.constant 304 : index
    %c0_37 = arith.constant 0 : index
    %28 = vector.load %arg5[%c304, %c0_37] : memref<592x3xf32, #tpu.memory_space<vmem>>, vector<16x3xf32>
    tpu.vector_store %arg5[%c304, %c0_37], %27 {strides = array<i32>} : memref<592x3xf32, #tpu.memory_space<vmem>>, vector<16x3xf32>,
    %c0_38 = arith.constant 0 : index
    %c9 = arith.constant 9 : index
    %c0_39 = arith.constant 0 : index
    %c0_40 = arith.constant 0 : index
    %29 = vector.load %arg1[%c0_38, %c9, %c0_39, %c0_40] : memref<1x16x16x3xf32, #tpu.memory_space<vmem>>, vector<1x1x16x3xf32>
    %30 = vector.shape_cast %29 : vector<1x1x16x3xf32> to vector<16x3xf32>
    %c336 = arith.constant 336 : index
    %c0_41 = arith.constant 0 : index
    %31 = vector.load %arg5[%c336, %c0_41] : memref<592x3xf32, #tpu.memory_space<vmem>>, vector<16x3xf32>
    tpu.vector_store %arg5[%c336, %c0_41], %30 {strides = array<i32>} : memref<592x3xf32, #tpu.memory_space<vmem>>, vector<16x3xf32>,
    %c0_42 = arith.constant 0 : index
    %c10 = arith.constant 10 : index
    %c0_43 = arith.constant 0 : index
    %c0_44 = arith.constant 0 : index
    %32 = vector.load %arg1[%c0_42, %c10, %c0_43, %c0_44] : memref<1x16x16x3xf32, #tpu.memory_space<vmem>>, vector<1x1x16x3xf32>
    %33 = vector.shape_cast %32 : vector<1x1x16x3xf32> to vector<16x3xf32>
    %c368 = arith.constant 368 : index
    %c0_45 = arith.constant 0 : index
    %34 = vector.load %arg5[%c368, %c0_45] : memref<592x3xf32, #tpu.memory_space<vmem>>, vector<16x3xf32>
    tpu.vector_store %arg5[%c368, %c0_45], %33 {strides = array<i32>} : memref<592x3xf32, #tpu.memory_space<vmem>>, vector<16x3xf32>,
    %c0_46 = arith.constant 0 : index
    %c11 = arith.constant 11 : index
    %c0_47 = arith.constant 0 : index
    %c0_48 = arith.constant 0 : index
    %35 = vector.load %arg1[%c0_46, %c11, %c0_47, %c0_48] : memref<1x16x16x3xf32, #tpu.memory_space<vmem>>, vector<1x1x16x3xf32>
    %36 = vector.shape_cast %35 : vector<1x1x16x3xf32> to vector<16x3xf32>
    %c400 = arith.constant 400 : index
    %c0_49 = arith.constant 0 : index
    %37 = vector.load %arg5[%c400, %c0_49] : memref<592x3xf32, #tpu.memory_space<vmem>>, vector<16x3xf32>
    tpu.vector_store %arg5[%c400, %c0_49], %36 {strides = array<i32>} : memref<592x3xf32, #tpu.memory_space<vmem>>, vector<16x3xf32>,
    %c0_50 = arith.constant 0 : index
    %c12 = arith.constant 12 : index
    %c0_51 = arith.constant 0 : index
    %c0_52 = arith.constant 0 : index
    %38 = vector.load %arg1[%c0_50, %c12, %c0_51, %c0_52] : memref<1x16x16x3xf32, #tpu.memory_space<vmem>>, vector<1x1x16x3xf32>
    %39 = vector.shape_cast %38 : vector<1x1x16x3xf32> to vector<16x3xf32>
    %c432 = arith.constant 432 : index
    %c0_53 = arith.constant 0 : index
    %40 = vector.load %arg5[%c432, %c0_53] : memref<592x3xf32, #tpu.memory_space<vmem>>, vector<16x3xf32>
    tpu.vector_store %arg5[%c432, %c0_53], %39 {strides = array<i32>} : memref<592x3xf32, #tpu.memory_space<vmem>>, vector<16x3xf32>,
    %c0_54 = arith.constant 0 : index
    %c13 = arith.constant 13 : index
    %c0_55 = arith.constant 0 : index
    %c0_56 = arith.constant 0 : index
    %41 = vector.load %arg1[%c0_54, %c13, %c0_55, %c0_56] : memref<1x16x16x3xf32, #tpu.memory_space<vmem>>, vector<1x1x16x3xf32>
    %42 = vector.shape_cast %41 : vector<1x1x16x3xf32> to vector<16x3xf32>
    %c464 = arith.constant 464 : index
    %c0_57 = arith.constant 0 : index
    %43 = vector.load %arg5[%c464, %c0_57] : memref<592x3xf32, #tpu.memory_space<vmem>>, vector<16x3xf32>
    tpu.vector_store %arg5[%c464, %c0_57], %42 {strides = array<i32>} : memref<592x3xf32, #tpu.memory_space<vmem>>, vector<16x3xf32>,
    %c0_58 = arith.constant 0 : index
    %c14 = arith.constant 14 : index
    %c0_59 = arith.constant 0 : index
    %c0_60 = arith.constant 0 : index
    %44 = vector.load %arg1[%c0_58, %c14, %c0_59, %c0_60] : memref<1x16x16x3xf32, #tpu.memory_space<vmem>>, vector<1x1x16x3xf32>
    %45 = vector.shape_cast %44 : vector<1x1x16x3xf32> to vector<16x3xf32>
    %c496 = arith.constant 496 : index
    %c0_61 = arith.constant 0 : index
    %46 = vector.load %arg5[%c496, %c0_61] : memref<592x3xf32, #tpu.memory_space<vmem>>, vector<16x3xf32>
    tpu.vector_store %arg5[%c496, %c0_61], %45 {strides = array<i32>} : memref<592x3xf32, #tpu.memory_space<vmem>>, vector<16x3xf32>,
    %c0_62 = arith.constant 0 : index
    %c15 = arith.constant 15 : index
    %c0_63 = arith.constant 0 : index
    %c0_64 = arith.constant 0 : index
    %47 = vector.load %arg1[%c0_62, %c15, %c0_63, %c0_64] : memref<1x16x16x3xf32, #tpu.memory_space<vmem>>, vector<1x1x16x3xf32>
    %48 = vector.shape_cast %47 : vector<1x1x16x3xf32> to vector<16x3xf32>
    %c528 = arith.constant 528 : index
    %c0_65 = arith.constant 0 : index
    %49 = vector.load %arg5[%c528, %c0_65] : memref<592x3xf32, #tpu.memory_space<vmem>>, vector<16x3xf32>
    tpu.vector_store %arg5[%c528, %c0_65], %48 {strides = array<i32>} : memref<592x3xf32, #tpu.memory_space<vmem>>, vector<16x3xf32>,
    %c7_66 = arith.constant 7 : index
    %c0_67 = arith.constant 0 : index
    %50 = vector.load %arg5[%c7_66, %c0_67] : memref<592x3xf32, #tpu.memory_space<vmem>>, vector<512x3xf32>
    %51 = arith.truncf %50 : vector<512x3xf32> to vector<512x3xbf16>
    %c0_68 = arith.constant 0 : index
    %c0_69 = arith.constant 0 : index
    %52 = vector.load %arg6[%c0_68, %c0_69] : memref<512x27xbf16, #tpu.memory_space<vmem>>, vector<512x3xbf16>
    tpu.vector_store %arg6[%c0_68, %c0_69], %51 {strides = array<i32>} : memref<512x27xbf16, #tpu.memory_space<vmem>>, vector<512x3xbf16>,
    %c8_70 = arith.constant 8 : index
    %c0_71 = arith.constant 0 : index
    %53 = vector.load %arg5[%c8_70, %c0_71] : memref<592x3xf32, #tpu.memory_space<vmem>>, vector<512x3xf32>
    %54 = arith.truncf %53 : vector<512x3xf32> to vector<512x3xbf16>
    %c0_72 = arith.constant 0 : index
    %c3_73 = arith.constant 3 : index
    %55 = vector.load %arg6[%c0_72, %c3_73] : memref<512x27xbf16, #tpu.memory_space<vmem>>, vector<512x3xbf16>
    tpu.vector_store %arg6[%c0_72, %c3_73], %54 {strides = array<i32>} : memref<512x27xbf16, #tpu.memory_space<vmem>>, vector<512x3xbf16>,
    %c9_74 = arith.constant 9 : index
    %c0_75 = arith.constant 0 : index
    %56 = vector.load %arg5[%c9_74, %c0_75] : memref<592x3xf32, #tpu.memory_space<vmem>>, vector<512x3xf32>
    %57 = arith.truncf %56 : vector<512x3xf32> to vector<512x3xbf16>
    %c0_76 = arith.constant 0 : index
    %c6_77 = arith.constant 6 : index
    %58 = vector.load %arg6[%c0_76, %c6_77] : memref<512x27xbf16, #tpu.memory_space<vmem>>, vector<512x3xbf16>
    tpu.vector_store %arg6[%c0_76, %c6_77], %57 {strides = array<i32>} : memref<512x27xbf16, #tpu.memory_space<vmem>>, vector<512x3xbf16>,
    %c39 = arith.constant 39 : index
    %c0_78 = arith.constant 0 : index
    %59 = vector.load %arg5[%c39, %c0_78] : memref<592x3xf32, #tpu.memory_space<vmem>>, vector<512x3xf32>
    %60 = arith.truncf %59 : vector<512x3xf32> to vector<512x3xbf16>
    %c0_79 = arith.constant 0 : index
    %c9_80 = arith.constant 9 : index
    %61 = vector.load %arg6[%c0_79, %c9_80] : memref<512x27xbf16, #tpu.memory_space<vmem>>, vector<512x3xbf16>
    tpu.vector_store %arg6[%c0_79, %c9_80], %60 {strides = array<i32>} : memref<512x27xbf16, #tpu.memory_space<vmem>>, vector<512x3xbf16>,
    %c40 = arith.constant 40 : index
    %c0_81 = arith.constant 0 : index
    %62 = vector.load %arg5[%c40, %c0_81] : memref<592x3xf32, #tpu.memory_space<vmem>>, vector<512x3xf32>
    %63 = arith.truncf %62 : vector<512x3xf32> to vector<512x3xbf16>
    %c0_82 = arith.constant 0 : index
    %c12_83 = arith.constant 12 : index
    %64 = vector.load %arg6[%c0_82, %c12_83] : memref<512x27xbf16, #tpu.memory_space<vmem>>, vector<512x3xbf16>
    tpu.vector_store %arg6[%c0_82, %c12_83], %63 {strides = array<i32>} : memref<512x27xbf16, #tpu.memory_space<vmem>>, vector<512x3xbf16>,
    %c41 = arith.constant 41 : index
    %c0_84 = arith.constant 0 : index
    %65 = vector.load %arg5[%c41, %c0_84] : memref<592x3xf32, #tpu.memory_space<vmem>>, vector<512x3xf32>
    %66 = arith.truncf %65 : vector<512x3xf32> to vector<512x3xbf16>
    %c0_85 = arith.constant 0 : index
    %c15_86 = arith.constant 15 : index
    %67 = vector.load %arg6[%c0_85, %c15_86] : memref<512x27xbf16, #tpu.memory_space<vmem>>, vector<512x3xbf16>
    tpu.vector_store %arg6[%c0_85, %c15_86], %66 {strides = array<i32>} : memref<512x27xbf16, #tpu.memory_space<vmem>>, vector<512x3xbf16>,
    %c71 = arith.constant 71 : index
    %c0_87 = arith.constant 0 : index
    %68 = vector.load %arg5[%c71, %c0_87] : memref<592x3xf32, #tpu.memory_space<vmem>>, vector<512x3xf32>
    %69 = arith.truncf %68 : vector<512x3xf32> to vector<512x3xbf16>
    %c0_88 = arith.constant 0 : index
    %c18 = arith.constant 18 : index
    %70 = vector.load %arg6[%c0_88, %c18] : memref<512x27xbf16, #tpu.memory_space<vmem>>, vector<512x3xbf16>
    tpu.vector_store %arg6[%c0_88, %c18], %69 {strides = array<i32>} : memref<512x27xbf16, #tpu.memory_space<vmem>>, vector<512x3xbf16>,
    %c72 = arith.constant 72 : index
    %c0_89 = arith.constant 0 : index
    %71 = vector.load %arg5[%c72, %c0_89] : memref<592x3xf32, #tpu.memory_space<vmem>>, vector<512x3xf32>
    %72 = arith.truncf %71 : vector<512x3xf32> to vector<512x3xbf16>
    %c0_90 = arith.constant 0 : index
    %c21 = arith.constant 21 : index
    %73 = vector.load %arg6[%c0_90, %c21] : memref<512x27xbf16, #tpu.memory_space<vmem>>, vector<512x3xbf16>
    tpu.vector_store %arg6[%c0_90, %c21], %72 {strides = array<i32>} : memref<512x27xbf16, #tpu.memory_space<vmem>>, vector<512x3xbf16>,
    %c73 = arith.constant 73 : index
    %c0_91 = arith.constant 0 : index
    %74 = vector.load %arg5[%c73, %c0_91] : memref<592x3xf32, #tpu.memory_space<vmem>>, vector<512x3xf32>
    %75 = arith.truncf %74 : vector<512x3xf32> to vector<512x3xbf16>
    %c0_92 = arith.constant 0 : index
    %c24 = arith.constant 24 : index
    %76 = vector.load %arg6[%c0_92, %c24] : memref<512x27xbf16, #tpu.memory_space<vmem>>, vector<512x3xbf16>
    tpu.vector_store %arg6[%c0_92, %c24], %75 {strides = array<i32>} : memref<512x27xbf16, #tpu.memory_space<vmem>>, vector<512x3xbf16>,
    %c0_93 = arith.constant 0 : index
    %c0_94 = arith.constant 0 : index
    %77 = vector.load %arg6[%c0_93, %c0_94] : memref<512x27xbf16, #tpu.memory_space<vmem>>, vector<512x27xbf16>
    %c0_95 = arith.constant 0 : index
    %c0_96 = arith.constant 0 : index
    %78 = vector.load %arg2[%c0_95, %c0_96] : memref<27x32xbf16, #tpu.memory_space<vmem>>, vector<27x32xbf16>
    %cst_97 = arith.constant dense<0.000000e+00> : vector<512x32xf32>
    %79 = tpu.matmul %77, %78, %cst_97 {dimension_numbers = #tpu.dot_dimension_numbers<[1], [0], [0], [1], [0, 0, 1, 1], [], []>} : vector<512x27xbf16>, vector<27x32xbf16>, vector<512x32xf32> -> vector<512x32xf32>
    %c0_98 = arith.constant 0 : index
    %c0_99 = arith.constant 0 : index
    %80 = vector.load %arg3[%c0_98, %c0_99] : memref<1x32xf32, #tpu.memory_space<vmem>>, vector<1x32xf32>
    %81 = vector.broadcast %80 : vector<1x32xf32> to vector<512x32xf32>
    %82 = arith.addf %79, %81 : vector<512x32xf32>
    %83 = vector.extract_strided_slice %82 {offsets = [8, 0], sizes = [16, 32], strides = [1, 1]} : vector<512x32xf32> to vector<16x32xf32>
    %c0_100 = arith.constant 0 : index
    %c0_101 = arith.constant 0 : index
    %c0_102 = arith.constant 0 : index
    %c0_103 = arith.constant 0 : index
    %84 = vector.load %arg4[%c0_100, %c0_101, %c0_102, %c0_103] : memref<1x16x16x32xf32, #tpu.memory_space<vmem>>, vector<1x1x16x32xf32>
    %85 = vector.shape_cast %84 : vector<1x1x16x32xf32> to vector<16x32xf32>
    %86 = vector.shape_cast %83 : vector<16x32xf32> to vector<1x1x16x32xf32>
    tpu.vector_store %arg4[%c0_100, %c0_101, %c0_102, %c0_103], %86 {strides = array<i32>} : memref<1x16x16x32xf32, #tpu.memory_space<vmem>>, vector<1x1x16x32xf32>,
    %87 = vector.extract_strided_slice %82 {offsets = [40, 0], sizes = [16, 32], strides = [1, 1]} : vector<512x32xf32> to vector<16x32xf32>
    %c0_104 = arith.constant 0 : index
    %c1_105 = arith.constant 1 : index
    %c0_106 = arith.constant 0 : index
    %c0_107 = arith.constant 0 : index
    %88 = vector.load %arg4[%c0_104, %c1_105, %c0_106, %c0_107] : memref<1x16x16x32xf32, #tpu.memory_space<vmem>>, vector<1x1x16x32xf32>
    %89 = vector.shape_cast %88 : vector<1x1x16x32xf32> to vector<16x32xf32>
    %90 = vector.shape_cast %87 : vector<16x32xf32> to vector<1x1x16x32xf32>
    tpu.vector_store %arg4[%c0_104, %c1_105, %c0_106, %c0_107], %90 {strides = array<i32>} : memref<1x16x16x32xf32, #tpu.memory_space<vmem>>, vector<1x1x16x32xf32>,
    %91 = vector.extract_strided_slice %82 {offsets = [72, 0], sizes = [16, 32], strides = [1, 1]} : vector<512x32xf32> to vector<16x32xf32>
    %c0_108 = arith.constant 0 : index
    %c2_109 = arith.constant 2 : index
    %c0_110 = arith.constant 0 : index
    %c0_111 = arith.constant 0 : index
    %92 = vector.load %arg4[%c0_108, %c2_109, %c0_110, %c0_111] : memref<1x16x16x32xf32, #tpu.memory_space<vmem>>, vector<1x1x16x32xf32>
    %93 = vector.shape_cast %92 : vector<1x1x16x32xf32> to vector<16x32xf32>
    %94 = vector.shape_cast %91 : vector<16x32xf32> to vector<1x1x16x32xf32>
    tpu.vector_store %arg4[%c0_108, %c2_109, %c0_110, %c0_111], %94 {strides = array<i32>} : memref<1x16x16x32xf32, #tpu.memory_space<vmem>>, vector<1x1x16x32xf32>,
    %95 = vector.extract_strided_slice %82 {offsets = [104, 0], sizes = [16, 32], strides = [1, 1]} : vector<512x32xf32> to vector<16x32xf32>
    %c0_112 = arith.constant 0 : index
    %c3_113 = arith.constant 3 : index
    %c0_114 = arith.constant 0 : index
    %c0_115 = arith.constant 0 : index
    %96 = vector.load %arg4[%c0_112, %c3_113, %c0_114, %c0_115] : memref<1x16x16x32xf32, #tpu.memory_space<vmem>>, vector<1x1x16x32xf32>
    %97 = vector.shape_cast %96 : vector<1x1x16x32xf32> to vector<16x32xf32>
    %98 = vector.shape_cast %95 : vector<16x32xf32> to vector<1x1x16x32xf32>
    tpu.vector_store %arg4[%c0_112, %c3_113, %c0_114, %c0_115], %98 {strides = array<i32>} : memref<1x16x16x32xf32, #tpu.memory_space<vmem>>, vector<1x1x16x32xf32>,
    %99 = vector.extract_strided_slice %82 {offsets = [136, 0], sizes = [16, 32], strides = [1, 1]} : vector<512x32xf32> to vector<16x32xf32>
    %c0_116 = arith.constant 0 : index
    %c4_117 = arith.constant 4 : index
    %c0_118 = arith.constant 0 : index
    %c0_119 = arith.constant 0 : index
    %100 = vector.load %arg4[%c0_116, %c4_117, %c0_118, %c0_119] : memref<1x16x16x32xf32, #tpu.memory_space<vmem>>, vector<1x1x16x32xf32>
    %101 = vector.shape_cast %100 : vector<1x1x16x32xf32> to vector<16x32xf32>
    %102 = vector.shape_cast %99 : vector<16x32xf32> to vector<1x1x16x32xf32>
    tpu.vector_store %arg4[%c0_116, %c4_117, %c0_118, %c0_119], %102 {strides = array<i32>} : memref<1x16x16x32xf32, #tpu.memory_space<vmem>>, vector<1x1x16x32xf32>,
    %103 = vector.extract_strided_slice %82 {offsets = [168, 0], sizes = [16, 32], strides = [1, 1]} : vector<512x32xf32> to vector<16x32xf32>
    %c0_120 = arith.constant 0 : index
    %c5_121 = arith.constant 5 : index
    %c0_122 = arith.constant 0 : index
    %c0_123 = arith.constant 0 : index
    %104 = vector.load %arg4[%c0_120, %c5_121, %c0_122, %c0_123] : memref<1x16x16x32xf32, #tpu.memory_space<vmem>>, vector<1x1x16x32xf32>
    %105 = vector.shape_cast %104 : vector<1x1x16x32xf32> to vector<16x32xf32>
    %106 = vector.shape_cast %103 : vector<16x32xf32> to vector<1x1x16x32xf32>
    tpu.vector_store %arg4[%c0_120, %c5_121, %c0_122, %c0_123], %106 {strides = array<i32>} : memref<1x16x16x32xf32, #tpu.memory_space<vmem>>, vector<1x1x16x32xf32>,
    %107 = vector.extract_strided_slice %82 {offsets = [200, 0], sizes = [16, 32], strides = [1, 1]} : vector<512x32xf32> to vector<16x32xf32>
    %c0_124 = arith.constant 0 : index
    %c6_125 = arith.constant 6 : index
    %c0_126 = arith.constant 0 : index
    %c0_127 = arith.constant 0 : index
    %108 = vector.load %arg4[%c0_124, %c6_125, %c0_126, %c0_127] : memref<1x16x16x32xf32, #tpu.memory_space<vmem>>, vector<1x1x16x32xf32>
    %109 = vector.shape_cast %108 : vector<1x1x16x32xf32> to vector<16x32xf32>
    %110 = vector.shape_cast %107 : vector<16x32xf32> to vector<1x1x16x32xf32>
    tpu.vector_store %arg4[%c0_124, %c6_125, %c0_126, %c0_127], %110 {strides = array<i32>} : memref<1x16x16x32xf32, #tpu.memory_space<vmem>>, vector<1x1x16x32xf32>,
    %111 = vector.extract_strided_slice %82 {offsets = [232, 0], sizes = [16, 32], strides = [1, 1]} : vector<512x32xf32> to vector<16x32xf32>
    %c0_128 = arith.constant 0 : index
    %c7_129 = arith.constant 7 : index
    %c0_130 = arith.constant 0 : index
    %c0_131 = arith.constant 0 : index
    %112 = vector.load %arg4[%c0_128, %c7_129, %c0_130, %c0_131] : memref<1x16x16x32xf32, #tpu.memory_space<vmem>>, vector<1x1x16x32xf32>
    %113 = vector.shape_cast %112 : vector<1x1x16x32xf32> to vector<16x32xf32>
    %114 = vector.shape_cast %111 : vector<16x32xf32> to vector<1x1x16x32xf32>
    tpu.vector_store %arg4[%c0_128, %c7_129, %c0_130, %c0_131], %114 {strides = array<i32>} : memref<1x16x16x32xf32, #tpu.memory_space<vmem>>, vector<1x1x16x32xf32>,
    %115 = vector.extract_strided_slice %82 {offsets = [264, 0], sizes = [16, 32], strides = [1, 1]} : vector<512x32xf32> to vector<16x32xf32>
    %c0_132 = arith.constant 0 : index
    %c8_133 = arith.constant 8 : index
    %c0_134 = arith.constant 0 : index
    %c0_135 = arith.constant 0 : index
    %116 = vector.load %arg4[%c0_132, %c8_133, %c0_134, %c0_135] : memref<1x16x16x32xf32, #tpu.memory_space<vmem>>, vector<1x1x16x32xf32>
    %117 = vector.shape_cast %116 : vector<1x1x16x32xf32> to vector<16x32xf32>
    %118 = vector.shape_cast %115 : vector<16x32xf32> to vector<1x1x16x32xf32>
    tpu.vector_store %arg4[%c0_132, %c8_133, %c0_134, %c0_135], %118 {strides = array<i32>} : memref<1x16x16x32xf32, #tpu.memory_space<vmem>>, vector<1x1x16x32xf32>,
    %119 = vector.extract_strided_slice %82 {offsets = [296, 0], sizes = [16, 32], strides = [1, 1]} : vector<512x32xf32> to vector<16x32xf32>
    %c0_136 = arith.constant 0 : index
    %c9_137 = arith.constant 9 : index
    %c0_138 = arith.constant 0 : index
    %c0_139 = arith.constant 0 : index
    %120 = vector.load %arg4[%c0_136, %c9_137, %c0_138, %c0_139] : memref<1x16x16x32xf32, #tpu.memory_space<vmem>>, vector<1x1x16x32xf32>
    %121 = vector.shape_cast %120 : vector<1x1x16x32xf32> to vector<16x32xf32>
    %122 = vector.shape_cast %119 : vector<16x32xf32> to vector<1x1x16x32xf32>
    tpu.vector_store %arg4[%c0_136, %c9_137, %c0_138, %c0_139], %122 {strides = array<i32>} : memref<1x16x16x32xf32, #tpu.memory_space<vmem>>, vector<1x1x16x32xf32>,
    %123 = vector.extract_strided_slice %82 {offsets = [328, 0], sizes = [16, 32], strides = [1, 1]} : vector<512x32xf32> to vector<16x32xf32>
    %c0_140 = arith.constant 0 : index
    %c10_141 = arith.constant 10 : index
    %c0_142 = arith.constant 0 : index
    %c0_143 = arith.constant 0 : index
    %124 = vector.load %arg4[%c0_140, %c10_141, %c0_142, %c0_143] : memref<1x16x16x32xf32, #tpu.memory_space<vmem>>, vector<1x1x16x32xf32>
    %125 = vector.shape_cast %124 : vector<1x1x16x32xf32> to vector<16x32xf32>
    %126 = vector.shape_cast %123 : vector<16x32xf32> to vector<1x1x16x32xf32>
    tpu.vector_store %arg4[%c0_140, %c10_141, %c0_142, %c0_143], %126 {strides = array<i32>} : memref<1x16x16x32xf32, #tpu.memory_space<vmem>>, vector<1x1x16x32xf32>,
    %127 = vector.extract_strided_slice %82 {offsets = [360, 0], sizes = [16, 32], strides = [1, 1]} : vector<512x32xf32> to vector<16x32xf32>
    %c0_144 = arith.constant 0 : index
    %c11_145 = arith.constant 11 : index
    %c0_146 = arith.constant 0 : index
    %c0_147 = arith.constant 0 : index
    %128 = vector.load %arg4[%c0_144, %c11_145, %c0_146, %c0_147] : memref<1x16x16x32xf32, #tpu.memory_space<vmem>>, vector<1x1x16x32xf32>
    %129 = vector.shape_cast %128 : vector<1x1x16x32xf32> to vector<16x32xf32>
    %130 = vector.shape_cast %127 : vector<16x32xf32> to vector<1x1x16x32xf32>
    tpu.vector_store %arg4[%c0_144, %c11_145, %c0_146, %c0_147], %130 {strides = array<i32>} : memref<1x16x16x32xf32, #tpu.memory_space<vmem>>, vector<1x1x16x32xf32>,
    %131 = vector.extract_strided_slice %82 {offsets = [392, 0], sizes = [16, 32], strides = [1, 1]} : vector<512x32xf32> to vector<16x32xf32>
    %c0_148 = arith.constant 0 : index
    %c12_149 = arith.constant 12 : index
    %c0_150 = arith.constant 0 : index
    %c0_151 = arith.constant 0 : index
    %132 = vector.load %arg4[%c0_148, %c12_149, %c0_150, %c0_151] : memref<1x16x16x32xf32, #tpu.memory_space<vmem>>, vector<1x1x16x32xf32>
    %133 = vector.shape_cast %132 : vector<1x1x16x32xf32> to vector<16x32xf32>
    %134 = vector.shape_cast %131 : vector<16x32xf32> to vector<1x1x16x32xf32>
    tpu.vector_store %arg4[%c0_148, %c12_149, %c0_150, %c0_151], %134 {strides = array<i32>} : memref<1x16x16x32xf32, #tpu.memory_space<vmem>>, vector<1x1x16x32xf32>,
    %135 = vector.extract_strided_slice %82 {offsets = [424, 0], sizes = [16, 32], strides = [1, 1]} : vector<512x32xf32> to vector<16x32xf32>
    %c0_152 = arith.constant 0 : index
    %c13_153 = arith.constant 13 : index
    %c0_154 = arith.constant 0 : index
    %c0_155 = arith.constant 0 : index
    %136 = vector.load %arg4[%c0_152, %c13_153, %c0_154, %c0_155] : memref<1x16x16x32xf32, #tpu.memory_space<vmem>>, vector<1x1x16x32xf32>
    %137 = vector.shape_cast %136 : vector<1x1x16x32xf32> to vector<16x32xf32>
    %138 = vector.shape_cast %135 : vector<16x32xf32> to vector<1x1x16x32xf32>
    tpu.vector_store %arg4[%c0_152, %c13_153, %c0_154, %c0_155], %138 {strides = array<i32>} : memref<1x16x16x32xf32, #tpu.memory_space<vmem>>, vector<1x1x16x32xf32>,
    %139 = vector.extract_strided_slice %82 {offsets = [456, 0], sizes = [16, 32], strides = [1, 1]} : vector<512x32xf32> to vector<16x32xf32>
    %c0_156 = arith.constant 0 : index
    %c14_157 = arith.constant 14 : index
    %c0_158 = arith.constant 0 : index
    %c0_159 = arith.constant 0 : index
    %140 = vector.load %arg4[%c0_156, %c14_157, %c0_158, %c0_159] : memref<1x16x16x32xf32, #tpu.memory_space<vmem>>, vector<1x1x16x32xf32>
    %141 = vector.shape_cast %140 : vector<1x1x16x32xf32> to vector<16x32xf32>
    %142 = vector.shape_cast %139 : vector<16x32xf32> to vector<1x1x16x32xf32>
    tpu.vector_store %arg4[%c0_156, %c14_157, %c0_158, %c0_159], %142 {strides = array<i32>} : memref<1x16x16x32xf32, #tpu.memory_space<vmem>>, vector<1x1x16x32xf32>,
    %143 = vector.extract_strided_slice %82 {offsets = [488, 0], sizes = [16, 32], strides = [1, 1]} : vector<512x32xf32> to vector<16x32xf32>
    %c0_160 = arith.constant 0 : index
    %c15_161 = arith.constant 15 : index
    %c0_162 = arith.constant 0 : index
    %c0_163 = arith.constant 0 : index
    %144 = vector.load %arg4[%c0_160, %c15_161, %c0_162, %c0_163] : memref<1x16x16x32xf32, #tpu.memory_space<vmem>>, vector<1x1x16x32xf32>
    %145 = vector.shape_cast %144 : vector<1x1x16x32xf32> to vector<16x32xf32>
    %146 = vector.shape_cast %143 : vector<16x32xf32> to vector<1x1x16x32xf32>
    tpu.vector_store %arg4[%c0_160, %c15_161, %c0_162, %c0_163], %146 {strides = array<i32>} : memref<1x16x16x32xf32, #tpu.memory_space<vmem>>, vector<1x1x16x32xf32>,
    return
  }
  func.func @transform_0(%arg0: i32) -> (i32, i32, i32, i32) {
    %c0_i32 = arith.constant 0 : i32
    %c0_i32_0 = arith.constant 0 : i32
    %c0_i32_1 = arith.constant 0 : i32
    %c0_i32_2 = arith.constant 0 : i32
    return %arg0, %c0_i32, %c0_i32_0, %c0_i32_1 : i32, i32, i32, i32
  }
  func.func @transform_1(%arg0: i32) -> (i32, i32) {
    %c0_i32 = arith.constant 0 : i32
    %c0_i32_0 = arith.constant 0 : i32
    %c0_i32_1 = arith.constant 0 : i32
    return %c0_i32, %c0_i32_0 : i32, i32
  }
  func.func @transform_2(%arg0: i32) -> (i32, i32) {
    %c0_i32 = arith.constant 0 : i32
    %c0_i32_0 = arith.constant 0 : i32
    %c0_i32_1 = arith.constant 0 : i32
    return %c0_i32, %c0_i32_0 : i32, i32
  }
  func.func @transform_3(%arg0: i32) -> (i32, i32, i32, i32) {
    %c0_i32 = arith.constant 0 : i32
    %c0_i32_0 = arith.constant 0 : i32
    %c0_i32_1 = arith.constant 0 : i32
    %c0_i32_2 = arith.constant 0 : i32
    return %arg0, %c0_i32, %c0_i32_0, %c0_i32_1 : i32, i32, i32, i32
  }
}

</mosaic_0001>

<llo_original>
// kernel: conv3x3.1
$region0: #{conv3x3.1}
  #allocation0 [shape = 'u32[]', space=smem, size = 0x4, offset = 0x4, fixed_abs, tag = 'smem constant byte address 0x4 - core index']
  #allocation1 [shape = 'u32[144,128]{1,0:T(1,128)}', space=vmem, size = 0x12000, scoped, tag = 'internal scratch']
  #allocation2 [shape = 'f32[592,3]{1,0:T(8,128)}', space=vmem, size = 0x4a000, scoped, tag = 'scratch operand']
  #allocation3 [shape = 'bf16[512,27]{1,0:T(16,128)(2,1)}', space=vmem, size = 0x20000, scoped, tag = 'scratch operand']
  %s0 = inlined_call_operand.vmem [shape: f32[2,16,16,3], index: 0, kind: input, shape index: {}]
  %s1 = inlined_call_operand.vmem [shape: bf16[27,32], index: 1, kind: input, shape index: {}]
  %s2 = inlined_call_operand.vmem [shape: f32[1,32], index: 2, kind: input, shape index: {}]
  %s3 = inlined_call_operand.hbm [shape: f32[2,16,16,32], index: 3, kind: output, shape index: {}]
  %s4 = sld [smem:[#allocation0]]
  $region45: #{conv3x3.1} parent=0
    _
  %s6 = ssub.s32 1, %s4
  %s7 = scalar_select 0, %s6, %s4
  $region1: #{conv3x3.1} parent=0
    #allocation4 [shape = 'u8[262144]{0}', space=vmem, size = 0x40000, scoped, tag = 'output window, operand 0']
    #allocation5 [shape = 's32[2]{0}', space=sflag, size = 0x8, scoped, tag = 'scoped memory for conv3x3.1']
    %8 = vsyncpa [#allocation5], 0
    %s9 = scalar_lea.sflag [#allocation5], 1
    %10 = vsyncpa %s9, 0
    loop: start=0, step=1, limit=4
    $region2: #{conv3x3.1} parent=1 // loop_pre_header
      _
    $region3: #{conv3x3.1} parent=1 // loop_header
      %s12 = sphi 0, %s16
      %p13 = scmp.ge.s32.totalorder %s12, 4
      %s22 = sphi 0, %s24
      %s25 = sphi 0, %s22
      %s26 = sphi 0, %s25
      %s42 = sphi 0, %s26
      %s46 = sphi 0, %s46
      %s48 = sphi 0, %s46
      %s49 = sphi 0, %s48
      %s63 = sphi 0, %s49
      %s67 = sphi 0, %s67
      %s69 = sphi 0, %s67
      %s70 = sphi 0, %s69
      %s84 = sphi 0, %s70
      %s90 = sphi 0, %s92
      %s93 = sphi 0, %s90
      %s94 = sphi 0, %s93
      %s110 = sphi 0, %s94
    $region4: #{conv3x3.1} parent=1 // loop_header_branch
      %15 = sbr.rel (%p13) target = $region8
    $region5: #{conv3x3.1} parent=1 // loop_body
      %s17 = ssub.s32 %s12, 1
      %s18 = ssub.s32 %s12, 2
      %s19 = sadd.s32 %s12, 1
      %s20 = ssub.s32 %s12, %s19
      %p21 = scmp.eq.s32.totalorder %s20, 0
      %s23 = sadd.s32 %s22, 1
      %s24 = scalar_select %p21, %s22, %s23
      %p27 = pneg %p21
      %p28 = scmp.eq.s32.totalorder %s12, 1
      %p29 = por %p27, %p28
      %p30 = scmp.ne.s32.totalorder %s22, %s25
      %p31 = scmp.eq.s32.totalorder %s12, 0
      %p32 = por %p30, %p31
      %p33 = scmp.ne.s32.totalorder %s22, %s25
      %p34 = scmp.eq.s32.totalorder %s17, 1
      %p35 = por %p33, %p34
      %p36 = scmp.ne.s32.totalorder %s25, %s26
      %p37 = scmp.eq.s32.totalorder %s17, 0
      %p38 = por %p36, %p37
      %p39 = scmp.ne.s32.totalorder %s25, %s26
      %p40 = scmp.eq.s32.totalorder %s18, 1
      %p41 = por %p39, %p40
      %p43 = scmp.ne.s32.totalorder %s26, %s42
      %p44 = scmp.eq.s32.totalorder %s18, 0
      %p45 = por %p43, %p44
      %s47 = sadd.s32 %s46, 1
      %p50 = scmp.eq.s32.totalorder %s12, 1
      %p51 = scmp.ne.s32.totalorder %s46, %s48
      %p52 = scmp.eq.s32.totalorder %s12, 0
      %p53 = por %p51, %p52
      %p54 = scmp.ne.s32.totalorder %s46, %s48
      %p55 = scmp.eq.s32.totalorder %s17, 1
      %p56 = por %p54, %p55
      %p57 = scmp.ne.s32.totalorder %s48, %s49
      %p58 = scmp.eq.s32.totalorder %s17, 0
      %p59 = por %p57, %p58
      %p60 = scmp.ne.s32.totalorder %s48, %s49
      %p61 = scmp.eq.s32.totalorder %s18, 1
      %p62 = por %p60, %p61
      %p64 = scmp.ne.s32.totalorder %s49, %s63
      %p65 = scmp.eq.s32.totalorder %s18, 0
      %p66 = por %p64, %p65
      %s68 = sadd.s32 %s67, 1
      %p71 = scmp.eq.s32.totalorder %s12, 1
      %p72 = scmp.ne.s32.totalorder %s67, %s69
      %p73 = scmp.eq.s32.totalorder %s12, 0
      %p74 = por %p72, %p73
      %p75 = scmp.ne.s32.totalorder %s67, %s69
      %p76 = scmp.eq.s32.totalorder %s17, 1
      %p77 = por %p75, %p76
      %p78 = scmp.ne.s32.totalorder %s69, %s70
      %p79 = scmp.eq.s32.totalorder %s17, 0
      %p80 = por %p78, %p79
      %p81 = scmp.ne.s32.totalorder %s69, %s70
      %p82 = scmp.eq.s32.totalorder %s18, 1
      %p83 = por %p81, %p82
      %p85 = scmp.ne.s32.totalorder %s70, %s84
      %p86 = scmp.eq.s32.totalorder %s18, 0
      %p87 = por %p85, %p86
      %s88 = ssub.s32 %s12, %s19
      %p89 = scmp.eq.s32.totalorder %s88, 0
      %s91 = sadd.s32 %s90, 1
      %s92 = scalar_select %p89, %s90, %s91
      %p95 = pneg %p89
      %p96 = scmp.eq.s32.totalorder %s12, 1
      %p97 = por %p95, %p96
      %p98 = scmp.ne.s32.totalorder %s90, %s93
      %p99 = scmp.eq.s32.totalorder %s12, 0
      %p100 = por %p98, %p99
      %p101 = scmp.ne.s32.totalorder %s90, %s93
      %p102 = scmp.eq.s32.totalorder %s17, 1
      %p103 = por %p101, %p102
      %p104 = scmp.ne.s32.totalorder %s93, %s94
      %p105 = scmp.eq.s32.totalorder %s17, 0
      %p106 = por %p104, %p105
      %p107 = scmp.ne.s32.totalorder %s93, %s94
      %p108 = scmp.eq.s32.totalorder %s18, 1
      %p109 = por %p107, %p108
      %p111 = scmp.ne.s32.totalorder %s94, %s110
      %p112 = scmp.eq.s32.totalorder %s18, 0
      %p113 = por %p111, %p112
      %p114 = scmp.le.s32.totalorder 1, %s12
      %p115 = scmp.lt.s32.totalorder %s12, 3
      %p116 = pnand %p114, %p115
      %p117 = pneg %p116
      // Predicated region
      $region9: #{conv3x3.1} parent=5 // pred_check
        _
      $region10: #{conv3x3.1} parent=5 // pred_check_branch
        %119 = sbr.rel (%p116) target = $region12
      $region11: #{conv3x3.1} parent=5 // pred_region
        %s120 = ssub.s32 %s12, 1
        // Predicated region
        $region13: #{conv3x3.1} parent=11 // pred_check
          %p121 = pneg %p59
        $region14: #{conv3x3.1} parent=11 // pred_check_branch
          %123 = sbr.rel (%p121) target = $region16
        $region15: #{conv3x3.1} parent=11 // pred_region
          _
        $region16: #{conv3x3.1} parent=11 // pred_fallthru
          _
        // Predicated region
        $region17: #{conv3x3.1} parent=11 // pred_check
          %p124 = pneg %p80
        $region18: #{conv3x3.1} parent=11 // pred_check_branch
          %126 = sbr.rel (%p124) target = $region20
        $region19: #{conv3x3.1} parent=11 // pred_region
          _
        $region20: #{conv3x3.1} parent=11 // pred_fallthru
          _
      $region12: #{conv3x3.1} parent=5 // pred_fallthru
        _
      %p127 = scmp.lt.s32.totalorder %s12, 2
      // Predicated region
      $region21: #{conv3x3.1} parent=5 // pred_check
        %p128 = pneg %p127
      $region22: #{conv3x3.1} parent=5 // pred_check_branch
        %130 = sbr.rel (%p128) target = $region24
      $region23: #{conv3x3.1} parent=5 // pred_region
        // Predicated region
        $region25: #{conv3x3.1} parent=23 // pred_check
          %p131 = pneg %p32
        $region26: #{conv3x3.1} parent=23 // pred_check_branch
          %133 = sbr.rel (%p131) target = $region28
        $region27: #{conv3x3.1} parent=23 // pred_region
          %p134 = scmp.lt.s32.totalorder %s12, 1
          %s135 = scalar_select %p134, %s12, 1
          %s136 = smul.addr %s135, 32
          %s137 = smul.addr %s136, 8
          %s138 = scalar_lea.vmem %s0, %s137
        $region28: #{conv3x3.1} parent=23 // pred_fallthru
          _
      $region24: #{conv3x3.1} parent=5 // pred_fallthru
        _
      %p139 = scmp.le.s32.totalorder 1, %s12
      %p140 = scmp.lt.s32.totalorder %s12, 3
      %p141 = pnand %p139, %p140
      %p142 = pneg %p141
      // Predicated region
      $region29: #{conv3x3.1} parent=5 // pred_check
        _
      $region30: #{conv3x3.1} parent=5 // pred_check_branch
        %144 = sbr.rel (%p141) target = $region32
      $region31: #{conv3x3.1} parent=5 // pred_region
        %s145 = ssub.s32 %s12, 1
        %p146 = scmp.lt.s32.totalorder %s17, 1
        %s147 = scalar_select %p146, %s17, 1
        %s148 = smul.addr %s147, 32
        %s149 = smul.addr %s148, 8
        %s150 = scalar_lea.vmem %s0, %s149
        %p151 = pneg %p38
        %p152 = pneg %p35
        %p153 = pneg %p59
        %p154 = pneg %p56
        %p155 = pneg %p80
        %p156 = pneg %p77
        %p157 = pneg %p106
        %p158 = pneg %p103
        %s159 = sand.u32 %s93, 1
        %s160 = scalar_lea.sflag [#allocation5], %s159
        %s161 = sand.u32 %s93, 1
        %s162 = smul.addr %s161, 256
        %s163 = scalar_lea.vmem [#allocation4], %s162
        %p164 = scmp.lt.s32.totalorder %s17, 1
        %s165 = scalar_select %p164, %s17, 1
        %s166 = smul.addr %s165, 32
        %s167 = smul.addr %s166, 8
        %s168 = scalar_lea.vmem %s0, %s167
        %vm170 = vcmask 23552
        %171 = vst.msk [vmem:[#allocation2] sm:$0xff] %vm170, 0.0
        %172 = vst.msk [vmem:[#allocation2 + $0x8] sm:$0xff] %vm170, 0.0
        %173 = vst.msk [vmem:[#allocation2 + $0x10] sm:$0xff] %vm170, 0.0
        %174 = vst.msk [vmem:[#allocation2 + $0x18] sm:$0xff] %vm170, 0.0
        %175 = vst.msk [vmem:[#allocation2 + $0x20] sm:$0xff] %vm170, 0.0
        %176 = vst.msk [vmem:[#allocation2 + $0x28] sm:$0xff] %vm170, 0.0
        %177 = vst.msk [vmem:[#allocation2 + $0x30] sm:$0xff] %vm170, 0.0
        %178 = vst.msk [vmem:[#allocation2 + $0x38] sm:$0xff] %vm170, 0.0
        %179 = vst.msk [vmem:[#allocation2 + $0x40] sm:$0xff] %vm170, 0.0
        %180 = vst.msk [vmem:[#allocation2 + $0x48] sm:$0xff] %vm170, 0.0
        %181 = vst.msk [vmem:[#allocation2 + $0x50] sm:$0xff] %vm170, 0.0
        %182 = vst.msk [vmem:[#allocation2 + $0x58] sm:$0xff] %vm170, 0.0
        %183 = vst.msk [vmem:[#allocation2 + $0x60] sm:$0xff] %vm170, 0.0
        %184 = vst.msk [vmem:[#allocation2 + $0x68] sm:$0xff] %vm170, 0.0
        %185 = vst.msk [vmem:[#allocation2 + $0x70] sm:$0xff] %vm170, 0.0
        %186 = vst.msk [vmem:[#allocation2 + $0x78] sm:$0xff] %vm170, 0.0
        %187 = vst.msk [vmem:[#allocation2 + $0x80] sm:$0xff] %vm170, 0.0
        %188 = vst.msk [vmem:[#allocation2 + $0x88] sm:$0xff] %vm170, 0.0
        %189 = vst.msk [vmem:[#allocation2 + $0x90] sm:$0xff] %vm170, 0.0
        %190 = vst.msk [vmem:[#allocation2 + $0x98] sm:$0xff] %vm170, 0.0
        %191 = vst.msk [vmem:[#allocation2 + $0xa0] sm:$0xff] %vm170, 0.0
        %192 = vst.msk [vmem:[#allocation2 + $0xa8] sm:$0xff] %vm170, 0.0
        %193 = vst.msk [vmem:[#allocation2 + $0xb0] sm:$0xff] %vm170, 0.0
        %194 = vst.msk [vmem:[#allocation2 + $0xb8] sm:$0xff] %vm170, 0.0
        %195 = vst.msk [vmem:[#allocation2 + $0xc0] sm:$0xff] %vm170, 0.0
        %196 = vst.msk [vmem:[#allocation2 + $0xc8] sm:$0xff] %vm170, 0.0
        %197 = vst.msk [vmem:[#allocation2 + $0xd0] sm:$0xff] %vm170, 0.0
        %198 = vst.msk [vmem:[#allocation2 + $0xd8] sm:$0xff] %vm170, 0.0
        %199 = vst.msk [vmem:[#allocation2 + $0xe0] sm:$0xff] %vm170, 0.0
        %200 = vst.msk [vmem:[#allocation2 + $0xe8] sm:$0xff] %vm170, 0.0
        %201 = vst.msk [vmem:[#allocation2 + $0xf0] sm:$0xff] %vm170, 0.0
        %202 = vst.msk [vmem:[#allocation2 + $0xf8] sm:$0xff] %vm170, 0.0
        %203 = vst.msk [vmem:[#allocation2 + $0x100] sm:$0xff] %vm170, 0.0
        %204 = vst.msk [vmem:[#allocation2 + $0x108] sm:$0xff] %vm170, 0.0
        %205 = vst.msk [vmem:[#allocation2 + $0x110] sm:$0xff] %vm170, 0.0
        %206 = vst.msk [vmem:[#allocation2 + $0x118] sm:$0xff] %vm170, 0.0
        %207 = vst.msk [vmem:[#allocation2 + $0x120] sm:$0xff] %vm170, 0.0
        %208 = vst.msk [vmem:[#allocation2 + $0x128] sm:$0xff] %vm170, 0.0
        %209 = vst.msk [vmem:[#allocation2 + $0x130] sm:$0xff] %vm170, 0.0
        %210 = vst.msk [vmem:[#allocation2 + $0x138] sm:$0xff] %vm170, 0.0
        %211 = vst.msk [vmem:[#allocation2 + $0x140] sm:$0xff] %vm170, 0.0
        %212 = vst.msk [vmem:[#allocation2 + $0x148] sm:$0xff] %vm170, 0.0
        %213 = vst.msk [vmem:[#allocation2 + $0x150] sm:$0xff] %vm170, 0.0
        %214 = vst.msk [vmem:[#allocation2 + $0x158] sm:$0xff] %vm170, 0.0
        %215 = vst.msk [vmem:[#allocation2 + $0x160] sm:$0xff] %vm170, 0.0
        %216 = vst.msk [vmem:[#allocation2 + $0x168] sm:$0xff] %vm170, 0.0
        %217 = vst.msk [vmem:[#allocation2 + $0x170] sm:$0xff] %vm170, 0.0
        %218 = vst.msk [vmem:[#allocation2 + $0x178] sm:$0xff] %vm170, 0.0
        %219 = vst.msk [vmem:[#allocation2 + $0x180] sm:$0xff] %vm170, 0.0
        %220 = vst.msk [vmem:[#allocation2 + $0x188] sm:$0xff] %vm170, 0.0
        %221 = vst.msk [vmem:[#allocation2 + $0x190] sm:$0xff] %vm170, 0.0
        %222 = vst.msk [vmem:[#allocation2 + $0x198] sm:$0xff] %vm170, 0.0
        %223 = vst.msk [vmem:[#allocation2 + $0x1a0] sm:$0xff] %vm170, 0.0
        %224 = vst.msk [vmem:[#allocation2 + $0x1a8] sm:$0xff] %vm170, 0.0
        %225 = vst.msk [vmem:[#allocation2 + $0x1b0] sm:$0xff] %vm170, 0.0
        %226 = vst.msk [vmem:[#allocation2 + $0x1b8] sm:$0xff] %vm170, 0.0
        %227 = vst.msk [vmem:[#allocation2 + $0x1c0] sm:$0xff] %vm170, 0.0
        %228 = vst.msk [vmem:[#allocation2 + $0x1c8] sm:$0xff] %vm170, 0.0
        %229 = vst.msk [vmem:[#allocation2 + $0x1d0] sm:$0xff] %vm170, 0.0
        %230 = vst.msk [vmem:[#allocation2 + $0x1d8] sm:$0xff] %vm170, 0.0
        %231 = vst.msk [vmem:[#allocation2 + $0x1e0] sm:$0xff] %vm170, 0.0
        %232 = vst.msk [vmem:[#allocation2 + $0x1e8] sm:$0xff] %vm170, 0.0
        %233 = vst.msk [vmem:[#allocation2 + $0x1f0] sm:$0xff] %vm170, 0.0
        %234 = vst.msk [vmem:[#allocation2 + $0x1f8] sm:$0xff] %vm170, 0.0
        %235 = vst.msk [vmem:[#allocation2 + $0x200] sm:$0xff] %vm170, 0.0
        %236 = vst.msk [vmem:[#allocation2 + $0x208] sm:$0xff] %vm170, 0.0
        %237 = vst.msk [vmem:[#allocation2 + $0x210] sm:$0xff] %vm170, 0.0
        %238 = vst.msk [vmem:[#allocation2 + $0x218] sm:$0xff] %vm170, 0.0
        %239 = vst.msk [vmem:[#allocation2 + $0x220] sm:$0xff] %vm170, 0.0
        %240 = vst.msk [vmem:[#allocation2 + $0x228] sm:$0xff] %vm170, 0.0
        %241 = vst.msk [vmem:[#allocation2 + $0x230] sm:$0xff] %vm170, 0.0
        %242 = vst.msk [vmem:[#allocation2 + $0x238] sm:$0xff] %vm170, 0.0
        %243 = vst.msk [vmem:[#allocation2 + $0x240] sm:$0xff] %vm170, 0.0
        %244 = vst.msk [vmem:[#allocation2 + $0x248] sm:$0xff] %vm170, 0.0
        %v245 = vld [vmem:[%s168] sm:$0xff]
        %v246 = vld [vmem:[%s168 + $0x8] sm:$0xff]
        %247 = vst.msk [vmem:[#allocation2 + $0x30] sm:$0xff] %vm170, %v245
        %248 = vst.msk [vmem:[#allocation2 + $0x38] sm:$0xff] %vm170, %v246
        %s249 = scalar_lea.vmem %s168, 16
        %v250 = vld [vmem:[%s249] sm:$0xff]
        %v251 = vld [vmem:[%s249 + $0x8] sm:$0xff]
        %252 = vst.msk [vmem:[#allocation2 + $0x50] sm:$0xff] %vm170, %v250
        %253 = vst.msk [vmem:[#allocation2 + $0x58] sm:$0xff] %vm170, %v251
        %s254 = scalar_lea.vmem %s168, 32
        %v255 = vld [vmem:[%s254] sm:$0xff]
        %v256 = vld [vmem:[%s254 + $0x8] sm:$0xff]
        %257 = vst.msk [vmem:[#allocation2 + $0x70] sm:$0xff] %vm170, %v255
        %258 = vst.msk [vmem:[#allocation2 + $0x78] sm:$0xff] %vm170, %v256
        %s259 = scalar_lea.vmem %s168, 48
        %v260 = vld [vmem:[%s259] sm:$0xff]
        %v261 = vld [vmem:[%s259 + $0x8] sm:$0xff]
        %262 = vst.msk [vmem:[#allocation2 + $0x90] sm:$0xff] %vm170, %v260
        %263 = vst.msk [vmem:[#allocation2 + $0x98] sm:$0xff] %vm170, %v261
        %s264 = scalar_lea.vmem %s168, 64
        %v265 = vld [vmem:[%s264] sm:$0xff]
        %v266 = vld [vmem:[%s264 + $0x8] sm:$0xff]
        %267 = vst.msk [vmem:[#allocation2 + $0xb0] sm:$0xff] %vm170, %v265
        %268 = vst.msk [vmem:[#allocation2 + $0xb8] sm:$0xff] %vm170, %v266
        %s269 = scalar_lea.vmem %s168, 80
        %v270 = vld [vmem:[%s269] sm:$0xff]
        %v271 = vld [vmem:[%s269 + $0x8] sm:$0xff]
        %272 = vst.msk [vmem:[#allocation2 + $0xd0] sm:$0xff] %vm170, %v270
        %273 = vst.msk [vmem:[#allocation2 + $0xd8] sm:$0xff] %vm170, %v271
        %s274 = scalar_lea.vmem %s168, 96
        %v275 = vld [vmem:[%s274] sm:$0xff]
        %v276 = vld [vmem:[%s274 + $0x8] sm:$0xff]
        %277 = vst.msk [vmem:[#allocation2 + $0xf0] sm:$0xff] %vm170, %v275
        %278 = vst.msk [vmem:[#allocation2 + $0xf8] sm:$0xff] %vm170, %v276
        %s279 = scalar_lea.vmem %s168, 112
        %v280 = vld [vmem:[%s279] sm:$0xff]
        %v281 = vld [vmem:[%s279 + $0x8] sm:$0xff]
        %282 = vst.msk [vmem:[#allocation2 + $0x110] sm:$0xff] %vm170, %v280
        %283 = vst.msk [vmem:[#allocation2 + $0x118] sm:$0xff] %vm170, %v281
        %s284 = scalar_lea.vmem %s168, 128
        %v285 = vld [vmem:[%s284] sm:$0xff]
        %v286 = vld [vmem:[%s284 + $0x8] sm:$0xff]
        %287 = vst.msk [vmem:[#allocation2 + $0x130] sm:$0xff] %vm170, %v285
        %288 = vst.msk [vmem:[#allocation2 + $0x138] sm:$0xff] %vm170, %v286
        %s289 = scalar_lea.vmem %s168, 144
        %v290 = vld [vmem:[%s289] sm:$0xff]
        %v291 = vld [vmem:[%s289 + $0x8] sm:$0xff]
        %292 = vst.msk [vmem:[#allocation2 + $0x150] sm:$0xff] %vm170, %v290
        %293 = vst.msk [vmem:[#allocation2 + $0x158] sm:$0xff] %vm170, %v291
        %s294 = scalar_lea.vmem %s168, 160
        %v295 = vld [vmem:[%s294] sm:$0xff]
        %v296 = vld [vmem:[%s294 + $0x8] sm:$0xff]
        %297 = vst.msk [vmem:[#allocation2 + $0x170] sm:$0xff] %vm170, %v295
        %298 = vst.msk [vmem:[#allocation2 + $0x178] sm:$0xff] %vm170, %v296
        %s299 = scalar_lea.vmem %s168, 176
        %v300 = vld [vmem:[%s299] sm:$0xff]
        %v301 = vld [vmem:[%s299 + $0x8] sm:$0xff]
        %302 = vst.msk [vmem:[#allocation2 + $0x190] sm:$0xff] %vm170, %v300
        %303 = vst.msk [vmem:[#allocation2 + $0x198] sm:$0xff] %vm170, %v301
        %s304 = scalar_lea.vmem %s168, 192
        %v305 = vld [vmem:[%s304] sm:$0xff]
        %v306 = vld [vmem:[%s304 + $0x8] sm:$0xff]
        %307 = vst.msk [vmem:[#allocation2 + $0x1b0] sm:$0xff] %vm170, %v305
        %308 = vst.msk [vmem:[#allocation2 + $0x1b8] sm:$0xff] %vm170, %v306
        %s309 = scalar_lea.vmem %s168, 208
        %v310 = vld [vmem:[%s309] sm:$0xff]
        %v311 = vld [vmem:[%s309 + $0x8] sm:$0xff]
        %312 = vst.msk [vmem:[#allocation2 + $0x1d0] sm:$0xff] %vm170, %v310
        %313 = vst.msk [vmem:[#allocation2 + $0x1d8] sm:$0xff] %vm170, %v311
        %s314 = scalar_lea.vmem %s168, 224
        %v315 = vld [vmem:[%s314] sm:$0xff]
        %v316 = vld [vmem:[%s314 + $0x8] sm:$0xff]
        %317 = vst.msk [vmem:[#allocation2 + $0x1f0] sm:$0xff] %vm170, %v315
        %318 = vst.msk [vmem:[#allocation2 + $0x1f8] sm:$0xff] %vm170, %v316
        %s319 = scalar_lea.vmem %s168, 240
        %v320 = vld [vmem:[%s319] sm:$0xff]
        %v321 = vld [vmem:[%s319 + $0x8] sm:$0xff]
        %322 = vst.msk [vmem:[#allocation2 + $0x210] sm:$0xff] %vm170, %v320
        %323 = vst.msk [vmem:[#allocation2 + $0x218] sm:$0xff] %vm170, %v321
        %v324 = vld [vmem:[#allocation2 + $0x7] sm:$0xff]
        %v325 = vld [vmem:[#allocation2 + $0xf] sm:$0xff]
        %v326 = vld [vmem:[#allocation2 + $0x17] sm:$0xff]
        %v327 = vld [vmem:[#allocation2 + $0x1f] sm:$0xff]
        %v328 = vld [vmem:[#allocation2 + $0x27] sm:$0xff]
        %v329 = vld [vmem:[#allocation2 + $0x2f] sm:$0xff]
        %v330 = vld [vmem:[#allocation2 + $0x37] sm:$0xff]
        %v331 = vld [vmem:[#allocation2 + $0x3f] sm:$0xff]
        %v332 = vld [vmem:[#allocation2 + $0x47] sm:$0xff]
        %v333 = vld [vmem:[#allocation2 + $0x4f] sm:$0xff]
        %v334 = vld [vmem:[#allocation2 + $0x57] sm:$0xff]
        %v335 = vld [vmem:[#allocation2 + $0x5f] sm:$0xff]
        %v336 = vld [vmem:[#allocation2 + $0x67] sm:$0xff]
        %v337 = vld [vmem:[#allocation2 + $0x6f] sm:$0xff]
        %v338 = vld [vmem:[#allocation2 + $0x77] sm:$0xff]
        %v339 = vld [vmem:[#allocation2 + $0x7f] sm:$0xff]
        %v340 = vld [vmem:[#allocation2 + $0x87] sm:$0xff]
        %v341 = vld [vmem:[#allocation2 + $0x8f] sm:$0xff]
        %v342 = vld [vmem:[#allocation2 + $0x97] sm:$0xff]
        %v343 = vld [vmem:[#allocation2 + $0x9f] sm:$0xff]
        %v344 = vld [vmem:[#allocation2 + $0xa7] sm:$0xff]
        %v345 = vld [vmem:[#allocation2 + $0xaf] sm:$0xff]
        %v346 = vld [vmem:[#allocation2 + $0xb7] sm:$0xff]
        %v347 = vld [vmem:[#allocation2 + $0xbf] sm:$0xff]
        %v348 = vld [vmem:[#allocation2 + $0xc7] sm:$0xff]
        %v349 = vld [vmem:[#allocation2 + $0xcf] sm:$0xff]
        %v350 = vld [vmem:[#allocation2 + $0xd7] sm:$0xff]
        %v351 = vld [vmem:[#allocation2 + $0xdf] sm:$0xff]
        %v352 = vld [vmem:[#allocation2 + $0xe7] sm:$0xff]
        %v353 = vld [vmem:[#allocation2 + $0xef] sm:$0xff]
        %v354 = vld [vmem:[#allocation2 + $0xf7] sm:$0xff]
        %v355 = vld [vmem:[#allocation2 + $0xff] sm:$0xff]
        %v356 = vld [vmem:[#allocation2 + $0x107] sm:$0xff]
        %v357 = vld [vmem:[#allocation2 + $0x10f] sm:$0xff]
        %v358 = vld [vmem:[#allocation2 + $0x117] sm:$0xff]
        %v359 = vld [vmem:[#allocation2 + $0x11f] sm:$0xff]
        %v360 = vld [vmem:[#allocation2 + $0x127] sm:$0xff]
        %v361 = vld [vmem:[#allocation2 + $0x12f] sm:$0xff]
        %v362 = vld [vmem:[#allocation2 + $0x137] sm:$0xff]
        %v363 = vld [vmem:[#allocation2 + $0x13f] sm:$0xff]
        %v364 = vld [vmem:[#allocation2 + $0x147] sm:$0xff]
        %v365 = vld [vmem:[#allocation2 + $0x14f] sm:$0xff]
        %v366 = vld [vmem:[#allocation2 + $0x157] sm:$0xff]
        %v367 = vld [vmem:[#allocation2 + $0x15f] sm:$0xff]
        %v368 = vld [vmem:[#allocation2 + $0x167] sm:$0xff]
        %v369 = vld [vmem:[#allocation2 + $0x16f] sm:$0xff]
        %v370 = vld [vmem:[#allocation2 + $0x177] sm:$0xff]
        %v371 = vld [vmem:[#allocation2 + $0x17f] sm:$0xff]
        %v372 = vld [vmem:[#allocation2 + $0x187] sm:$0xff]
        %v373 = vld [vmem:[#allocation2 + $0x18f] sm:$0xff]
        %v374 = vld [vmem:[#allocation2 + $0x197] sm:$0xff]
        %v375 = vld [vmem:[#allocation2 + $0x19f] sm:$0xff]
        %v376 = vld [vmem:[#allocation2 + $0x1a7] sm:$0xff]
        %v377 = vld [vmem:[#allocation2 + $0x1af] sm:$0xff]
        %v378 = vld [vmem:[#allocation2 + $0x1b7] sm:$0xff]
        %v379 = vld [vmem:[#allocation2 + $0x1bf] sm:$0xff]
        %v380 = vld [vmem:[#allocation2 + $0x1c7] sm:$0xff]
        %v381 = vld [vmem:[#allocation2 + $0x1cf] sm:$0xff]
        %v382 = vld [vmem:[#allocation2 + $0x1d7] sm:$0xff]
        %v383 = vld [vmem:[#allocation2 + $0x1df] sm:$0xff]
        %v384 = vld [vmem:[#allocation2 + $0x1e7] sm:$0xff]
        %v385 = vld [vmem:[#allocation2 + $0x1ef] sm:$0xff]
        %v386 = vld [vmem:[#allocation2 + $0x1f7] sm:$0xff]
        %v387 = vld [vmem:[#allocation2 + $0x1ff] sm:$0xff]
        %v388 = vpack.c.bf16 %v325, %v324
        %v389 = vpack.c.bf16 %v327, %v326
        %v390 = vpack.c.bf16 %v329, %v328
        %v391 = vpack.c.bf16 %v331, %v330
        %v392 = vpack.c.bf16 %v333, %v332
        %v393 = vpack.c.bf16 %v335, %v334
        %v394 = vpack.c.bf16 %v337, %v336
        %v395 = vpack.c.bf16 %v339, %v338
        %v396 = vpack.c.bf16 %v341, %v340
        %v397 = vpack.c.bf16 %v343, %v342
        %v398 = vpack.c.bf16 %v345, %v344
        %v399 = vpack.c.bf16 %v347, %v346
        %v400 = vpack.c.bf16 %v349, %v348
        %v401 = vpack.c.bf16 %v351, %v350
        %v402 = vpack.c.bf16 %v353, %v352
        %v403 = vpack.c.bf16 %v355, %v354
        %v404 = vpack.c.bf16 %v357, %v356
        %v405 = vpack.c.bf16 %v359, %v358
        %v406 = vpack.c.bf16 %v361, %v360
        %v407 = vpack.c.bf16 %v363, %v362
        %v408 = vpack.c.bf16 %v365, %v364
        %v409 = vpack.c.bf16 %v367, %v366
        %v410 = vpack.c.bf16 %v369, %v368
        %v411 = vpack.c.bf16 %v371, %v370
        %v412 = vpack.c.bf16 %v373, %v372
        %v413 = vpack.c.bf16 %v375, %v374
        %v414 = vpack.c.bf16 %v377, %v376
        %v415 = vpack.c.bf16 %v379, %v378
        %v416 = vpack.c.bf16 %v381, %v380
        %v417 = vpack.c.bf16 %v383, %v382
        %v418 = vpack.c.bf16 %v385, %v384
        %v419 = vpack.c.bf16 %v387, %v386
        %420 = vst.msk [vmem:[#allocation3] sm:$0xff] %vm170, %v388
        %421 = vst.msk [vmem:[#allocation3 + $0x8] sm:$0xff] %vm170, %v389
        %422 = vst.msk [vmem:[#allocation3 + $0x10] sm:$0xff] %vm170, %v390
        %423 = vst.msk [vmem:[#allocation3 + $0x18] sm:$0xff] %vm170, %v391
        %424 = vst.msk [vmem:[#allocation3 + $0x20] sm:$0xff] %vm170, %v392
        %425 = vst.msk [vmem:[#allocation3 + $0x28] sm:$0xff] %vm170, %v393
        %426 = vst.msk [vmem:[#allocation3 + $0x30] sm:$0xff] %vm170, %v394
        %427 = vst.msk [vmem:[#allocation3 + $0x38] sm:$0xff] %vm170, %v395
        %428 = vst.msk [vmem:[#allocation3 + $0x40] sm:$0xff] %vm170, %v396
        %429 = vst.msk [vmem:[#allocation3 + $0x48] sm:$0xff] %vm170, %v397
        %430 = vst.msk [vmem:[#allocation3 + $0x50] sm:$0xff] %vm170, %v398
        %431 = vst.msk [vmem:[#allocation3 + $0x58] sm:$0xff] %vm170, %v399
        %432 = vst.msk [vmem:[#allocation3 + $0x60] sm:$0xff] %vm170, %v400
        %433 = vst.msk [vmem:[#allocation3 + $0x68] sm:$0xff] %vm170, %v401
        %434 = vst.msk [vmem:[#allocation3 + $0x70] sm:$0xff] %vm170, %v402
        %435 = vst.msk [vmem:[#allocation3 + $0x78] sm:$0xff] %vm170, %v403
        %436 = vst.msk [vmem:[#allocation3 + $0x80] sm:$0xff] %vm170, %v404
        %437 = vst.msk [vmem:[#allocation3 + $0x88] sm:$0xff] %vm170, %v405
        %438 = vst.msk [vmem:[#allocation3 + $0x90] sm:$0xff] %vm170, %v406
        %439 = vst.msk [vmem:[#allocation3 + $0x98] sm:$0xff] %vm170, %v407
        %440 = vst.msk [vmem:[#allocation3 + $0xa0] sm:$0xff] %vm170, %v408
        %441 = vst.msk [vmem:[#allocation3 + $0xa8] sm:$0xff] %vm170, %v409
        %442 = vst.msk [vmem:[#allocation3 + $0xb0] sm:$0xff] %vm170, %v410
        %443 = vst.msk [vmem:[#allocation3 + $0xb8] sm:$0xff] %vm170, %v411
        %444 = vst.msk [vmem:[#allocation3 + $0xc0] sm:$0xff] %vm170, %v412
        %445 = vst.msk [vmem:[#allocation3 + $0xc8] sm:$0xff] %vm170, %v413
        %446 = vst.msk [vmem:[#allocation3 + $0xd0] sm:$0xff] %vm170, %v414
        %447 = vst.msk [vmem:[#allocation3 + $0xd8] sm:$0xff] %vm170, %v415
        %448 = vst.msk [vmem:[#allocation3 + $0xe0] sm:$0xff] %vm170, %v416
        %449 = vst.msk [vmem:[#allocation3 + $0xe8] sm:$0xff] %vm170, %v417
        %450 = vst.msk [vmem:[#allocation3 + $0xf0] sm:$0xff] %vm170, %v418
        %451 = vst.msk [vmem:[#allocation3 + $0xf8] sm:$0xff] %vm170, %v419
        %v452 = vld [vmem:[#allocation2 + $0x8] sm:$0xff]
        %v453 = vld [vmem:[#allocation2 + $0x10] sm:$0xff]
        %v454 = vld [vmem:[#allocation2 + $0x18] sm:$0xff]
        %v455 = vld [vmem:[#allocation2 + $0x20] sm:$0xff]
        %v456 = vld [vmem:[#allocation2 + $0x28] sm:$0xff]
        %v457 = vld [vmem:[#allocation2 + $0x30] sm:$0xff]
        %v458 = vld [vmem:[#allocation2 + $0x38] sm:$0xff]
        %v459 = vld [vmem:[#allocation2 + $0x40] sm:$0xff]
        %v460 = vld [vmem:[#allocation2 + $0x48] sm:$0xff]
        %v461 = vld [vmem:[#allocation2 + $0x50] sm:$0xff]
        %v462 = vld [vmem:[#allocation2 + $0x58] sm:$0xff]
        %v463 = vld [vmem:[#allocation2 + $0x60] sm:$0xff]
        %v464 = vld [vmem:[#allocation2 + $0x68] sm:$0xff]
        %v465 = vld [vmem:[#allocation2 + $0x70] sm:$0xff]
        %v466 = vld [vmem:[#allocation2 + $0x78] sm:$0xff]
        %v467 = vld [vmem:[#allocation2 + $0x80] sm:$0xff]
        %v468 = vld [vmem:[#allocation2 + $0x88] sm:$0xff]
        %v469 = vld [vmem:[#allocation2 + $0x90] sm:$0xff]
        %v470 = vld [vmem:[#allocation2 + $0x98] sm:$0xff]
        %v471 = vld [vmem:[#allocation2 + $0xa0] sm:$0xff]
        %v472 = vld [vmem:[#allocation2 + $0xa8] sm:$0xff]
        %v473 = vld [vmem:[#allocation2 + $0xb0] sm:$0xff]
        %v474 = vld [vmem:[#allocation2 + $0xb8] sm:$0xff]
        %v475 = vld [vmem:[#allocation2 + $0xc0] sm:$0xff]
        %v476 = vld [vmem:[#allocation2 + $0xc8] sm:$0xff]
        %v477 = vld [vmem:[#allocation2 + $0xd0] sm:$0xff]
        %v478 = vld [vmem:[#allocation2 + $0xd8] sm:$0xff]
        %v479 = vld [vmem:[#allocation2 + $0xe0] sm:$0xff]
        %v480 = vld [vmem:[#allocation2 + $0xe8] sm:$0xff]
        %v481 = vld [vmem:[#allocation2 + $0xf0] sm:$0xff]
        %v482 = vld [vmem:[#allocation2 + $0xf8] sm:$0xff]
        %v483 = vld [vmem:[#allocation2 + $0x100] sm:$0xff]
        %v484 = vld [vmem:[#allocation2 + $0x108] sm:$0xff]
        %v485 = vld [vmem:[#allocation2 + $0x110] sm:$0xff]
        %v486 = vld [vmem:[#allocation2 + $0x118] sm:$0xff]
        %v487 = vld [vmem:[#allocation2 + $0x120] sm:$0xff]
        %v488 = vld [vmem:[#allocation2 + $0x128] sm:$0xff]
        %v489 = vld [vmem:[#allocation2 + $0x130] sm:$0xff]
        %v490 = vld [vmem:[#allocation2 + $0x138] sm:$0xff]
        %v491 = vld [vmem:[#allocation2 + $0x140] sm:$0xff]
        %v492 = vld [vmem:[#allocation2 + $0x148] sm:$0xff]
        %v493 = vld [vmem:[#allocation2 + $0x150] sm:$0xff]
        %v494 = vld [vmem:[#allocation2 + $0x158] sm:$0xff]
        %v495 = vld [vmem:[#allocation2 + $0x160] sm:$0xff]
        %v496 = vld [vmem:[#allocation2 + $0x168] sm:$0xff]
        %v497 = vld [vmem:[#allocation2 + $0x170] sm:$0xff]
        %v498 = vld [vmem:[#allocation2 + $0x178] sm:$0xff]
        %v499 = vld [vmem:[#allocation2 + $0x180] sm:$0xff]
        %v500 = vld [vmem:[#allocation2 + $0x188] sm:$0xff]
        %v501 = vld [vmem:[#allocation2 + $0x190] sm:$0xff]
        %v502 = vld [vmem:[#allocation2 + $0x198] sm:$0xff]
        %v503 = vld [vmem:[#allocation2 + $0x1a0] sm:$0xff]
        %v504 = vld [vmem:[#allocation2 + $0x1a8] sm:$0xff]
        %v505 = vld [vmem:[#allocation2 + $0x1b0] sm:$0xff]
        %v506 = vld [vmem:[#allocation2 + $0x1b8] sm:$0xff]
        %v507 = vld [vmem:[#allocation2 + $0x1c0] sm:$0xff]
        %v508 = vld [vmem:[#allocation2 + $0x1c8] sm:$0xff]
        %v509 = vld [vmem:[#allocation2 + $0x1d0] sm:$0xff]
        %v510 = vld [vmem:[#allocation2 + $0x1d8] sm:$0xff]
        %v511 = vld [vmem:[#allocation2 + $0x1e0] sm:$0xff]
        %v512 = vld [vmem:[#allocation2 + $0x1e8] sm:$0xff]
        %v513 = vld [vmem:[#allocation2 + $0x1f0] sm:$0xff]
        %v514 = vld [vmem:[#allocation2 + $0x1f8] sm:$0xff]
        %v515 = vld [vmem:[#allocation2 + $0x200] sm:$0xff]
        %v516 = vpack.c.bf16 %v453, %v452
        %v517 = vpack.c.bf16 %v455, %v454
        %v518 = vpack.c.bf16 %v457, %v456
        %v519 = vpack.c.bf16 %v459, %v458
        %v520 = vpack.c.bf16 %v461, %v460
        %v521 = vpack.c.bf16 %v463, %v462
        %v522 = vpack.c.bf16 %v465, %v464
        %v523 = vpack.c.bf16 %v467, %v466
        %v524 = vpack.c.bf16 %v469, %v468
        %v525 = vpack.c.bf16 %v471, %v470
        %v526 = vpack.c.bf16 %v473, %v472
        %v527 = vpack.c.bf16 %v475, %v474
        %v528 = vpack.c.bf16 %v477, %v476
        %v529 = vpack.c.bf16 %v479, %v478
        %v530 = vpack.c.bf16 %v481, %v480
        %v531 = vpack.c.bf16 %v483, %v482
        %v532 = vpack.c.bf16 %v485, %v484
        %v533 = vpack.c.bf16 %v487, %v486
        %v534 = vpack.c.bf16 %v489, %v488
        %v535 = vpack.c.bf16 %v491, %v490
        %v536 = vpack.c.bf16 %v493, %v492
        %v537 = vpack.c.bf16 %v495, %v494
        %v538 = vpack.c.bf16 %v497, %v496
        %v539 = vpack.c.bf16 %v499, %v498
        %v540 = vpack.c.bf16 %v501, %v500
        %v541 = vpack.c.bf16 %v503, %v502
        %v542 = vpack.c.bf16 %v505, %v504
        %v543 = vpack.c.bf16 %v507, %v506
        %v544 = vpack.c.bf16 %v509, %v508
        %v545 = vpack.c.bf16 %v511, %v510
        %v546 = vpack.c.bf16 %v513, %v512
        %v547 = vpack.c.bf16 %v515, %v514
        %580 = vrot.lane.b32.xlu0 %v516, 3
        %v581 = vpop.permute.xlu0 %580
        %582 = vrot.lane.b32.xlu0 %v517, 3
        %v583 = vpop.permute.xlu0 %582
        %584 = vrot.lane.b32.xlu0 %v518, 3
        %v585 = vpop.permute.xlu0 %584
        %586 = vrot.lane.b32.xlu0 %v519, 3
        %v587 = vpop.permute.xlu0 %586
        %588 = vrot.lane.b32.xlu0 %v520, 3
        %v589 = vpop.permute.xlu0 %588
        %590 = vrot.lane.b32.xlu0 %v521, 3
        %v591 = vpop.permute.xlu0 %590
        %592 = vrot.lane.b32.xlu0 %v522, 3
        %v593 = vpop.permute.xlu0 %592
        %594 = vrot.lane.b32.xlu0 %v523, 3
        %v595 = vpop.permute.xlu0 %594
        %596 = vrot.lane.b32.xlu0 %v524, 3
        %v597 = vpop.permute.xlu0 %596
        %598 = vrot.lane.b32.xlu0 %v525, 3
        %v599 = vpop.permute.xlu0 %598
        %600 = vrot.lane.b32.xlu0 %v526, 3
        %v601 = vpop.permute.xlu0 %600
        %602 = vrot.lane.b32.xlu0 %v527, 3
        %v603 = vpop.permute.xlu0 %602
        %604 = vrot.lane.b32.xlu0 %v528, 3
        %v605 = vpop.permute.xlu0 %604
        %606 = vrot.lane.b32.xlu0 %v529, 3
        %v607 = vpop.permute.xlu0 %606
        %608 = vrot.lane.b32.xlu0 %v530, 3
        %v609 = vpop.permute.xlu0 %608
        %610 = vrot.lane.b32.xlu0 %v531, 3
        %v611 = vpop.permute.xlu0 %610
        %612 = vrot.lane.b32.xlu0 %v532, 3
        %v613 = vpop.permute.xlu0 %612
        %614 = vrot.lane.b32.xlu0 %v533, 3
        %v615 = vpop.permute.xlu0 %614
        %616 = vrot.lane.b32.xlu0 %v534, 3
        %v617 = vpop.permute.xlu0 %616
        %618 = vrot.lane.b32.xlu0 %v535, 3
        %v619 = vpop.permute.xlu0 %618
        %620 = vrot.lane.b32.xlu0 %v536, 3
        %v621 = vpop.permute.xlu0 %620
        %622 = vrot.lane.b32.xlu0 %v537, 3
        %v623 = vpop.permute.xlu0 %622
        %624 = vrot.lane.b32.xlu0 %v538, 3
        %v625 = vpop.permute.xlu0 %624
        %626 = vrot.lane.b32.xlu0 %v539, 3
        %v627 = vpop.permute.xlu0 %626
        %628 = vrot.lane.b32.xlu0 %v540, 3
        %v629 = vpop.permute.xlu0 %628
        %630 = vrot.lane.b32.xlu0 %v541, 3
        %v631 = vpop.permute.xlu0 %630
        %632 = vrot.lane.b32.xlu0 %v542, 3
        %v633 = vpop.permute.xlu0 %632
        %634 = vrot.lane.b32.xlu0 %v543, 3
        %v635 = vpop.permute.xlu0 %634
        %636 = vrot.lane.b32.xlu0 %v544, 3
        %v637 = vpop.permute.xlu0 %636
        %638 = vrot.lane.b32.xlu0 %v545, 3
        %v639 = vpop.permute.xlu0 %638
        %640 = vrot.lane.b32.xlu0 %v546, 3
        %v641 = vpop.permute.xlu0 %640
        %642 = vrot.lane.b32.xlu0 %v547, 3
        %v643 = vpop.permute.xlu0 %642
        %vm676 = vcmask 48152
        %677 = vst.msk [vmem:[#allocation3] sm:$0xff] %vm676, %v581
        %678 = vst.msk [vmem:[#allocation3 + $0x8] sm:$0xff] %vm676, %v583
        %679 = vst.msk [vmem:[#allocation3 + $0x10] sm:$0xff] %vm676, %v585
        %680 = vst.msk [vmem:[#allocation3 + $0x18] sm:$0xff] %vm676, %v587
        %681 = vst.msk [vmem:[#allocation3 + $0x20] sm:$0xff] %vm676, %v589
        %682 = vst.msk [vmem:[#allocation3 + $0x28] sm:$0xff] %vm676, %v591
        %683 = vst.msk [vmem:[#allocation3 + $0x30] sm:$0xff] %vm676, %v593
        %684 = vst.msk [vmem:[#allocation3 + $0x38] sm:$0xff] %vm676, %v595
        %685 = vst.msk [vmem:[#allocation3 + $0x40] sm:$0xff] %vm676, %v597
        %686 = vst.msk [vmem:[#allocation3 + $0x48] sm:$0xff] %vm676, %v599
        %687 = vst.msk [vmem:[#allocation3 + $0x50] sm:$0xff] %vm676, %v601
        %688 = vst.msk [vmem:[#allocation3 + $0x58] sm:$0xff] %vm676, %v603
        %689 = vst.msk [vmem:[#allocation3 + $0x60] sm:$0xff] %vm676, %v605
        %690 = vst.msk [vmem:[#allocation3 + $0x68] sm:$0xff] %vm676, %v607
        %691 = vst.msk [vmem:[#allocation3 + $0x70] sm:$0xff] %vm676, %v609
        %692 = vst.msk [vmem:[#allocation3 + $0x78] sm:$0xff] %vm676, %v611
        %693 = vst.msk [vmem:[#allocation3 + $0x80] sm:$0xff] %vm676, %v613
        %694 = vst.msk [vmem:[#allocation3 + $0x88] sm:$0xff] %vm676, %v615
        %695 = vst.msk [vmem:[#allocation3 + $0x90] sm:$0xff] %vm676, %v617
        %696 = vst.msk [vmem:[#allocation3 + $0x98] sm:$0xff] %vm676, %v619
        %697 = vst.msk [vmem:[#allocation3 + $0xa0] sm:$0xff] %vm676, %v621
        %698 = vst.msk [vmem:[#allocation3 + $0xa8] sm:$0xff] %vm676, %v623
        %699 = vst.msk [vmem:[#allocation3 + $0xb0] sm:$0xff] %vm676, %v625
        %700 = vst.msk [vmem:[#allocation3 + $0xb8] sm:$0xff] %vm676, %v627
        %701 = vst.msk [vmem:[#allocation3 + $0xc0] sm:$0xff] %vm676, %v629
        %702 = vst.msk [vmem:[#allocation3 + $0xc8] sm:$0xff] %vm676, %v631
        %703 = vst.msk [vmem:[#allocation3 + $0xd0] sm:$0xff] %vm676, %v633
        %704 = vst.msk [vmem:[#allocation3 + $0xd8] sm:$0xff] %vm676, %v635
        %705 = vst.msk [vmem:[#allocation3 + $0xe0] sm:$0xff] %vm676, %v637
        %706 = vst.msk [vmem:[#allocation3 + $0xe8] sm:$0xff] %vm676, %v639
        %707 = vst.msk [vmem:[#allocation3 + $0xf0] sm:$0xff] %vm676, %v641
        %708 = vst.msk [vmem:[#allocation3 + $0xf8] sm:$0xff] %vm676, %v643
        %v709 = vld [vmem:[#allocation2 + $0x9] sm:$0xff]
        %v710 = vld [vmem:[#allocation2 + $0x11] sm:$0xff]
        %v711 = vld [vmem:[#allocation2 + $0x19] sm:$0xff]
        %v712 = vld [vmem:[#allocation2 + $0x21] sm:$0xff]
        %v713 = vld [vmem:[#allocation2 + $0x29] sm:$0xff]
        %v714 = vld [vmem:[#allocation2 + $0x31] sm:$0xff]
        %v715 = vld [vmem:[#allocation2 + $0x39] sm:$0xff]
        %v716 = vld [vmem:[#allocation2 + $0x41] sm:$0xff]
        %v717 = vld [vmem:[#allocation2 + $0x49] sm:$0xff]
        %v718 = vld [vmem:[#allocation2 + $0x51] sm:$0xff]
        %v719 = vld [vmem:[#allocation2 + $0x59] sm:$0xff]
        %v720 = vld [vmem:[#allocation2 + $0x61] sm:$0xff]
        %v721 = vld [vmem:[#allocation2 + $0x69] sm:$0xff]
        %v722 = vld [vmem:[#allocation2 + $0x71] sm:$0xff]
        %v723 = vld [vmem:[#allocation2 + $0x79] sm:$0xff]
        %v724 = vld [vmem:[#allocation2 + $0x81] sm:$0xff]
        %v725 = vld [vmem:[#allocation2 + $0x89] sm:$0xff]
        %v726 = vld [vmem:[#allocation2 + $0x91] sm:$0xff]
        %v727 = vld [vmem:[#allocation2 + $0x99] sm:$0xff]
        %v728 = vld [vmem:[#allocation2 + $0xa1] sm:$0xff]
        %v729 = vld [vmem:[#allocation2 + $0xa9] sm:$0xff]
        %v730 = vld [vmem:[#allocation2 + $0xb1] sm:$0xff]
        %v731 = vld [vmem:[#allocation2 + $0xb9] sm:$0xff]
        %v732 = vld [vmem:[#allocation2 + $0xc1] sm:$0xff]
        %v733 = vld [vmem:[#allocation2 + $0xc9] sm:$0xff]
        %v734 = vld [vmem:[#allocation2 + $0xd1] sm:$0xff]
        %v735 = vld [vmem:[#allocation2 + $0xd9] sm:$0xff]
        %v736 = vld [vmem:[#allocation2 + $0xe1] sm:$0xff]
        %v737 = vld [vmem:[#allocation2 + $0xe9] sm:$0xff]
        %v738 = vld [vmem:[#allocation2 + $0xf1] sm:$0xff]
        %v739 = vld [vmem:[#allocation2 + $0xf9] sm:$0xff]
        %v740 = vld [vmem:[#allocation2 + $0x101] sm:$0xff]
        %v741 = vld [vmem:[#allocation2 + $0x109] sm:$0xff]
        %v742 = vld [vmem:[#allocation2 + $0x111] sm:$0xff]
        %v743 = vld [vmem:[#allocation2 + $0x119] sm:$0xff]
        %v744 = vld [vmem:[#allocation2 + $0x121] sm:$0xff]
        %v745 = vld [vmem:[#allocation2 + $0x129] sm:$0xff]
        %v746 = vld [vmem:[#allocation2 + $0x131] sm:$0xff]
        %v747 = vld [vmem:[#allocation2 + $0x139] sm:$0xff]
        %v748 = vld [vmem:[#allocation2 + $0x141] sm:$0xff]
        %v749 = vld [vmem:[#allocation2 + $0x149] sm:$0xff]
        %v750 = vld [vmem:[#allocation2 + $0x151] sm:$0xff]
        %v751 = vld [vmem:[#allocation2 + $0x159] sm:$0xff]
        %v752 = vld [vmem:[#allocation2 + $0x161] sm:$0xff]
        %v753 = vld [vmem:[#allocation2 + $0x169] sm:$0xff]
        %v754 = vld [vmem:[#allocation2 + $0x171] sm:$0xff]
        %v755 = vld [vmem:[#allocation2 + $0x179] sm:$0xff]
        %v756 = vld [vmem:[#allocation2 + $0x181] sm:$0xff]
        %v757 = vld [vmem:[#allocation2 + $0x189] sm:$0xff]
        %v758 = vld [vmem:[#allocation2 + $0x191] sm:$0xff]
        %v759 = vld [vmem:[#allocation2 + $0x199] sm:$0xff]
        %v760 = vld [vmem:[#allocation2 + $0x1a1] sm:$0xff]
        %v761 = vld [vmem:[#allocation2 + $0x1a9] sm:$0xff]
        %v762 = vld [vmem:[#allocation2 + $0x1b1] sm:$0xff]
        %v763 = vld [vmem:[#allocation2 + $0x1b9] sm:$0xff]
        %v764 = vld [vmem:[#allocation2 + $0x1c1] sm:$0xff]
        %v765 = vld [vmem:[#allocation2 + $0x1c9] sm:$0xff]
        %v766 = vld [vmem:[#allocation2 + $0x1d1] sm:$0xff]
        %v767 = vld [vmem:[#allocation2 + $0x1d9] sm:$0xff]
        %v768 = vld [vmem:[#allocation2 + $0x1e1] sm:$0xff]
        %v769 = vld [vmem:[#allocation2 + $0x1e9] sm:$0xff]
        %v770 = vld [vmem:[#allocation2 + $0x1f1] sm:$0xff]
        %v771 = vld [vmem:[#allocation2 + $0x1f9] sm:$0xff]
        %v772 = vld [vmem:[#allocation2 + $0x201] sm:$0xff]
        %v773 = vpack.c.bf16 %v710, %v709
        %v774 = vpack.c.bf16 %v712, %v711
        %v775 = vpack.c.bf16 %v714, %v713
        %v776 = vpack.c.bf16 %v716, %v715
        %v777 = vpack.c.bf16 %v718, %v717
        %v778 = vpack.c.bf16 %v720, %v719
        %v779 = vpack.c.bf16 %v722, %v721
        %v780 = vpack.c.bf16 %v724, %v723
        %v781 = vpack.c.bf16 %v726, %v725
        %v782 = vpack.c.bf16 %v728, %v727
        %v783 = vpack.c.bf16 %v730, %v729
        %v784 = vpack.c.bf16 %v732, %v731
        %v785 = vpack.c.bf16 %v734, %v733
        %v786 = vpack.c.bf16 %v736, %v735
        %v787 = vpack.c.bf16 %v738, %v737
        %v788 = vpack.c.bf16 %v740, %v739
        %v789 = vpack.c.bf16 %v742, %v741
        %v790 = vpack.c.bf16 %v744, %v743
        %v791 = vpack.c.bf16 %v746, %v745
        %v792 = vpack.c.bf16 %v748, %v747
        %v793 = vpack.c.bf16 %v750, %v749
        %v794 = vpack.c.bf16 %v752, %v751
        %v795 = vpack.c.bf16 %v754, %v753
        %v796 = vpack.c.bf16 %v756, %v755
        %v797 = vpack.c.bf16 %v758, %v757
        %v798 = vpack.c.bf16 %v760, %v759
        %v799 = vpack.c.bf16 %v762, %v761
        %v800 = vpack.c.bf16 %v764, %v763
        %v801 = vpack.c.bf16 %v766, %v765
        %v802 = vpack.c.bf16 %v768, %v767
        %v803 = vpack.c.bf16 %v770, %v769
        %v804 = vpack.c.bf16 %v772, %v771
        %837 = vrot.lane.b32.xlu0 %v773, 6
        %v838 = vpop.permute.xlu0 %837
        %839 = vrot.lane.b32.xlu0 %v774, 6
        %v840 = vpop.permute.xlu0 %839
        %841 = vrot.lane.b32.xlu0 %v775, 6
        %v842 = vpop.permute.xlu0 %841
        %843 = vrot.lane.b32.xlu0 %v776, 6
        %v844 = vpop.permute.xlu0 %843
        %845 = vrot.lane.b32.xlu0 %v777, 6
        %v846 = vpop.permute.xlu0 %845
        %847 = vrot.lane.b32.xlu0 %v778, 6
        %v848 = vpop.permute.xlu0 %847
        %849 = vrot.lane.b32.xlu0 %v779, 6
        %v850 = vpop.permute.xlu0 %849
        %851 = vrot.lane.b32.xlu0 %v780, 6
        %v852 = vpop.permute.xlu0 %851
        %853 = vrot.lane.b32.xlu0 %v781, 6
        %v854 = vpop.permute.xlu0 %853
        %855 = vrot.lane.b32.xlu0 %v782, 6
        %v856 = vpop.permute.xlu0 %855
        %857 = vrot.lane.b32.xlu0 %v783, 6
        %v858 = vpop.permute.xlu0 %857
        %859 = vrot.lane.b32.xlu0 %v784, 6
        %v860 = vpop.permute.xlu0 %859
        %861 = vrot.lane.b32.xlu0 %v785, 6
        %v862 = vpop.permute.xlu0 %861
        %863 = vrot.lane.b32.xlu0 %v786, 6
        %v864 = vpop.permute.xlu0 %863
        %865 = vrot.lane.b32.xlu0 %v787, 6
        %v866 = vpop.permute.xlu0 %865
        %867 = vrot.lane.b32.xlu0 %v788, 6
        %v868 = vpop.permute.xlu0 %867
        %869 = vrot.lane.b32.xlu0 %v789, 6
        %v870 = vpop.permute.xlu0 %869
        %871 = vrot.lane.b32.xlu0 %v790, 6
        %v872 = vpop.permute.xlu0 %871
        %873 = vrot.lane.b32.xlu0 %v791, 6
        %v874 = vpop.permute.xlu0 %873
        %875 = vrot.lane.b32.xlu0 %v792, 6
        %v876 = vpop.permute.xlu0 %875
        %877 = vrot.lane.b32.xlu0 %v793, 6
        %v878 = vpop.permute.xlu0 %877
        %879 = vrot.lane.b32.xlu0 %v794, 6
        %v880 = vpop.permute.xlu0 %879
        %881 = vrot.lane.b32.xlu0 %v795, 6
        %v882 = vpop.permute.xlu0 %881
        %883 = vrot.lane.b32.xlu0 %v796, 6
        %v884 = vpop.permute.xlu0 %883
        %885 = vrot.lane.b32.xlu0 %v797, 6
        %v886 = vpop.permute.xlu0 %885
        %887 = vrot.lane.b32.xlu0 %v798, 6
        %v888 = vpop.permute.xlu0 %887
        %889 = vrot.lane.b32.xlu0 %v799, 6
        %v890 = vpop.permute.xlu0 %889
        %891 = vrot.lane.b32.xlu0 %v800, 6
        %v892 = vpop.permute.xlu0 %891
        %893 = vrot.lane.b32.xlu0 %v801, 6
        %v894 = vpop.permute.xlu0 %893
        %895 = vrot.lane.b32.xlu0 %v802, 6
        %v896 = vpop.permute.xlu0 %895
        %897 = vrot.lane.b32.xlu0 %v803, 6
        %v898 = vpop.permute.xlu0 %897
        %899 = vrot.lane.b32.xlu0 %v804, 6
        %v900 = vpop.permute.xlu0 %899
        %vm933 = vcmask 72752
        %934 = vst.msk [vmem:[#allocation3] sm:$0xff] %vm933, %v838
        %935 = vst.msk [vmem:[#allocation3 + $0x8] sm:$0xff] %vm933, %v840
        %936 = vst.msk [vmem:[#allocation3 + $0x10] sm:$0xff] %vm933, %v842
        %937 = vst.msk [vmem:[#allocation3 + $0x18] sm:$0xff] %vm933, %v844
        %938 = vst.msk [vmem:[#allocation3 + $0x20] sm:$0xff] %vm933, %v846
        %939 = vst.msk [vmem:[#allocation3 + $0x28] sm:$0xff] %vm933, %v848
        %940 = vst.msk [vmem:[#allocation3 + $0x30] sm:$0xff] %vm933, %v850
        %941 = vst.msk [vmem:[#allocation3 + $0x38] sm:$0xff] %vm933, %v852
        %942 = vst.msk [vmem:[#allocation3 + $0x40] sm:$0xff] %vm933, %v854
        %943 = vst.msk [vmem:[#allocation3 + $0x48] sm:$0xff] %vm933, %v856
        %944 = vst.msk [vmem:[#allocation3 + $0x50] sm:$0xff] %vm933, %v858
        %945 = vst.msk [vmem:[#allocation3 + $0x58] sm:$0xff] %vm933, %v860
        %946 = vst.msk [vmem:[#allocation3 + $0x60] sm:$0xff] %vm933, %v862
        %947 = vst.msk [vmem:[#allocation3 + $0x68] sm:$0xff] %vm933, %v864
        %948 = vst.msk [vmem:[#allocation3 + $0x70] sm:$0xff] %vm933, %v866
        %949 = vst.msk [vmem:[#allocation3 + $0x78] sm:$0xff] %vm933, %v868
        %950 = vst.msk [vmem:[#allocation3 + $0x80] sm:$0xff] %vm933, %v870
        %951 = vst.msk [vmem:[#allocation3 + $0x88] sm:$0xff] %vm933, %v872
        %952 = vst.msk [vmem:[#allocation3 + $0x90] sm:$0xff] %vm933, %v874
        %953 = vst.msk [vmem:[#allocation3 + $0x98] sm:$0xff] %vm933, %v876
        %954 = vst.msk [vmem:[#allocation3 + $0xa0] sm:$0xff] %vm933, %v878
        %955 = vst.msk [vmem:[#allocation3 + $0xa8] sm:$0xff] %vm933, %v880
        %956 = vst.msk [vmem:[#allocation3 + $0xb0] sm:$0xff] %vm933, %v882
        %957 = vst.msk [vmem:[#allocation3 + $0xb8] sm:$0xff] %vm933, %v884
        %958 = vst.msk [vmem:[#allocation3 + $0xc0] sm:$0xff] %vm933, %v886
        %959 = vst.msk [vmem:[#allocation3 + $0xc8] sm:$0xff] %vm933, %v888
        %960 = vst.msk [vmem:[#allocation3 + $0xd0] sm:$0xff] %vm933, %v890
        %961 = vst.msk [vmem:[#allocation3 + $0xd8] sm:$0xff] %vm933, %v892
        %962 = vst.msk [vmem:[#allocation3 + $0xe0] sm:$0xff] %vm933, %v894
        %963 = vst.msk [vmem:[#allocation3 + $0xe8] sm:$0xff] %vm933, %v896
        %964 = vst.msk [vmem:[#allocation3 + $0xf0] sm:$0xff] %vm933, %v898
        %965 = vst.msk [vmem:[#allocation3 + $0xf8] sm:$0xff] %vm933, %v900
        %v966 = vld [vmem:[#allocation2 + $0x27] sm:$0xff]
        %v967 = vld [vmem:[#allocation2 + $0x2f] sm:$0xff]
        %v968 = vld [vmem:[#allocation2 + $0x37] sm:$0xff]
        %v969 = vld [vmem:[#allocation2 + $0x3f] sm:$0xff]
        %v970 = vld [vmem:[#allocation2 + $0x47] sm:$0xff]
        %v971 = vld [vmem:[#allocation2 + $0x4f] sm:$0xff]
        %v972 = vld [vmem:[#allocation2 + $0x57] sm:$0xff]
        %v973 = vld [vmem:[#allocation2 + $0x5f] sm:$0xff]
        %v974 = vld [vmem:[#allocation2 + $0x67] sm:$0xff]
        %v975 = vld [vmem:[#allocation2 + $0x6f] sm:$0xff]
        %v976 = vld [vmem:[#allocation2 + $0x77] sm:$0xff]
        %v977 = vld [vmem:[#allocation2 + $0x7f] sm:$0xff]
        %v978 = vld [vmem:[#allocation2 + $0x87] sm:$0xff]
        %v979 = vld [vmem:[#allocation2 + $0x8f] sm:$0xff]
        %v980 = vld [vmem:[#allocation2 + $0x97] sm:$0xff]
        %v981 = vld [vmem:[#allocation2 + $0x9f] sm:$0xff]
        %v982 = vld [vmem:[#allocation2 + $0xa7] sm:$0xff]
        %v983 = vld [vmem:[#allocation2 + $0xaf] sm:$0xff]
        %v984 = vld [vmem:[#allocation2 + $0xb7] sm:$0xff]
        %v985 = vld [vmem:[#allocation2 + $0xbf] sm:$0xff]
        %v986 = vld [vmem:[#allocation2 + $0xc7] sm:$0xff]
        %v987 = vld [vmem:[#allocation2 + $0xcf] sm:$0xff]
        %v988 = vld [vmem:[#allocation2 + $0xd7] sm:$0xff]
        %v989 = vld [vmem:[#allocation2 + $0xdf] sm:$0xff]
        %v990 = vld [vmem:[#allocation2 + $0xe7] sm:$0xff]
        %v991 = vld [vmem:[#allocation2 + $0xef] sm:$0xff]
        %v992 = vld [vmem:[#allocation2 + $0xf7] sm:$0xff]
        %v993 = vld [vmem:[#allocation2 + $0xff] sm:$0xff]
        %v994 = vld [vmem:[#allocation2 + $0x107] sm:$0xff]
        %v995 = vld [vmem:[#allocation2 + $0x10f] sm:$0xff]
        %v996 = vld [vmem:[#allocation2 + $0x117] sm:$0xff]
        %v997 = vld [vmem:[#allocation2 + $0x11f] sm:$0xff]
        %v998 = vld [vmem:[#allocation2 + $0x127] sm:$0xff]
        %v999 = vld [vmem:[#allocation2 + $0x12f] sm:$0xff]
        %v1000 = vld [vmem:[#allocation2 + $0x137] sm:$0xff]
        %v1001 = vld [vmem:[#allocation2 + $0x13f] sm:$0xff]
        %v1002 = vld [vmem:[#allocation2 + $0x147] sm:$0xff]
        %v1003 = vld [vmem:[#allocation2 + $0x14f] sm:$0xff]
        %v1004 = vld [vmem:[#allocation2 + $0x157] sm:$0xff]
        %v1005 = vld [vmem:[#allocation2 + $0x15f] sm:$0xff]
        %v1006 = vld [vmem:[#allocation2 + $0x167] sm:$0xff]
        %v1007 = vld [vmem:[#allocation2 + $0x16f] sm:$0xff]
        %v1008 = vld [vmem:[#allocation2 + $0x177] sm:$0xff]
        %v1009 = vld [vmem:[#allocation2 + $0x17f] sm:$0xff]
        %v1010 = vld [vmem:[#allocation2 + $0x187] sm:$0xff]
        %v1011 = vld [vmem:[#allocation2 + $0x18f] sm:$0xff]
        %v1012 = vld [vmem:[#allocation2 + $0x197] sm:$0xff]
        %v1013 = vld [vmem:[#allocation2 + $0x19f] sm:$0xff]
        %v1014 = vld [vmem:[#allocation2 + $0x1a7] sm:$0xff]
        %v1015 = vld [vmem:[#allocation2 + $0x1af] sm:$0xff]
        %v1016 = vld [vmem:[#allocation2 + $0x1b7] sm:$0xff]
        %v1017 = vld [vmem:[#allocation2 + $0x1bf] sm:$0xff]
        %v1018 = vld [vmem:[#allocation2 + $0x1c7] sm:$0xff]
        %v1019 = vld [vmem:[#allocation2 + $0x1cf] sm:$0xff]
        %v1020 = vld [vmem:[#allocation2 + $0x1d7] sm:$0xff]
        %v1021 = vld [vmem:[#allocation2 + $0x1df] sm:$0xff]
        %v1022 = vld [vmem:[#allocation2 + $0x1e7] sm:$0xff]
        %v1023 = vld [vmem:[#allocation2 + $0x1ef] sm:$0xff]
        %v1024 = vld [vmem:[#allocation2 + $0x1f7] sm:$0xff]
        %v1025 = vld [vmem:[#allocation2 + $0x1ff] sm:$0xff]
        %v1026 = vld [vmem:[#allocation2 + $0x207] sm:$0xff]
        %v1027 = vld [vmem:[#allocation2 + $0x20f] sm:$0xff]
        %v1028 = vld [vmem:[#allocation2 + $0x217] sm:$0xff]
        %v1029 = vld [vmem:[#allocation2 + $0x21f] sm:$0xff]
        %v1030 = vpack.c.bf16 %v967, %v966
        %v1031 = vpack.c.bf16 %v969, %v968
        %v1032 = vpack.c.bf16 %v971, %v970
        %v1033 = vpack.c.bf16 %v973, %v972
        %v1034 = vpack.c.bf16 %v975, %v974
        %v1035 = vpack.c.bf16 %v977, %v976
        %v1036 = vpack.c.bf16 %v979, %v978
        %v1037 = vpack.c.bf16 %v981, %v980
        %v1038 = vpack.c.bf16 %v983, %v982
        %v1039 = vpack.c.bf16 %v985, %v984
        %v1040 = vpack.c.bf16 %v987, %v986
        %v1041 = vpack.c.bf16 %v989, %v988
        %v1042 = vpack.c.bf16 %v991, %v990
        %v1043 = vpack.c.bf16 %v993, %v992
        %v1044 = vpack.c.bf16 %v995, %v994
        %v1045 = vpack.c.bf16 %v997, %v996
        %v1046 = vpack.c.bf16 %v999, %v998
        %v1047 = vpack.c.bf16 %v1001, %v1000
        %v1048 = vpack.c.bf16 %v1003, %v1002
        %v1049 = vpack.c.bf16 %v1005, %v1004
        %v1050 = vpack.c.bf16 %v1007, %v1006
        %v1051 = vpack.c.bf16 %v1009, %v1008
        %v1052 = vpack.c.bf16 %v1011, %v1010
        %v1053 = vpack.c.bf16 %v1013, %v1012
        %v1054 = vpack.c.bf16 %v1015, %v1014
        %v1055 = vpack.c.bf16 %v1017, %v1016
        %v1056 = vpack.c.bf16 %v1019, %v1018
        %v1057 = vpack.c.bf16 %v1021, %v1020
        %v1058 = vpack.c.bf16 %v1023, %v1022
        %v1059 = vpack.c.bf16 %v1025, %v1024
        %v1060 = vpack.c.bf16 %v1027, %v1026
        %v1061 = vpack.c.bf16 %v1029, %v1028
        %1094 = vrot.lane.b32.xlu0 %v1030, 9
        %v1095 = vpop.permute.xlu0 %1094
        %1096 = vrot.lane.b32.xlu0 %v1031, 9
        %v1097 = vpop.permute.xlu0 %1096
        %1098 = vrot.lane.b32.xlu0 %v1032, 9
        %v1099 = vpop.permute.xlu0 %1098
        %1100 = vrot.lane.b32.xlu0 %v1033, 9
        %v1101 = vpop.permute.xlu0 %1100
        %1102 = vrot.lane.b32.xlu0 %v1034, 9
        %v1103 = vpop.permute.xlu0 %1102
        %1104 = vrot.lane.b32.xlu0 %v1035, 9
        %v1105 = vpop.permute.xlu0 %1104
        %1106 = vrot.lane.b32.xlu0 %v1036, 9
        %v1107 = vpop.permute.xlu0 %1106
        %1108 = vrot.lane.b32.xlu0 %v1037, 9
        %v1109 = vpop.permute.xlu0 %1108
        %1110 = vrot.lane.b32.xlu0 %v1038, 9
        %v1111 = vpop.permute.xlu0 %1110
        %1112 = vrot.lane.b32.xlu0 %v1039, 9
        %v1113 = vpop.permute.xlu0 %1112
        %1114 = vrot.lane.b32.xlu0 %v1040, 9
        %v1115 = vpop.permute.xlu0 %1114
        %1116 = vrot.lane.b32.xlu0 %v1041, 9
        %v1117 = vpop.permute.xlu0 %1116
        %1118 = vrot.lane.b32.xlu0 %v1042, 9
        %v1119 = vpop.permute.xlu0 %1118
        %1120 = vrot.lane.b32.xlu0 %v1043, 9
        %v1121 = vpop.permute.xlu0 %1120
        %1122 = vrot.lane.b32.xlu0 %v1044, 9
        %v1123 = vpop.permute.xlu0 %1122
        %1124 = vrot.lane.b32.xlu0 %v1045, 9
        %v1125 = vpop.permute.xlu0 %1124
        %1126 = vrot.lane.b32.xlu0 %v1046, 9
        %v1127 = vpop.permute.xlu0 %1126
        %1128 = vrot.lane.b32.xlu0 %v1047, 9
        %v1129 = vpop.permute.xlu0 %1128
        %1130 = vrot.lane.b32.xlu0 %v1048, 9
        %v1131 = vpop.permute.xlu0 %1130
        %1132 = vrot.lane.b32.xlu0 %v1049, 9
        %v1133 = vpop.permute.xlu0 %1132
        %1134 = vrot.lane.b32.xlu0 %v1050, 9
        %v1135 = vpop.permute.xlu0 %1134
        %1136 = vrot.lane.b32.xlu0 %v1051, 9
        %v1137 = vpop.permute.xlu0 %1136
        %1138 = vrot.lane.b32.xlu0 %v1052, 9
        %v1139 = vpop.permute.xlu0 %1138
        %1140 = vrot.lane.b32.xlu0 %v1053, 9
        %v1141 = vpop.permute.xlu0 %1140
        %1142 = vrot.lane.b32.xlu0 %v1054, 9
        %v1143 = vpop.permute.xlu0 %1142
        %1144 = vrot.lane.b32.xlu0 %v1055, 9
        %v1145 = vpop.permute.xlu0 %1144
        %1146 = vrot.lane.b32.xlu0 %v1056, 9
        %v1147 = vpop.permute.xlu0 %1146
        %1148 = vrot.lane.b32.xlu0 %v1057, 9
        %v1149 = vpop.permute.xlu0 %1148
        %1150 = vrot.lane.b32.xlu0 %v1058, 9
        %v1151 = vpop.permute.xlu0 %1150
        %1152 = vrot.lane.b32.xlu0 %v1059, 9
        %v1153 = vpop.permute.xlu0 %1152
        %1154 = vrot.lane.b32.xlu0 %v1060, 9
        %v1155 = vpop.permute.xlu0 %1154
        %1156 = vrot.lane.b32.xlu0 %v1061, 9
        %v1157 = vpop.permute.xlu0 %1156
        %vm1190 = vcmask 97352
        %1191 = vst.msk [vmem:[#allocation3] sm:$0xff] %vm1190, %v1095
        %1192 = vst.msk [vmem:[#allocation3 + $0x8] sm:$0xff] %vm1190, %v1097
        %1193 = vst.msk [vmem:[#allocation3 + $0x10] sm:$0xff] %vm1190, %v1099
        %1194 = vst.msk [vmem:[#allocation3 + $0x18] sm:$0xff] %vm1190, %v1101
        %1195 = vst.msk [vmem:[#allocation3 + $0x20] sm:$0xff] %vm1190, %v1103
        %1196 = vst.msk [vmem:[#allocation3 + $0x28] sm:$0xff] %vm1190, %v1105
        %1197 = vst.msk [vmem:[#allocation3 + $0x30] sm:$0xff] %vm1190, %v1107
        %1198 = vst.msk [vmem:[#allocation3 + $0x38] sm:$0xff] %vm1190, %v1109
        %1199 = vst.msk [vmem:[#allocation3 + $0x40] sm:$0xff] %vm1190, %v1111
        %1200 = vst.msk [vmem:[#allocation3 + $0x48] sm:$0xff] %vm1190, %v1113
        %1201 = vst.msk [vmem:[#allocation3 + $0x50] sm:$0xff] %vm1190, %v1115
        %1202 = vst.msk [vmem:[#allocation3 + $0x58] sm:$0xff] %vm1190, %v1117
        %1203 = vst.msk [vmem:[#allocation3 + $0x60] sm:$0xff] %vm1190, %v1119
        %1204 = vst.msk [vmem:[#allocation3 + $0x68] sm:$0xff] %vm1190, %v1121
        %1205 = vst.msk [vmem:[#allocation3 + $0x70] sm:$0xff] %vm1190, %v1123
        %1206 = vst.msk [vmem:[#allocation3 + $0x78] sm:$0xff] %vm1190, %v1125
        %1207 = vst.msk [vmem:[#allocation3 + $0x80] sm:$0xff] %vm1190, %v1127
        %1208 = vst.msk [vmem:[#allocation3 + $0x88] sm:$0xff] %vm1190, %v1129
        %1209 = vst.msk [vmem:[#allocation3 + $0x90] sm:$0xff] %vm1190, %v1131
        %1210 = vst.msk [vmem:[#allocation3 + $0x98] sm:$0xff] %vm1190, %v1133
        %1211 = vst.msk [vmem:[#allocation3 + $0xa0] sm:$0xff] %vm1190, %v1135
        %1212 = vst.msk [vmem:[#allocation3 + $0xa8] sm:$0xff] %vm1190, %v1137
        %1213 = vst.msk [vmem:[#allocation3 + $0xb0] sm:$0xff] %vm1190, %v1139
        %1214 = vst.msk [vmem:[#allocation3 + $0xb8] sm:$0xff] %vm1190, %v1141
        %1215 = vst.msk [vmem:[#allocation3 + $0xc0] sm:$0xff] %vm1190, %v1143
        %1216 = vst.msk [vmem:[#allocation3 + $0xc8] sm:$0xff] %vm1190, %v1145
        %1217 = vst.msk [vmem:[#allocation3 + $0xd0] sm:$0xff] %vm1190, %v1147
        %1218 = vst.msk [vmem:[#allocation3 + $0xd8] sm:$0xff] %vm1190, %v1149
        %1219 = vst.msk [vmem:[#allocation3 + $0xe0] sm:$0xff] %vm1190, %v1151
        %1220 = vst.msk [vmem:[#allocation3 + $0xe8] sm:$0xff] %vm1190, %v1153
        %1221 = vst.msk [vmem:[#allocation3 + $0xf0] sm:$0xff] %vm1190, %v1155
        %1222 = vst.msk [vmem:[#allocation3 + $0xf8] sm:$0xff] %vm1190, %v1157
        %v1223 = vld [vmem:[#allocation2 + $0x28] sm:$0xff]
        %v1224 = vld [vmem:[#allocation2 + $0x30] sm:$0xff]
        %v1225 = vld [vmem:[#allocation2 + $0x38] sm:$0xff]
        %v1226 = vld [vmem:[#allocation2 + $0x40] sm:$0xff]
        %v1227 = vld [vmem:[#allocation2 + $0x48] sm:$0xff]
        %v1228 = vld [vmem:[#allocation2 + $0x50] sm:$0xff]
        %v1229 = vld [vmem:[#allocation2 + $0x58] sm:$0xff]
        %v1230 = vld [vmem:[#allocation2 + $0x60] sm:$0xff]
        %v1231 = vld [vmem:[#allocation2 + $0x68] sm:$0xff]
        %v1232 = vld [vmem:[#allocation2 + $0x70] sm:$0xff]
        %v1233 = vld [vmem:[#allocation2 + $0x78] sm:$0xff]
        %v1234 = vld [vmem:[#allocation2 + $0x80] sm:$0xff]
        %v1235 = vld [vmem:[#allocation2 + $0x88] sm:$0xff]
        %v1236 = vld [vmem:[#allocation2 + $0x90] sm:$0xff]
        %v1237 = vld [vmem:[#allocation2 + $0x98] sm:$0xff]
        %v1238 = vld [vmem:[#allocation2 + $0xa0] sm:$0xff]
        %v1239 = vld [vmem:[#allocation2 + $0xa8] sm:$0xff]
        %v1240 = vld [vmem:[#allocation2 + $0xb0] sm:$0xff]
        %v1241 = vld [vmem:[#allocation2 + $0xb8] sm:$0xff]
        %v1242 = vld [vmem:[#allocation2 + $0xc0] sm:$0xff]
        %v1243 = vld [vmem:[#allocation2 + $0xc8] sm:$0xff]
        %v1244 = vld [vmem:[#allocation2 + $0xd0] sm:$0xff]
        %v1245 = vld [vmem:[#allocation2 + $0xd8] sm:$0xff]
        %v1246 = vld [vmem:[#allocation2 + $0xe0] sm:$0xff]
        %v1247 = vld [vmem:[#allocation2 + $0xe8] sm:$0xff]
        %v1248 = vld [vmem:[#allocation2 + $0xf0] sm:$0xff]
        %v1249 = vld [vmem:[#allocation2 + $0xf8] sm:$0xff]
        %v1250 = vld [vmem:[#allocation2 + $0x100] sm:$0xff]
        %v1251 = vld [vmem:[#allocation2 + $0x108] sm:$0xff]
        %v1252 = vld [vmem:[#allocation2 + $0x110] sm:$0xff]
        %v1253 = vld [vmem:[#allocation2 + $0x118] sm:$0xff]
        %v1254 = vld [vmem:[#allocation2 + $0x120] sm:$0xff]
        %v1255 = vld [vmem:[#allocation2 + $0x128] sm:$0xff]
        %v1256 = vld [vmem:[#allocation2 + $0x130] sm:$0xff]
        %v1257 = vld [vmem:[#allocation2 + $0x138] sm:$0xff]
        %v1258 = vld [vmem:[#allocation2 + $0x140] sm:$0xff]
        %v1259 = vld [vmem:[#allocation2 + $0x148] sm:$0xff]
        %v1260 = vld [vmem:[#allocation2 + $0x150] sm:$0xff]
        %v1261 = vld [vmem:[#allocation2 + $0x158] sm:$0xff]
        %v1262 = vld [vmem:[#allocation2 + $0x160] sm:$0xff]
        %v1263 = vld [vmem:[#allocation2 + $0x168] sm:$0xff]
        %v1264 = vld [vmem:[#allocation2 + $0x170] sm:$0xff]
        %v1265 = vld [vmem:[#allocation2 + $0x178] sm:$0xff]
        %v1266 = vld [vmem:[#allocation2 + $0x180] sm:$0xff]
        %v1267 = vld [vmem:[#allocation2 + $0x188] sm:$0xff]
        %v1268 = vld [vmem:[#allocation2 + $0x190] sm:$0xff]
        %v1269 = vld [vmem:[#allocation2 + $0x198] sm:$0xff]
        %v1270 = vld [vmem:[#allocation2 + $0x1a0] sm:$0xff]
        %v1271 = vld [vmem:[#allocation2 + $0x1a8] sm:$0xff]
        %v1272 = vld [vmem:[#allocation2 + $0x1b0] sm:$0xff]
        %v1273 = vld [vmem:[#allocation2 + $0x1b8] sm:$0xff]
        %v1274 = vld [vmem:[#allocation2 + $0x1c0] sm:$0xff]
        %v1275 = vld [vmem:[#allocation2 + $0x1c8] sm:$0xff]
        %v1276 = vld [vmem:[#allocation2 + $0x1d0] sm:$0xff]
        %v1277 = vld [vmem:[#allocation2 + $0x1d8] sm:$0xff]
        %v1278 = vld [vmem:[#allocation2 + $0x1e0] sm:$0xff]
        %v1279 = vld [vmem:[#allocation2 + $0x1e8] sm:$0xff]
        %v1280 = vld [vmem:[#allocation2 + $0x1f0] sm:$0xff]
        %v1281 = vld [vmem:[#allocation2 + $0x1f8] sm:$0xff]
        %v1282 = vld [vmem:[#allocation2 + $0x200] sm:$0xff]
        %v1283 = vld [vmem:[#allocation2 + $0x208] sm:$0xff]
        %v1284 = vld [vmem:[#allocation2 + $0x210] sm:$0xff]
        %v1285 = vld [vmem:[#allocation2 + $0x218] sm:$0xff]
        %v1286 = vld [vmem:[#allocation2 + $0x220] sm:$0xff]
        %v1287 = vpack.c.bf16 %v1224, %v1223
        %v1288 = vpack.c.bf16 %v1226, %v1225
        %v1289 = vpack.c.bf16 %v1228, %v1227
        %v1290 = vpack.c.bf16 %v1230, %v1229
        %v1291 = vpack.c.bf16 %v1232, %v1231
        %v1292 = vpack.c.bf16 %v1234, %v1233
        %v1293 = vpack.c.bf16 %v1236, %v1235
        %v1294 = vpack.c.bf16 %v1238, %v1237
        %v1295 = vpack.c.bf16 %v1240, %v1239
        %v1296 = vpack.c.bf16 %v1242, %v1241
        %v1297 = vpack.c.bf16 %v1244, %v1243
        %v1298 = vpack.c.bf16 %v1246, %v1245
        %v1299 = vpack.c.bf16 %v1248, %v1247
        %v1300 = vpack.c.bf16 %v1250, %v1249
        %v1301 = vpack.c.bf16 %v1252, %v1251
        %v1302 = vpack.c.bf16 %v1254, %v1253
        %v1303 = vpack.c.bf16 %v1256, %v1255
        %v1304 = vpack.c.bf16 %v1258, %v1257
        %v1305 = vpack.c.bf16 %v1260, %v1259
        %v1306 = vpack.c.bf16 %v1262, %v1261
        %v1307 = vpack.c.bf16 %v1264, %v1263
        %v1308 = vpack.c.bf16 %v1266, %v1265
        %v1309 = vpack.c.bf16 %v1268, %v1267
        %v1310 = vpack.c.bf16 %v1270, %v1269
        %v1311 = vpack.c.bf16 %v1272, %v1271
        %v1312 = vpack.c.bf16 %v1274, %v1273
        %v1313 = vpack.c.bf16 %v1276, %v1275
        %v1314 = vpack.c.bf16 %v1278, %v1277
        %v1315 = vpack.c.bf16 %v1280, %v1279
        %v1316 = vpack.c.bf16 %v1282, %v1281
        %v1317 = vpack.c.bf16 %v1284, %v1283
        %v1318 = vpack.c.bf16 %v1286, %v1285
        %1351 = vrot.lane.b32.xlu0 %v1287, 12
        %v1352 = vpop.permute.xlu0 %1351
        %1353 = vrot.lane.b32.xlu0 %v1288, 12
        %v1354 = vpop.permute.xlu0 %1353
        %1355 = vrot.lane.b32.xlu0 %v1289, 12
        %v1356 = vpop.permute.xlu0 %1355
        %1357 = vrot.lane.b32.xlu0 %v1290, 12
        %v1358 = vpop.permute.xlu0 %1357
        %1359 = vrot.lane.b32.xlu0 %v1291, 12
        %v1360 = vpop.permute.xlu0 %1359
        %1361 = vrot.lane.b32.xlu0 %v1292, 12
        %v1362 = vpop.permute.xlu0 %1361
        %1363 = vrot.lane.b32.xlu0 %v1293, 12
        %v1364 = vpop.permute.xlu0 %1363
        %1365 = vrot.lane.b32.xlu0 %v1294, 12
        %v1366 = vpop.permute.xlu0 %1365
        %1367 = vrot.lane.b32.xlu0 %v1295, 12
        %v1368 = vpop.permute.xlu0 %1367
        %1369 = vrot.lane.b32.xlu0 %v1296, 12
        %v1370 = vpop.permute.xlu0 %1369
        %1371 = vrot.lane.b32.xlu0 %v1297, 12
        %v1372 = vpop.permute.xlu0 %1371
        %1373 = vrot.lane.b32.xlu0 %v1298, 12
        %v1374 = vpop.permute.xlu0 %1373
        %1375 = vrot.lane.b32.xlu0 %v1299, 12
        %v1376 = vpop.permute.xlu0 %1375
        %1377 = vrot.lane.b32.xlu0 %v1300, 12
        %v1378 = vpop.permute.xlu0 %1377
        %1379 = vrot.lane.b32.xlu0 %v1301, 12
        %v1380 = vpop.permute.xlu0 %1379
        %1381 = vrot.lane.b32.xlu0 %v1302, 12
        %v1382 = vpop.permute.xlu0 %1381
        %1383 = vrot.lane.b32.xlu0 %v1303, 12
        %v1384 = vpop.permute.xlu0 %1383
        %1385 = vrot.lane.b32.xlu0 %v1304, 12
        %v1386 = vpop.permute.xlu0 %1385
        %1387 = vrot.lane.b32.xlu0 %v1305, 12
        %v1388 = vpop.permute.xlu0 %1387
        %1389 = vrot.lane.b32.xlu0 %v1306, 12
        %v1390 = vpop.permute.xlu0 %1389
        %1391 = vrot.lane.b32.xlu0 %v1307, 12
        %v1392 = vpop.permute.xlu0 %1391
        %1393 = vrot.lane.b32.xlu0 %v1308, 12
        %v1394 = vpop.permute.xlu0 %1393
        %1395 = vrot.lane.b32.xlu0 %v1309, 12
        %v1396 = vpop.permute.xlu0 %1395
        %1397 = vrot.lane.b32.xlu0 %v1310, 12
        %v1398 = vpop.permute.xlu0 %1397
        %1399 = vrot.lane.b32.xlu0 %v1311, 12
        %v1400 = vpop.permute.xlu0 %1399
        %1401 = vrot.lane.b32.xlu0 %v1312, 12
        %v1402 = vpop.permute.xlu0 %1401
        %1403 = vrot.lane.b32.xlu0 %v1313, 12
        %v1404 = vpop.permute.xlu0 %1403
        %1405 = vrot.lane.b32.xlu0 %v1314, 12
        %v1406 = vpop.permute.xlu0 %1405
        %1407 = vrot.lane.b32.xlu0 %v1315, 12
        %v1408 = vpop.permute.xlu0 %1407
        %1409 = vrot.lane.b32.xlu0 %v1316, 12
        %v1410 = vpop.permute.xlu0 %1409
        %1411 = vrot.lane.b32.xlu0 %v1317, 12
        %v1412 = vpop.permute.xlu0 %1411
        %1413 = vrot.lane.b32.xlu0 %v1318, 12
        %v1414 = vpop.permute.xlu0 %1413
        %vm1447 = vcmask 121952
        %1448 = vst.msk [vmem:[#allocation3] sm:$0xff] %vm1447, %v1352
        %1449 = vst.msk [vmem:[#allocation3 + $0x8] sm:$0xff] %vm1447, %v1354
        %1450 = vst.msk [vmem:[#allocation3 + $0x10] sm:$0xff] %vm1447, %v1356
        %1451 = vst.msk [vmem:[#allocation3 + $0x18] sm:$0xff] %vm1447, %v1358
        %1452 = vst.msk [vmem:[#allocation3 + $0x20] sm:$0xff] %vm1447, %v1360
        %1453 = vst.msk [vmem:[#allocation3 + $0x28] sm:$0xff] %vm1447, %v1362
        %1454 = vst.msk [vmem:[#allocation3 + $0x30] sm:$0xff] %vm1447, %v1364
        %1455 = vst.msk [vmem:[#allocation3 + $0x38] sm:$0xff] %vm1447, %v1366
        %1456 = vst.msk [vmem:[#allocation3 + $0x40] sm:$0xff] %vm1447, %v1368
        %1457 = vst.msk [vmem:[#allocation3 + $0x48] sm:$0xff] %vm1447, %v1370
        %1458 = vst.msk [vmem:[#allocation3 + $0x50] sm:$0xff] %vm1447, %v1372
        %1459 = vst.msk [vmem:[#allocation3 + $0x58] sm:$0xff] %vm1447, %v1374
        %1460 = vst.msk [vmem:[#allocation3 + $0x60] sm:$0xff] %vm1447, %v1376
        %1461 = vst.msk [vmem:[#allocation3 + $0x68] sm:$0xff] %vm1447, %v1378
        %1462 = vst.msk [vmem:[#allocation3 + $0x70] sm:$0xff] %vm1447, %v1380
        %1463 = vst.msk [vmem:[#allocation3 + $0x78] sm:$0xff] %vm1447, %v1382
        %1464 = vst.msk [vmem:[#allocation3 + $0x80] sm:$0xff] %vm1447, %v1384
        %1465 = vst.msk [vmem:[#allocation3 + $0x88] sm:$0xff] %vm1447, %v1386
        %1466 = vst.msk [vmem:[#allocation3 + $0x90] sm:$0xff] %vm1447, %v1388
        %1467 = vst.msk [vmem:[#allocation3 + $0x98] sm:$0xff] %vm1447, %v1390
        %1468 = vst.msk [vmem:[#allocation3 + $0xa0] sm:$0xff] %vm1447, %v1392
        %1469 = vst.msk [vmem:[#allocation3 + $0xa8] sm:$0xff] %vm1447, %v1394
        %1470 = vst.msk [vmem:[#allocation3 + $0xb0] sm:$0xff] %vm1447, %v1396
        %1471 = vst.msk [vmem:[#allocation3 + $0xb8] sm:$0xff] %vm1447, %v1398
        %1472 = vst.msk [vmem:[#allocation3 + $0xc0] sm:$0xff] %vm1447, %v1400
        %1473 = vst.msk [vmem:[#allocation3 + $0xc8] sm:$0xff] %vm1447, %v1402
        %1474 = vst.msk [vmem:[#allocation3 + $0xd0] sm:$0xff] %vm1447, %v1404
        %1475 = vst.msk [vmem:[#allocation3 + $0xd8] sm:$0xff] %vm1447, %v1406
        %1476 = vst.msk [vmem:[#allocation3 + $0xe0] sm:$0xff] %vm1447, %v1408
        %1477 = vst.msk [vmem:[#allocation3 + $0xe8] sm:$0xff] %vm1447, %v1410
        %1478 = vst.msk [vmem:[#allocation3 + $0xf0] sm:$0xff] %vm1447, %v1412
        %1479 = vst.msk [vmem:[#allocation3 + $0xf8] sm:$0xff] %vm1447, %v1414
        %v1480 = vld [vmem:[#allocation2 + $0x29] sm:$0xff]
        %v1481 = vld [vmem:[#allocation2 + $0x31] sm:$0xff]
        %v1482 = vld [vmem:[#allocation2 + $0x39] sm:$0xff]
        %v1483 = vld [vmem:[#allocation2 + $0x41] sm:$0xff]
        %v1484 = vld [vmem:[#allocation2 + $0x49] sm:$0xff]
        %v1485 = vld [vmem:[#allocation2 + $0x51] sm:$0xff]
        %v1486 = vld [vmem:[#allocation2 + $0x59] sm:$0xff]
        %v1487 = vld [vmem:[#allocation2 + $0x61] sm:$0xff]
        %v1488 = vld [vmem:[#allocation2 + $0x69] sm:$0xff]
        %v1489 = vld [vmem:[#allocation2 + $0x71] sm:$0xff]
        %v1490 = vld [vmem:[#allocation2 + $0x79] sm:$0xff]
        %v1491 = vld [vmem:[#allocation2 + $0x81] sm:$0xff]
        %v1492 = vld [vmem:[#allocation2 + $0x89] sm:$0xff]
        %v1493 = vld [vmem:[#allocation2 + $0x91] sm:$0xff]
        %v1494 = vld [vmem:[#allocation2 + $0x99] sm:$0xff]
        %v1495 = vld [vmem:[#allocation2 + $0xa1] sm:$0xff]
        %v1496 = vld [vmem:[#allocation2 + $0xa9] sm:$0xff]
        %v1497 = vld [vmem:[#allocation2 + $0xb1] sm:$0xff]
        %v1498 = vld [vmem:[#allocation2 + $0xb9] sm:$0xff]
        %v1499 = vld [vmem:[#allocation2 + $0xc1] sm:$0xff]
        %v1500 = vld [vmem:[#allocation2 + $0xc9] sm:$0xff]
        %v1501 = vld [vmem:[#allocation2 + $0xd1] sm:$0xff]
        %v1502 = vld [vmem:[#allocation2 + $0xd9] sm:$0xff]
        %v1503 = vld [vmem:[#allocation2 + $0xe1] sm:$0xff]
        %v1504 = vld [vmem:[#allocation2 + $0xe9] sm:$0xff]
        %v1505 = vld [vmem:[#allocation2 + $0xf1] sm:$0xff]
        %v1506 = vld [vmem:[#allocation2 + $0xf9] sm:$0xff]
        %v1507 = vld [vmem:[#allocation2 + $0x101] sm:$0xff]
        %v1508 = vld [vmem:[#allocation2 + $0x109] sm:$0xff]
        %v1509 = vld [vmem:[#allocation2 + $0x111] sm:$0xff]
        %v1510 = vld [vmem:[#allocation2 + $0x119] sm:$0xff]
        %v1511 = vld [vmem:[#allocation2 + $0x121] sm:$0xff]
        %v1512 = vld [vmem:[#allocation2 + $0x129] sm:$0xff]
        %v1513 = vld [vmem:[#allocation2 + $0x131] sm:$0xff]
        %v1514 = vld [vmem:[#allocation2 + $0x139] sm:$0xff]
        %v1515 = vld [vmem:[#allocation2 + $0x141] sm:$0xff]
        %v1516 = vld [vmem:[#allocation2 + $0x149] sm:$0xff]
        %v1517 = vld [vmem:[#allocation2 + $0x151] sm:$0xff]
        %v1518 = vld [vmem:[#allocation2 + $0x159] sm:$0xff]
        %v1519 = vld [vmem:[#allocation2 + $0x161] sm:$0xff]
        %v1520 = vld [vmem:[#allocation2 + $0x169] sm:$0xff]
        %v1521 = vld [vmem:[#allocation2 + $0x171] sm:$0xff]
        %v1522 = vld [vmem:[#allocation2 + $0x179] sm:$0xff]
        %v1523 = vld [vmem:[#allocation2 + $0x181] sm:$0xff]
        %v1524 = vld [vmem:[#allocation2 + $0x189] sm:$0xff]
        %v1525 = vld [vmem:[#allocation2 + $0x191] sm:$0xff]
        %v1526 = vld [vmem:[#allocation2 + $0x199] sm:$0xff]
        %v1527 = vld [vmem:[#allocation2 + $0x1a1] sm:$0xff]
        %v1528 = vld [vmem:[#allocation2 + $0x1a9] sm:$0xff]
        %v1529 = vld [vmem:[#allocation2 + $0x1b1] sm:$0xff]
        %v1530 = vld [vmem:[#allocation2 + $0x1b9] sm:$0xff]
        %v1531 = vld [vmem:[#allocation2 + $0x1c1] sm:$0xff]
        %v1532 = vld [vmem:[#allocation2 + $0x1c9] sm:$0xff]
        %v1533 = vld [vmem:[#allocation2 + $0x1d1] sm:$0xff]
        %v1534 = vld [vmem:[#allocation2 + $0x1d9] sm:$0xff]
        %v1535 = vld [vmem:[#allocation2 + $0x1e1] sm:$0xff]
        %v1536 = vld [vmem:[#allocation2 + $0x1e9] sm:$0xff]
        %v1537 = vld [vmem:[#allocation2 + $0x1f1] sm:$0xff]
        %v1538 = vld [vmem:[#allocation2 + $0x1f9] sm:$0xff]
        %v1539 = vld [vmem:[#allocation2 + $0x201] sm:$0xff]
        %v1540 = vld [vmem:[#allocation2 + $0x209] sm:$0xff]
        %v1541 = vld [vmem:[#allocation2 + $0x211] sm:$0xff]
        %v1542 = vld [vmem:[#allocation2 + $0x219] sm:$0xff]
        %v1543 = vld [vmem:[#allocation2 + $0x221] sm:$0xff]
        %v1544 = vpack.c.bf16 %v1481, %v1480
        %v1545 = vpack.c.bf16 %v1483, %v1482
        %v1546 = vpack.c.bf16 %v1485, %v1484
        %v1547 = vpack.c.bf16 %v1487, %v1486
        %v1548 = vpack.c.bf16 %v1489, %v1488
        %v1549 = vpack.c.bf16 %v1491, %v1490
        %v1550 = vpack.c.bf16 %v1493, %v1492
        %v1551 = vpack.c.bf16 %v1495, %v1494
        %v1552 = vpack.c.bf16 %v1497, %v1496
        %v1553 = vpack.c.bf16 %v1499, %v1498
        %v1554 = vpack.c.bf16 %v1501, %v1500
        %v1555 = vpack.c.bf16 %v1503, %v1502
        %v1556 = vpack.c.bf16 %v1505, %v1504
        %v1557 = vpack.c.bf16 %v1507, %v1506
        %v1558 = vpack.c.bf16 %v1509, %v1508
        %v1559 = vpack.c.bf16 %v1511, %v1510
        %v1560 = vpack.c.bf16 %v1513, %v1512
        %v1561 = vpack.c.bf16 %v1515, %v1514
        %v1562 = vpack.c.bf16 %v1517, %v1516
        %v1563 = vpack.c.bf16 %v1519, %v1518
        %v1564 = vpack.c.bf16 %v1521, %v1520
        %v1565 = vpack.c.bf16 %v1523, %v1522
        %v1566 = vpack.c.bf16 %v1525, %v1524
        %v1567 = vpack.c.bf16 %v1527, %v1526
        %v1568 = vpack.c.bf16 %v1529, %v1528
        %v1569 = vpack.c.bf16 %v1531, %v1530
        %v1570 = vpack.c.bf16 %v1533, %v1532
        %v1571 = vpack.c.bf16 %v1535, %v1534
        %v1572 = vpack.c.bf16 %v1537, %v1536
        %v1573 = vpack.c.bf16 %v1539, %v1538
        %v1574 = vpack.c.bf16 %v1541, %v1540
        %v1575 = vpack.c.bf16 %v1543, %v1542
        %1608 = vrot.lane.b32.xlu0 %v1544, 15
        %v1609 = vpop.permute.xlu0 %1608
        %1610 = vrot.lane.b32.xlu0 %v1545, 15
        %v1611 = vpop.permute.xlu0 %1610
        %1612 = vrot.lane.b32.xlu0 %v1546, 15
        %v1613 = vpop.permute.xlu0 %1612
        %1614 = vrot.lane.b32.xlu0 %v1547, 15
        %v1615 = vpop.permute.xlu0 %1614
        %1616 = vrot.lane.b32.xlu0 %v1548, 15
        %v1617 = vpop.permute.xlu0 %1616
        %1618 = vrot.lane.b32.xlu0 %v1549, 15
        %v1619 = vpop.permute.xlu0 %1618
        %1620 = vrot.lane.b32.xlu0 %v1550, 15
        %v1621 = vpop.permute.xlu0 %1620
        %1622 = vrot.lane.b32.xlu0 %v1551, 15
        %v1623 = vpop.permute.xlu0 %1622
        %1624 = vrot.lane.b32.xlu0 %v1552, 15
        %v1625 = vpop.permute.xlu0 %1624
        %1626 = vrot.lane.b32.xlu0 %v1553, 15
        %v1627 = vpop.permute.xlu0 %1626
        %1628 = vrot.lane.b32.xlu0 %v1554, 15
        %v1629 = vpop.permute.xlu0 %1628
        %1630 = vrot.lane.b32.xlu0 %v1555, 15
        %v1631 = vpop.permute.xlu0 %1630
        %1632 = vrot.lane.b32.xlu0 %v1556, 15
        %v1633 = vpop.permute.xlu0 %1632
        %1634 = vrot.lane.b32.xlu0 %v1557, 15
        %v1635 = vpop.permute.xlu0 %1634
        %1636 = vrot.lane.b32.xlu0 %v1558, 15
        %v1637 = vpop.permute.xlu0 %1636
        %1638 = vrot.lane.b32.xlu0 %v1559, 15
        %v1639 = vpop.permute.xlu0 %1638
        %1640 = vrot.lane.b32.xlu0 %v1560, 15
        %v1641 = vpop.permute.xlu0 %1640
        %1642 = vrot.lane.b32.xlu0 %v1561, 15
        %v1643 = vpop.permute.xlu0 %1642
        %1644 = vrot.lane.b32.xlu0 %v1562, 15
        %v1645 = vpop.permute.xlu0 %1644
        %1646 = vrot.lane.b32.xlu0 %v1563, 15
        %v1647 = vpop.permute.xlu0 %1646
        %1648 = vrot.lane.b32.xlu0 %v1564, 15
        %v1649 = vpop.permute.xlu0 %1648
        %1650 = vrot.lane.b32.xlu0 %v1565, 15
        %v1651 = vpop.permute.xlu0 %1650
        %1652 = vrot.lane.b32.xlu0 %v1566, 15
        %v1653 = vpop.permute.xlu0 %1652
        %1654 = vrot.lane.b32.xlu0 %v1567, 15
        %v1655 = vpop.permute.xlu0 %1654
        %1656 = vrot.lane.b32.xlu0 %v1568, 15
        %v1657 = vpop.permute.xlu0 %1656
        %1658 = vrot.lane.b32.xlu0 %v1569, 15
        %v1659 = vpop.permute.xlu0 %1658
        %1660 = vrot.lane.b32.xlu0 %v1570, 15
        %v1661 = vpop.permute.xlu0 %1660
        %1662 = vrot.lane.b32.xlu0 %v1571, 15
        %v1663 = vpop.permute.xlu0 %1662
        %1664 = vrot.lane.b32.xlu0 %v1572, 15
        %v1665 = vpop.permute.xlu0 %1664
        %1666 = vrot.lane.b32.xlu0 %v1573, 15
        %v1667 = vpop.permute.xlu0 %1666
        %1668 = vrot.lane.b32.xlu0 %v1574, 15
        %v1669 = vpop.permute.xlu0 %1668
        %1670 = vrot.lane.b32.xlu0 %v1575, 15
        %v1671 = vpop.permute.xlu0 %1670
        %vm1704 = vcmask 146552
        %1705 = vst.msk [vmem:[#allocation3] sm:$0xff] %vm1704, %v1609
        %1706 = vst.msk [vmem:[#allocation3 + $0x8] sm:$0xff] %vm1704, %v1611
        %1707 = vst.msk [vmem:[#allocation3 + $0x10] sm:$0xff] %vm1704, %v1613
        %1708 = vst.msk [vmem:[#allocation3 + $0x18] sm:$0xff] %vm1704, %v1615
        %1709 = vst.msk [vmem:[#allocation3 + $0x20] sm:$0xff] %vm1704, %v1617
        %1710 = vst.msk [vmem:[#allocation3 + $0x28] sm:$0xff] %vm1704, %v1619
        %1711 = vst.msk [vmem:[#allocation3 + $0x30] sm:$0xff] %vm1704, %v1621
        %1712 = vst.msk [vmem:[#allocation3 + $0x38] sm:$0xff] %vm1704, %v1623
        %1713 = vst.msk [vmem:[#allocation3 + $0x40] sm:$0xff] %vm1704, %v1625
        %1714 = vst.msk [vmem:[#allocation3 + $0x48] sm:$0xff] %vm1704, %v1627
        %1715 = vst.msk [vmem:[#allocation3 + $0x50] sm:$0xff] %vm1704, %v1629
        %1716 = vst.msk [vmem:[#allocation3 + $0x58] sm:$0xff] %vm1704, %v1631
        %1717 = vst.msk [vmem:[#allocation3 + $0x60] sm:$0xff] %vm1704, %v1633
        %1718 = vst.msk [vmem:[#allocation3 + $0x68] sm:$0xff] %vm1704, %v1635
        %1719 = vst.msk [vmem:[#allocation3 + $0x70] sm:$0xff] %vm1704, %v1637
        %1720 = vst.msk [vmem:[#allocation3 + $0x78] sm:$0xff] %vm1704, %v1639
        %1721 = vst.msk [vmem:[#allocation3 + $0x80] sm:$0xff] %vm1704, %v1641
        %1722 = vst.msk [vmem:[#allocation3 + $0x88] sm:$0xff] %vm1704, %v1643
        %1723 = vst.msk [vmem:[#allocation3 + $0x90] sm:$0xff] %vm1704, %v1645
        %1724 = vst.msk [vmem:[#allocation3 + $0x98] sm:$0xff] %vm1704, %v1647
        %1725 = vst.msk [vmem:[#allocation3 + $0xa0] sm:$0xff] %vm1704, %v1649
        %1726 = vst.msk [vmem:[#allocation3 + $0xa8] sm:$0xff] %vm1704, %v1651
        %1727 = vst.msk [vmem:[#allocation3 + $0xb0] sm:$0xff] %vm1704, %v1653
        %1728 = vst.msk [vmem:[#allocation3 + $0xb8] sm:$0xff] %vm1704, %v1655
        %1729 = vst.msk [vmem:[#allocation3 + $0xc0] sm:$0xff] %vm1704, %v1657
        %1730 = vst.msk [vmem:[#allocation3 + $0xc8] sm:$0xff] %vm1704, %v1659
        %1731 = vst.msk [vmem:[#allocation3 + $0xd0] sm:$0xff] %vm1704, %v1661
        %1732 = vst.msk [vmem:[#allocation3 + $0xd8] sm:$0xff] %vm1704, %v1663
        %1733 = vst.msk [vmem:[#allocation3 + $0xe0] sm:$0xff] %vm1704, %v1665
        %1734 = vst.msk [vmem:[#allocation3 + $0xe8] sm:$0xff] %vm1704, %v1667
        %1735 = vst.msk [vmem:[#allocation3 + $0xf0] sm:$0xff] %vm1704, %v1669
        %1736 = vst.msk [vmem:[#allocation3 + $0xf8] sm:$0xff] %vm1704, %v1671
        %v1737 = vld [vmem:[#allocation2 + $0x47] sm:$0xff]
        %v1738 = vld [vmem:[#allocation2 + $0x4f] sm:$0xff]
        %v1739 = vld [vmem:[#allocation2 + $0x57] sm:$0xff]
        %v1740 = vld [vmem:[#allocation2 + $0x5f] sm:$0xff]
        %v1741 = vld [vmem:[#allocation2 + $0x67] sm:$0xff]
        %v1742 = vld [vmem:[#allocation2 + $0x6f] sm:$0xff]
        %v1743 = vld [vmem:[#allocation2 + $0x77] sm:$0xff]
        %v1744 = vld [vmem:[#allocation2 + $0x7f] sm:$0xff]
        %v1745 = vld [vmem:[#allocation2 + $0x87] sm:$0xff]
        %v1746 = vld [vmem:[#allocation2 + $0x8f] sm:$0xff]
        %v1747 = vld [vmem:[#allocation2 + $0x97] sm:$0xff]
        %v1748 = vld [vmem:[#allocation2 + $0x9f] sm:$0xff]
        %v1749 = vld [vmem:[#allocation2 + $0xa7] sm:$0xff]
        %v1750 = vld [vmem:[#allocation2 + $0xaf] sm:$0xff]
        %v1751 = vld [vmem:[#allocation2 + $0xb7] sm:$0xff]
        %v1752 = vld [vmem:[#allocation2 + $0xbf] sm:$0xff]
        %v1753 = vld [vmem:[#allocation2 + $0xc7] sm:$0xff]
        %v1754 = vld [vmem:[#allocation2 + $0xcf] sm:$0xff]
        %v1755 = vld [vmem:[#allocation2 + $0xd7] sm:$0xff]
        %v1756 = vld [vmem:[#allocation2 + $0xdf] sm:$0xff]
        %v1757 = vld [vmem:[#allocation2 + $0xe7] sm:$0xff]
        %v1758 = vld [vmem:[#allocation2 + $0xef] sm:$0xff]
        %v1759 = vld [vmem:[#allocation2 + $0xf7] sm:$0xff]
        %v1760 = vld [vmem:[#allocation2 + $0xff] sm:$0xff]
        %v1761 = vld [vmem:[#allocation2 + $0x107] sm:$0xff]
        %v1762 = vld [vmem:[#allocation2 + $0x10f] sm:$0xff]
        %v1763 = vld [vmem:[#allocation2 + $0x117] sm:$0xff]
        %v1764 = vld [vmem:[#allocation2 + $0x11f] sm:$0xff]
        %v1765 = vld [vmem:[#allocation2 + $0x127] sm:$0xff]
        %v1766 = vld [vmem:[#allocation2 + $0x12f] sm:$0xff]
        %v1767 = vld [vmem:[#allocation2 + $0x137] sm:$0xff]
        %v1768 = vld [vmem:[#allocation2 + $0x13f] sm:$0xff]
        %v1769 = vld [vmem:[#allocation2 + $0x147] sm:$0xff]
        %v1770 = vld [vmem:[#allocation2 + $0x14f] sm:$0xff]
        %v1771 = vld [vmem:[#allocation2 + $0x157] sm:$0xff]
        %v1772 = vld [vmem:[#allocation2 + $0x15f] sm:$0xff]
        %v1773 = vld [vmem:[#allocation2 + $0x167] sm:$0xff]
        %v1774 = vld [vmem:[#allocation2 + $0x16f] sm:$0xff]
        %v1775 = vld [vmem:[#allocation2 + $0x177] sm:$0xff]
        %v1776 = vld [vmem:[#allocation2 + $0x17f] sm:$0xff]
        %v1777 = vld [vmem:[#allocation2 + $0x187] sm:$0xff]
        %v1778 = vld [vmem:[#allocation2 + $0x18f] sm:$0xff]
        %v1779 = vld [vmem:[#allocation2 + $0x197] sm:$0xff]
        %v1780 = vld [vmem:[#allocation2 + $0x19f] sm:$0xff]
        %v1781 = vld [vmem:[#allocation2 + $0x1a7] sm:$0xff]
        %v1782 = vld [vmem:[#allocation2 + $0x1af] sm:$0xff]
        %v1783 = vld [vmem:[#allocation2 + $0x1b7] sm:$0xff]
        %v1784 = vld [vmem:[#allocation2 + $0x1bf] sm:$0xff]
        %v1785 = vld [vmem:[#allocation2 + $0x1c7] sm:$0xff]
        %v1786 = vld [vmem:[#allocation2 + $0x1cf] sm:$0xff]
        %v1787 = vld [vmem:[#allocation2 + $0x1d7] sm:$0xff]
        %v1788 = vld [vmem:[#allocation2 + $0x1df] sm:$0xff]
        %v1789 = vld [vmem:[#allocation2 + $0x1e7] sm:$0xff]
        %v1790 = vld [vmem:[#allocation2 + $0x1ef] sm:$0xff]
        %v1791 = vld [vmem:[#allocation2 + $0x1f7] sm:$0xff]
        %v1792 = vld [vmem:[#allocation2 + $0x1ff] sm:$0xff]
        %v1793 = vld [vmem:[#allocation2 + $0x207] sm:$0xff]
        %v1794 = vld [vmem:[#allocation2 + $0x20f] sm:$0xff]
        %v1795 = vld [vmem:[#allocation2 + $0x217] sm:$0xff]
        %v1796 = vld [vmem:[#allocation2 + $0x21f] sm:$0xff]
        %v1797 = vld [vmem:[#allocation2 + $0x227] sm:$0xff]
        %v1798 = vld [vmem:[#allocation2 + $0x22f] sm:$0xff]
        %v1799 = vld [vmem:[#allocation2 + $0x237] sm:$0xff]
        %v1800 = vld [vmem:[#allocation2 + $0x23f] sm:$0xff]
        %v1801 = vpack.c.bf16 %v1738, %v1737
        %v1802 = vpack.c.bf16 %v1740, %v1739
        %v1803 = vpack.c.bf16 %v1742, %v1741
        %v1804 = vpack.c.bf16 %v1744, %v1743
        %v1805 = vpack.c.bf16 %v1746, %v1745
        %v1806 = vpack.c.bf16 %v1748, %v1747
        %v1807 = vpack.c.bf16 %v1750, %v1749
        %v1808 = vpack.c.bf16 %v1752, %v1751
        %v1809 = vpack.c.bf16 %v1754, %v1753
        %v1810 = vpack.c.bf16 %v1756, %v1755
        %v1811 = vpack.c.bf16 %v1758, %v1757
        %v1812 = vpack.c.bf16 %v1760, %v1759
        %v1813 = vpack.c.bf16 %v1762, %v1761
        %v1814 = vpack.c.bf16 %v1764, %v1763
        %v1815 = vpack.c.bf16 %v1766, %v1765
        %v1816 = vpack.c.bf16 %v1768, %v1767
        %v1817 = vpack.c.bf16 %v1770, %v1769
        %v1818 = vpack.c.bf16 %v1772, %v1771
        %v1819 = vpack.c.bf16 %v1774, %v1773
        %v1820 = vpack.c.bf16 %v1776, %v1775
        %v1821 = vpack.c.bf16 %v1778, %v1777
        %v1822 = vpack.c.bf16 %v1780, %v1779
        %v1823 = vpack.c.bf16 %v1782, %v1781
        %v1824 = vpack.c.bf16 %v1784, %v1783
        %v1825 = vpack.c.bf16 %v1786, %v1785
        %v1826 = vpack.c.bf16 %v1788, %v1787
        %v1827 = vpack.c.bf16 %v1790, %v1789
        %v1828 = vpack.c.bf16 %v1792, %v1791
        %v1829 = vpack.c.bf16 %v1794, %v1793
        %v1830 = vpack.c.bf16 %v1796, %v1795
        %v1831 = vpack.c.bf16 %v1798, %v1797
        %v1832 = vpack.c.bf16 %v1800, %v1799
        %1865 = vrot.lane.b32.xlu0 %v1801, 18
        %v1866 = vpop.permute.xlu0 %1865
        %1867 = vrot.lane.b32.xlu0 %v1802, 18
        %v1868 = vpop.permute.xlu0 %1867
        %1869 = vrot.lane.b32.xlu0 %v1803, 18
        %v1870 = vpop.permute.xlu0 %1869
        %1871 = vrot.lane.b32.xlu0 %v1804, 18
        %v1872 = vpop.permute.xlu0 %1871
        %1873 = vrot.lane.b32.xlu0 %v1805, 18
        %v1874 = vpop.permute.xlu0 %1873
        %1875 = vrot.lane.b32.xlu0 %v1806, 18
        %v1876 = vpop.permute.xlu0 %1875
        %1877 = vrot.lane.b32.xlu0 %v1807, 18
        %v1878 = vpop.permute.xlu0 %1877
        %1879 = vrot.lane.b32.xlu0 %v1808, 18
        %v1880 = vpop.permute.xlu0 %1879
        %1881 = vrot.lane.b32.xlu0 %v1809, 18
        %v1882 = vpop.permute.xlu0 %1881
        %1883 = vrot.lane.b32.xlu0 %v1810, 18
        %v1884 = vpop.permute.xlu0 %1883
        %1885 = vrot.lane.b32.xlu0 %v1811, 18
        %v1886 = vpop.permute.xlu0 %1885
        %1887 = vrot.lane.b32.xlu0 %v1812, 18
        %v1888 = vpop.permute.xlu0 %1887
        %1889 = vrot.lane.b32.xlu0 %v1813, 18
        %v1890 = vpop.permute.xlu0 %1889
        %1891 = vrot.lane.b32.xlu0 %v1814, 18
        %v1892 = vpop.permute.xlu0 %1891
        %1893 = vrot.lane.b32.xlu0 %v1815, 18
        %v1894 = vpop.permute.xlu0 %1893
        %1895 = vrot.lane.b32.xlu0 %v1816, 18
        %v1896 = vpop.permute.xlu0 %1895
        %1897 = vrot.lane.b32.xlu0 %v1817, 18
        %v1898 = vpop.permute.xlu0 %1897
        %1899 = vrot.lane.b32.xlu0 %v1818, 18
        %v1900 = vpop.permute.xlu0 %1899
        %1901 = vrot.lane.b32.xlu0 %v1819, 18
        %v1902 = vpop.permute.xlu0 %1901
        %1903 = vrot.lane.b32.xlu0 %v1820, 18
        %v1904 = vpop.permute.xlu0 %1903
        %1905 = vrot.lane.b32.xlu0 %v1821, 18
        %v1906 = vpop.permute.xlu0 %1905
        %1907 = vrot.lane.b32.xlu0 %v1822, 18
        %v1908 = vpop.permute.xlu0 %1907
        %1909 = vrot.lane.b32.xlu0 %v1823, 18
        %v1910 = vpop.permute.xlu0 %1909
        %1911 = vrot.lane.b32.xlu0 %v1824, 18
        %v1912 = vpop.permute.xlu0 %1911
        %1913 = vrot.lane.b32.xlu0 %v1825, 18
        %v1914 = vpop.permute.xlu0 %1913
        %1915 = vrot.lane.b32.xlu0 %v1826, 18
        %v1916 = vpop.permute.xlu0 %1915
        %1917 = vrot.lane.b32.xlu0 %v1827, 18
        %v1918 = vpop.permute.xlu0 %1917
        %1919 = vrot.lane.b32.xlu0 %v1828, 18
        %v1920 = vpop.permute.xlu0 %1919
        %1921 = vrot.lane.b32.xlu0 %v1829, 18
        %v1922 = vpop.permute.xlu0 %1921
        %1923 = vrot.lane.b32.xlu0 %v1830, 18
        %v1924 = vpop.permute.xlu0 %1923
        %1925 = vrot.lane.b32.xlu0 %v1831, 18
        %v1926 = vpop.permute.xlu0 %1925
        %1927 = vrot.lane.b32.xlu0 %v1832, 18
        %v1928 = vpop.permute.xlu0 %1927
        %vm1961 = vcmask 171152
        %1962 = vst.msk [vmem:[#allocation3] sm:$0xff] %vm1961, %v1866
        %1963 = vst.msk [vmem:[#allocation3 + $0x8] sm:$0xff] %vm1961, %v1868
        %1964 = vst.msk [vmem:[#allocation3 + $0x10] sm:$0xff] %vm1961, %v1870
        %1965 = vst.msk [vmem:[#allocation3 + $0x18] sm:$0xff] %vm1961, %v1872
        %1966 = vst.msk [vmem:[#allocation3 + $0x20] sm:$0xff] %vm1961, %v1874
        %1967 = vst.msk [vmem:[#allocation3 + $0x28] sm:$0xff] %vm1961, %v1876
        %1968 = vst.msk [vmem:[#allocation3 + $0x30] sm:$0xff] %vm1961, %v1878
        %1969 = vst.msk [vmem:[#allocation3 + $0x38] sm:$0xff] %vm1961, %v1880
        %1970 = vst.msk [vmem:[#allocation3 + $0x40] sm:$0xff] %vm1961, %v1882
        %1971 = vst.msk [vmem:[#allocation3 + $0x48] sm:$0xff] %vm1961, %v1884
        %1972 = vst.msk [vmem:[#allocation3 + $0x50] sm:$0xff] %vm1961, %v1886
        %1973 = vst.msk [vmem:[#allocation3 + $0x58] sm:$0xff] %vm1961, %v1888
        %1974 = vst.msk [vmem:[#allocation3 + $0x60] sm:$0xff] %vm1961, %v1890
        %1975 = vst.msk [vmem:[#allocation3 + $0x68] sm:$0xff] %vm1961, %v1892
        %1976 = vst.msk [vmem:[#allocation3 + $0x70] sm:$0xff] %vm1961, %v1894
        %1977 = vst.msk [vmem:[#allocation3 + $0x78] sm:$0xff] %vm1961, %v1896
        %1978 = vst.msk [vmem:[#allocation3 + $0x80] sm:$0xff] %vm1961, %v1898
        %1979 = vst.msk [vmem:[#allocation3 + $0x88] sm:$0xff] %vm1961, %v1900
        %1980 = vst.msk [vmem:[#allocation3 + $0x90] sm:$0xff] %vm1961, %v1902
        %1981 = vst.msk [vmem:[#allocation3 + $0x98] sm:$0xff] %vm1961, %v1904
        %1982 = vst.msk [vmem:[#allocation3 + $0xa0] sm:$0xff] %vm1961, %v1906
        %1983 = vst.msk [vmem:[#allocation3 + $0xa8] sm:$0xff] %vm1961, %v1908
        %1984 = vst.msk [vmem:[#allocation3 + $0xb0] sm:$0xff] %vm1961, %v1910
        %1985 = vst.msk [vmem:[#allocation3 + $0xb8] sm:$0xff] %vm1961, %v1912
        %1986 = vst.msk [vmem:[#allocation3 + $0xc0] sm:$0xff] %vm1961, %v1914
        %1987 = vst.msk [vmem:[#allocation3 + $0xc8] sm:$0xff] %vm1961, %v1916
        %1988 = vst.msk [vmem:[#allocation3 + $0xd0] sm:$0xff] %vm1961, %v1918
        %1989 = vst.msk [vmem:[#allocation3 + $0xd8] sm:$0xff] %vm1961, %v1920
        %1990 = vst.msk [vmem:[#allocation3 + $0xe0] sm:$0xff] %vm1961, %v1922
        %1991 = vst.msk [vmem:[#allocation3 + $0xe8] sm:$0xff] %vm1961, %v1924
        %1992 = vst.msk [vmem:[#allocation3 + $0xf0] sm:$0xff] %vm1961, %v1926
        %1993 = vst.msk [vmem:[#allocation3 + $0xf8] sm:$0xff] %vm1961, %v1928
        %v1994 = vld [vmem:[#allocation2 + $0x48] sm:$0xff]
        %v1995 = vld [vmem:[#allocation2 + $0x50] sm:$0xff]
        %v1996 = vld [vmem:[#allocation2 + $0x58] sm:$0xff]
        %v1997 = vld [vmem:[#allocation2 + $0x60] sm:$0xff]
        %v1998 = vld [vmem:[#allocation2 + $0x68] sm:$0xff]
        %v1999 = vld [vmem:[#allocation2 + $0x70] sm:$0xff]
        %v2000 = vld [vmem:[#allocation2 + $0x78] sm:$0xff]
        %v2001 = vld [vmem:[#allocation2 + $0x80] sm:$0xff]
        %v2002 = vld [vmem:[#allocation2 + $0x88] sm:$0xff]
        %v2003 = vld [vmem:[#allocation2 + $0x90] sm:$0xff]
        %v2004 = vld [vmem:[#allocation2 + $0x98] sm:$0xff]
        %v2005 = vld [vmem:[#allocation2 + $0xa0] sm:$0xff]
        %v2006 = vld [vmem:[#allocation2 + $0xa8] sm:$0xff]
        %v2007 = vld [vmem:[#allocation2 + $0xb0] sm:$0xff]
        %v2008 = vld [vmem:[#allocation2 + $0xb8] sm:$0xff]
        %v2009 = vld [vmem:[#allocation2 + $0xc0] sm:$0xff]
        %v2010 = vld [vmem:[#allocation2 + $0xc8] sm:$0xff]
        %v2011 = vld [vmem:[#allocation2 + $0xd0] sm:$0xff]
        %v2012 = vld [vmem:[#allocation2 + $0xd8] sm:$0xff]
        %v2013 = vld [vmem:[#allocation2 + $0xe0] sm:$0xff]
        %v2014 = vld [vmem:[#allocation2 + $0xe8] sm:$0xff]
        %v2015 = vld [vmem:[#allocation2 + $0xf0] sm:$0xff]
        %v2016 = vld [vmem:[#allocation2 + $0xf8] sm:$0xff]
        %v2017 = vld [vmem:[#allocation2 + $0x100] sm:$0xff]
        %v2018 = vld [vmem:[#allocation2 + $0x108] sm:$0xff]
        %v2019 = vld [vmem:[#allocation2 + $0x110] sm:$0xff]
        %v2020 = vld [vmem:[#allocation2 + $0x118] sm:$0xff]
        %v2021 = vld [vmem:[#allocation2 + $0x120] sm:$0xff]
        %v2022 = vld [vmem:[#allocation2 + $0x128] sm:$0xff]
        %v2023 = vld [vmem:[#allocation2 + $0x130] sm:$0xff]
        %v2024 = vld [vmem:[#allocation2 + $0x138] sm:$0xff]
        %v2025 = vld [vmem:[#allocation2 + $0x140] sm:$0xff]
        %v2026 = vld [vmem:[#allocation2 + $0x148] sm:$0xff]
        %v2027 = vld [vmem:[#allocation2 + $0x150] sm:$0xff]
        %v2028 = vld [vmem:[#allocation2 + $0x158] sm:$0xff]
        %v2029 = vld [vmem:[#allocation2 + $0x160] sm:$0xff]
        %v2030 = vld [vmem:[#allocation2 + $0x168] sm:$0xff]
        %v2031 = vld [vmem:[#allocation2 + $0x170] sm:$0xff]
        %v2032 = vld [vmem:[#allocation2 + $0x178] sm:$0xff]
        %v2033 = vld [vmem:[#allocation2 + $0x180] sm:$0xff]
        %v2034 = vld [vmem:[#allocation2 + $0x188] sm:$0xff]
        %v2035 = vld [vmem:[#allocation2 + $0x190] sm:$0xff]
        %v2036 = vld [vmem:[#allocation2 + $0x198] sm:$0xff]
        %v2037 = vld [vmem:[#allocation2 + $0x1a0] sm:$0xff]
        %v2038 = vld [vmem:[#allocation2 + $0x1a8] sm:$0xff]
        %v2039 = vld [vmem:[#allocation2 + $0x1b0] sm:$0xff]
        %v2040 = vld [vmem:[#allocation2 + $0x1b8] sm:$0xff]
        %v2041 = vld [vmem:[#allocation2 + $0x1c0] sm:$0xff]
        %v2042 = vld [vmem:[#allocation2 + $0x1c8] sm:$0xff]
        %v2043 = vld [vmem:[#allocation2 + $0x1d0] sm:$0xff]
        %v2044 = vld [vmem:[#allocation2 + $0x1d8] sm:$0xff]
        %v2045 = vld [vmem:[#allocation2 + $0x1e0] sm:$0xff]
        %v2046 = vld [vmem:[#allocation2 + $0x1e8] sm:$0xff]
        %v2047 = vld [vmem:[#allocation2 + $0x1f0] sm:$0xff]
        %v2048 = vld [vmem:[#allocation2 + $0x1f8] sm:$0xff]
        %v2049 = vld [vmem:[#allocation2 + $0x200] sm:$0xff]
        %v2050 = vld [vmem:[#allocation2 + $0x208] sm:$0xff]
        %v2051 = vld [vmem:[#allocation2 + $0x210] sm:$0xff]
        %v2052 = vld [vmem:[#allocation2 + $0x218] sm:$0xff]
        %v2053 = vld [vmem:[#allocation2 + $0x220] sm:$0xff]
        %v2054 = vld [vmem:[#allocation2 + $0x228] sm:$0xff]
        %v2055 = vld [vmem:[#allocation2 + $0x230] sm:$0xff]
        %v2056 = vld [vmem:[#allocation2 + $0x238] sm:$0xff]
        %v2057 = vld [vmem:[#allocation2 + $0x240] sm:$0xff]
        %v2058 = vpack.c.bf16 %v1995, %v1994
        %v2059 = vpack.c.bf16 %v1997, %v1996
        %v2060 = vpack.c.bf16 %v1999, %v1998
        %v2061 = vpack.c.bf16 %v2001, %v2000
        %v2062 = vpack.c.bf16 %v2003, %v2002
        %v2063 = vpack.c.bf16 %v2005, %v2004
        %v2064 = vpack.c.bf16 %v2007, %v2006
        %v2065 = vpack.c.bf16 %v2009, %v2008
        %v2066 = vpack.c.bf16 %v2011, %v2010
        %v2067 = vpack.c.bf16 %v2013, %v2012
        %v2068 = vpack.c.bf16 %v2015, %v2014
        %v2069 = vpack.c.bf16 %v2017, %v2016
        %v2070 = vpack.c.bf16 %v2019, %v2018
        %v2071 = vpack.c.bf16 %v2021, %v2020
        %v2072 = vpack.c.bf16 %v2023, %v2022
        %v2073 = vpack.c.bf16 %v2025, %v2024
        %v2074 = vpack.c.bf16 %v2027, %v2026
        %v2075 = vpack.c.bf16 %v2029, %v2028
        %v2076 = vpack.c.bf16 %v2031, %v2030
        %v2077 = vpack.c.bf16 %v2033, %v2032
        %v2078 = vpack.c.bf16 %v2035, %v2034
        %v2079 = vpack.c.bf16 %v2037, %v2036
        %v2080 = vpack.c.bf16 %v2039, %v2038
        %v2081 = vpack.c.bf16 %v2041, %v2040
        %v2082 = vpack.c.bf16 %v2043, %v2042
        %v2083 = vpack.c.bf16 %v2045, %v2044
        %v2084 = vpack.c.bf16 %v2047, %v2046
        %v2085 = vpack.c.bf16 %v2049, %v2048
        %v2086 = vpack.c.bf16 %v2051, %v2050
        %v2087 = vpack.c.bf16 %v2053, %v2052
        %v2088 = vpack.c.bf16 %v2055, %v2054
        %v2089 = vpack.c.bf16 %v2057, %v2056
        %2122 = vrot.lane.b32.xlu0 %v2058, 21
        %v2123 = vpop.permute.xlu0 %2122
        %2124 = vrot.lane.b32.xlu0 %v2059, 21
        %v2125 = vpop.permute.xlu0 %2124
        %2126 = vrot.lane.b32.xlu0 %v2060, 21
        %v2127 = vpop.permute.xlu0 %2126
        %2128 = vrot.lane.b32.xlu0 %v2061, 21
        %v2129 = vpop.permute.xlu0 %2128
        %2130 = vrot.lane.b32.xlu0 %v2062, 21
        %v2131 = vpop.permute.xlu0 %2130
        %2132 = vrot.lane.b32.xlu0 %v2063, 21
        %v2133 = vpop.permute.xlu0 %2132
        %2134 = vrot.lane.b32.xlu0 %v2064, 21
        %v2135 = vpop.permute.xlu0 %2134
        %2136 = vrot.lane.b32.xlu0 %v2065, 21
        %v2137 = vpop.permute.xlu0 %2136
        %2138 = vrot.lane.b32.xlu0 %v2066, 21
        %v2139 = vpop.permute.xlu0 %2138
        %2140 = vrot.lane.b32.xlu0 %v2067, 21
        %v2141 = vpop.permute.xlu0 %2140
        %2142 = vrot.lane.b32.xlu0 %v2068, 21
        %v2143 = vpop.permute.xlu0 %2142
        %2144 = vrot.lane.b32.xlu0 %v2069, 21
        %v2145 = vpop.permute.xlu0 %2144
        %2146 = vrot.lane.b32.xlu0 %v2070, 21
        %v2147 = vpop.permute.xlu0 %2146
        %2148 = vrot.lane.b32.xlu0 %v2071, 21
        %v2149 = vpop.permute.xlu0 %2148
        %2150 = vrot.lane.b32.xlu0 %v2072, 21
        %v2151 = vpop.permute.xlu0 %2150
        %2152 = vrot.lane.b32.xlu0 %v2073, 21
        %v2153 = vpop.permute.xlu0 %2152
        %2154 = vrot.lane.b32.xlu0 %v2074, 21
        %v2155 = vpop.permute.xlu0 %2154
        %2156 = vrot.lane.b32.xlu0 %v2075, 21
        %v2157 = vpop.permute.xlu0 %2156
        %2158 = vrot.lane.b32.xlu0 %v2076, 21
        %v2159 = vpop.permute.xlu0 %2158
        %2160 = vrot.lane.b32.xlu0 %v2077, 21
        %v2161 = vpop.permute.xlu0 %2160
        %2162 = vrot.lane.b32.xlu0 %v2078, 21
        %v2163 = vpop.permute.xlu0 %2162
        %2164 = vrot.lane.b32.xlu0 %v2079, 21
        %v2165 = vpop.permute.xlu0 %2164
        %2166 = vrot.lane.b32.xlu0 %v2080, 21
        %v2167 = vpop.permute.xlu0 %2166
        %2168 = vrot.lane.b32.xlu0 %v2081, 21
        %v2169 = vpop.permute.xlu0 %2168
        %2170 = vrot.lane.b32.xlu0 %v2082, 21
        %v2171 = vpop.permute.xlu0 %2170
        %2172 = vrot.lane.b32.xlu0 %v2083, 21
        %v2173 = vpop.permute.xlu0 %2172
        %2174 = vrot.lane.b32.xlu0 %v2084, 21
        %v2175 = vpop.permute.xlu0 %2174
        %2176 = vrot.lane.b32.xlu0 %v2085, 21
        %v2177 = vpop.permute.xlu0 %2176
        %2178 = vrot.lane.b32.xlu0 %v2086, 21
        %v2179 = vpop.permute.xlu0 %2178
        %2180 = vrot.lane.b32.xlu0 %v2087, 21
        %v2181 = vpop.permute.xlu0 %2180
        %2182 = vrot.lane.b32.xlu0 %v2088, 21
        %v2183 = vpop.permute.xlu0 %2182
        %2184 = vrot.lane.b32.xlu0 %v2089, 21
        %v2185 = vpop.permute.xlu0 %2184
        %vm2218 = vcmask 195752
        %2219 = vst.msk [vmem:[#allocation3] sm:$0xff] %vm2218, %v2123
        %2220 = vst.msk [vmem:[#allocation3 + $0x8] sm:$0xff] %vm2218, %v2125
        %2221 = vst.msk [vmem:[#allocation3 + $0x10] sm:$0xff] %vm2218, %v2127
        %2222 = vst.msk [vmem:[#allocation3 + $0x18] sm:$0xff] %vm2218, %v2129
        %2223 = vst.msk [vmem:[#allocation3 + $0x20] sm:$0xff] %vm2218, %v2131
        %2224 = vst.msk [vmem:[#allocation3 + $0x28] sm:$0xff] %vm2218, %v2133
        %2225 = vst.msk [vmem:[#allocation3 + $0x30] sm:$0xff] %vm2218, %v2135
        %2226 = vst.msk [vmem:[#allocation3 + $0x38] sm:$0xff] %vm2218, %v2137
        %2227 = vst.msk [vmem:[#allocation3 + $0x40] sm:$0xff] %vm2218, %v2139
        %2228 = vst.msk [vmem:[#allocation3 + $0x48] sm:$0xff] %vm2218, %v2141
        %2229 = vst.msk [vmem:[#allocation3 + $0x50] sm:$0xff] %vm2218, %v2143
        %2230 = vst.msk [vmem:[#allocation3 + $0x58] sm:$0xff] %vm2218, %v2145
        %2231 = vst.msk [vmem:[#allocation3 + $0x60] sm:$0xff] %vm2218, %v2147
        %2232 = vst.msk [vmem:[#allocation3 + $0x68] sm:$0xff] %vm2218, %v2149
        %2233 = vst.msk [vmem:[#allocation3 + $0x70] sm:$0xff] %vm2218, %v2151
        %2234 = vst.msk [vmem:[#allocation3 + $0x78] sm:$0xff] %vm2218, %v2153
        %2235 = vst.msk [vmem:[#allocation3 + $0x80] sm:$0xff] %vm2218, %v2155
        %2236 = vst.msk [vmem:[#allocation3 + $0x88] sm:$0xff] %vm2218, %v2157
        %2237 = vst.msk [vmem:[#allocation3 + $0x90] sm:$0xff] %vm2218, %v2159
        %2238 = vst.msk [vmem:[#allocation3 + $0x98] sm:$0xff] %vm2218, %v2161
        %2239 = vst.msk [vmem:[#allocation3 + $0xa0] sm:$0xff] %vm2218, %v2163
        %2240 = vst.msk [vmem:[#allocation3 + $0xa8] sm:$0xff] %vm2218, %v2165
        %2241 = vst.msk [vmem:[#allocation3 + $0xb0] sm:$0xff] %vm2218, %v2167
        %2242 = vst.msk [vmem:[#allocation3 + $0xb8] sm:$0xff] %vm2218, %v2169
        %2243 = vst.msk [vmem:[#allocation3 + $0xc0] sm:$0xff] %vm2218, %v2171
        %2244 = vst.msk [vmem:[#allocation3 + $0xc8] sm:$0xff] %vm2218, %v2173
        %2245 = vst.msk [vmem:[#allocation3 + $0xd0] sm:$0xff] %vm2218, %v2175
        %2246 = vst.msk [vmem:[#allocation3 + $0xd8] sm:$0xff] %vm2218, %v2177
        %2247 = vst.msk [vmem:[#allocation3 + $0xe0] sm:$0xff] %vm2218, %v2179
        %2248 = vst.msk [vmem:[#allocation3 + $0xe8] sm:$0xff] %vm2218, %v2181
        %2249 = vst.msk [vmem:[#allocation3 + $0xf0] sm:$0xff] %vm2218, %v2183
        %2250 = vst.msk [vmem:[#allocation3 + $0xf8] sm:$0xff] %vm2218, %v2185
        %v2251 = vld [vmem:[#allocation2 + $0x49] sm:$0xff]
        %v2252 = vld [vmem:[#allocation2 + $0x51] sm:$0xff]
        %v2253 = vld [vmem:[#allocation2 + $0x59] sm:$0xff]
        %v2254 = vld [vmem:[#allocation2 + $0x61] sm:$0xff]
        %v2255 = vld [vmem:[#allocation2 + $0x69] sm:$0xff]
        %v2256 = vld [vmem:[#allocation2 + $0x71] sm:$0xff]
        %v2257 = vld [vmem:[#allocation2 + $0x79] sm:$0xff]
        %v2258 = vld [vmem:[#allocation2 + $0x81] sm:$0xff]
        %v2259 = vld [vmem:[#allocation2 + $0x89] sm:$0xff]
        %v2260 = vld [vmem:[#allocation2 + $0x91] sm:$0xff]
        %v2261 = vld [vmem:[#allocation2 + $0x99] sm:$0xff]
        %v2262 = vld [vmem:[#allocation2 + $0xa1] sm:$0xff]
        %v2263 = vld [vmem:[#allocation2 + $0xa9] sm:$0xff]
        %v2264 = vld [vmem:[#allocation2 + $0xb1] sm:$0xff]
        %v2265 = vld [vmem:[#allocation2 + $0xb9] sm:$0xff]
        %v2266 = vld [vmem:[#allocation2 + $0xc1] sm:$0xff]
        %v2267 = vld [vmem:[#allocation2 + $0xc9] sm:$0xff]
        %v2268 = vld [vmem:[#allocation2 + $0xd1] sm:$0xff]
        %v2269 = vld [vmem:[#allocation2 + $0xd9] sm:$0xff]
        %v2270 = vld [vmem:[#allocation2 + $0xe1] sm:$0xff]
        %v2271 = vld [vmem:[#allocation2 + $0xe9] sm:$0xff]
        %v2272 = vld [vmem:[#allocation2 + $0xf1] sm:$0xff]
        %v2273 = vld [vmem:[#allocation2 + $0xf9] sm:$0xff]
        %v2274 = vld [vmem:[#allocation2 + $0x101] sm:$0xff]
        %v2275 = vld [vmem:[#allocation2 + $0x109] sm:$0xff]
        %v2276 = vld [vmem:[#allocation2 + $0x111] sm:$0xff]
        %v2277 = vld [vmem:[#allocation2 + $0x119] sm:$0xff]
        %v2278 = vld [vmem:[#allocation2 + $0x121] sm:$0xff]
        %v2279 = vld [vmem:[#allocation2 + $0x129] sm:$0xff]
        %v2280 = vld [vmem:[#allocation2 + $0x131] sm:$0xff]
        %v2281 = vld [vmem:[#allocation2 + $0x139] sm:$0xff]
        %v2282 = vld [vmem:[#allocation2 + $0x141] sm:$0xff]
        %v2283 = vld [vmem:[#allocation2 + $0x149] sm:$0xff]
        %v2284 = vld [vmem:[#allocation2 + $0x151] sm:$0xff]
        %v2285 = vld [vmem:[#allocation2 + $0x159] sm:$0xff]
        %v2286 = vld [vmem:[#allocation2 + $0x161] sm:$0xff]
        %v2287 = vld [vmem:[#allocation2 + $0x169] sm:$0xff]
        %v2288 = vld [vmem:[#allocation2 + $0x171] sm:$0xff]
        %v2289 = vld [vmem:[#allocation2 + $0x179] sm:$0xff]
        %v2290 = vld [vmem:[#allocation2 + $0x181] sm:$0xff]
        %v2291 = vld [vmem:[#allocation2 + $0x189] sm:$0xff]
        %v2292 = vld [vmem:[#allocation2 + $0x191] sm:$0xff]
        %v2293 = vld [vmem:[#allocation2 + $0x199] sm:$0xff]
        %v2294 = vld [vmem:[#allocation2 + $0x1a1] sm:$0xff]
        %v2295 = vld [vmem:[#allocation2 + $0x1a9] sm:$0xff]
        %v2296 = vld [vmem:[#allocation2 + $0x1b1] sm:$0xff]
        %v2297 = vld [vmem:[#allocation2 + $0x1b9] sm:$0xff]
        %v2298 = vld [vmem:[#allocation2 + $0x1c1] sm:$0xff]
        %v2299 = vld [vmem:[#allocation2 + $0x1c9] sm:$0xff]
        %v2300 = vld [vmem:[#allocation2 + $0x1d1] sm:$0xff]
        %v2301 = vld [vmem:[#allocation2 + $0x1d9] sm:$0xff]
        %v2302 = vld [vmem:[#allocation2 + $0x1e1] sm:$0xff]
        %v2303 = vld [vmem:[#allocation2 + $0x1e9] sm:$0xff]
        %v2304 = vld [vmem:[#allocation2 + $0x1f1] sm:$0xff]
        %v2305 = vld [vmem:[#allocation2 + $0x1f9] sm:$0xff]
        %v2306 = vld [vmem:[#allocation2 + $0x201] sm:$0xff]
        %v2307 = vld [vmem:[#allocation2 + $0x209] sm:$0xff]
        %v2308 = vld [vmem:[#allocation2 + $0x211] sm:$0xff]
        %v2309 = vld [vmem:[#allocation2 + $0x219] sm:$0xff]
        %v2310 = vld [vmem:[#allocation2 + $0x221] sm:$0xff]
        %v2311 = vld [vmem:[#allocation2 + $0x229] sm:$0xff]
        %v2312 = vld [vmem:[#allocation2 + $0x231] sm:$0xff]
        %v2313 = vld [vmem:[#allocation2 + $0x239] sm:$0xff]
        %v2314 = vld [vmem:[#allocation2 + $0x241] sm:$0xff]
        %v2315 = vpack.c.bf16 %v2252, %v2251
        %v2316 = vpack.c.bf16 %v2254, %v2253
        %v2317 = vpack.c.bf16 %v2256, %v2255
        %v2318 = vpack.c.bf16 %v2258, %v2257
        %v2319 = vpack.c.bf16 %v2260, %v2259
        %v2320 = vpack.c.bf16 %v2262, %v2261
        %v2321 = vpack.c.bf16 %v2264, %v2263
        %v2322 = vpack.c.bf16 %v2266, %v2265
        %v2323 = vpack.c.bf16 %v2268, %v2267
        %v2324 = vpack.c.bf16 %v2270, %v2269
        %v2325 = vpack.c.bf16 %v2272, %v2271
        %v2326 = vpack.c.bf16 %v2274, %v2273
        %v2327 = vpack.c.bf16 %v2276, %v2275
        %v2328 = vpack.c.bf16 %v2278, %v2277
        %v2329 = vpack.c.bf16 %v2280, %v2279
        %v2330 = vpack.c.bf16 %v2282, %v2281
        %v2331 = vpack.c.bf16 %v2284, %v2283
        %v2332 = vpack.c.bf16 %v2286, %v2285
        %v2333 = vpack.c.bf16 %v2288, %v2287
        %v2334 = vpack.c.bf16 %v2290, %v2289
        %v2335 = vpack.c.bf16 %v2292, %v2291
        %v2336 = vpack.c.bf16 %v2294, %v2293
        %v2337 = vpack.c.bf16 %v2296, %v2295
        %v2338 = vpack.c.bf16 %v2298, %v2297
        %v2339 = vpack.c.bf16 %v2300, %v2299
        %v2340 = vpack.c.bf16 %v2302, %v2301
        %v2341 = vpack.c.bf16 %v2304, %v2303
        %v2342 = vpack.c.bf16 %v2306, %v2305
        %v2343 = vpack.c.bf16 %v2308, %v2307
        %v2344 = vpack.c.bf16 %v2310, %v2309
        %v2345 = vpack.c.bf16 %v2312, %v2311
        %v2346 = vpack.c.bf16 %v2314, %v2313
        %2379 = vrot.lane.b32.xlu0 %v2315, 24
        %v2380 = vpop.permute.xlu0 %2379
        %2381 = vrot.lane.b32.xlu0 %v2316, 24
        %v2382 = vpop.permute.xlu0 %2381
        %2383 = vrot.lane.b32.xlu0 %v2317, 24
        %v2384 = vpop.permute.xlu0 %2383
        %2385 = vrot.lane.b32.xlu0 %v2318, 24
        %v2386 = vpop.permute.xlu0 %2385
        %2387 = vrot.lane.b32.xlu0 %v2319, 24
        %v2388 = vpop.permute.xlu0 %2387
        %2389 = vrot.lane.b32.xlu0 %v2320, 24
        %v2390 = vpop.permute.xlu0 %2389
        %2391 = vrot.lane.b32.xlu0 %v2321, 24
        %v2392 = vpop.permute.xlu0 %2391
        %2393 = vrot.lane.b32.xlu0 %v2322, 24
        %v2394 = vpop.permute.xlu0 %2393
        %2395 = vrot.lane.b32.xlu0 %v2323, 24
        %v2396 = vpop.permute.xlu0 %2395
        %2397 = vrot.lane.b32.xlu0 %v2324, 24
        %v2398 = vpop.permute.xlu0 %2397
        %2399 = vrot.lane.b32.xlu0 %v2325, 24
        %v2400 = vpop.permute.xlu0 %2399
        %2401 = vrot.lane.b32.xlu0 %v2326, 24
        %v2402 = vpop.permute.xlu0 %2401
        %2403 = vrot.lane.b32.xlu0 %v2327, 24
        %v2404 = vpop.permute.xlu0 %2403
        %2405 = vrot.lane.b32.xlu0 %v2328, 24
        %v2406 = vpop.permute.xlu0 %2405
        %2407 = vrot.lane.b32.xlu0 %v2329, 24
        %v2408 = vpop.permute.xlu0 %2407
        %2409 = vrot.lane.b32.xlu0 %v2330, 24
        %v2410 = vpop.permute.xlu0 %2409
        %2411 = vrot.lane.b32.xlu0 %v2331, 24
        %v2412 = vpop.permute.xlu0 %2411
        %2413 = vrot.lane.b32.xlu0 %v2332, 24
        %v2414 = vpop.permute.xlu0 %2413
        %2415 = vrot.lane.b32.xlu0 %v2333, 24
        %v2416 = vpop.permute.xlu0 %2415
        %2417 = vrot.lane.b32.xlu0 %v2334, 24
        %v2418 = vpop.permute.xlu0 %2417
        %2419 = vrot.lane.b32.xlu0 %v2335, 24
        %v2420 = vpop.permute.xlu0 %2419
        %2421 = vrot.lane.b32.xlu0 %v2336, 24
        %v2422 = vpop.permute.xlu0 %2421
        %2423 = vrot.lane.b32.xlu0 %v2337, 24
        %v2424 = vpop.permute.xlu0 %2423
        %2425 = vrot.lane.b32.xlu0 %v2338, 24
        %v2426 = vpop.permute.xlu0 %2425
        %2427 = vrot.lane.b32.xlu0 %v2339, 24
        %v2428 = vpop.permute.xlu0 %2427
        %2429 = vrot.lane.b32.xlu0 %v2340, 24
        %v2430 = vpop.permute.xlu0 %2429
        %2431 = vrot.lane.b32.xlu0 %v2341, 24
        %v2432 = vpop.permute.xlu0 %2431
        %2433 = vrot.lane.b32.xlu0 %v2342, 24
        %v2434 = vpop.permute.xlu0 %2433
        %2435 = vrot.lane.b32.xlu0 %v2343, 24
        %v2436 = vpop.permute.xlu0 %2435
        %2437 = vrot.lane.b32.xlu0 %v2344, 24
        %v2438 = vpop.permute.xlu0 %2437
        %2439 = vrot.lane.b32.xlu0 %v2345, 24
        %v2440 = vpop.permute.xlu0 %2439
        %2441 = vrot.lane.b32.xlu0 %v2346, 24
        %v2442 = vpop.permute.xlu0 %2441
        %vm2475 = vcmask 220352
        %2476 = vst.msk [vmem:[#allocation3] sm:$0xff] %vm2475, %v2380
        %2477 = vst.msk [vmem:[#allocation3 + $0x8] sm:$0xff] %vm2475, %v2382
        %2478 = vst.msk [vmem:[#allocation3 + $0x10] sm:$0xff] %vm2475, %v2384
        %2479 = vst.msk [vmem:[#allocation3 + $0x18] sm:$0xff] %vm2475, %v2386
        %2480 = vst.msk [vmem:[#allocation3 + $0x20] sm:$0xff] %vm2475, %v2388
        %2481 = vst.msk [vmem:[#allocation3 + $0x28] sm:$0xff] %vm2475, %v2390
        %2482 = vst.msk [vmem:[#allocation3 + $0x30] sm:$0xff] %vm2475, %v2392
        %2483 = vst.msk [vmem:[#allocation3 + $0x38] sm:$0xff] %vm2475, %v2394
        %2484 = vst.msk [vmem:[#allocation3 + $0x40] sm:$0xff] %vm2475, %v2396
        %2485 = vst.msk [vmem:[#allocation3 + $0x48] sm:$0xff] %vm2475, %v2398
        %2486 = vst.msk [vmem:[#allocation3 + $0x50] sm:$0xff] %vm2475, %v2400
        %2487 = vst.msk [vmem:[#allocation3 + $0x58] sm:$0xff] %vm2475, %v2402
        %2488 = vst.msk [vmem:[#allocation3 + $0x60] sm:$0xff] %vm2475, %v2404
        %2489 = vst.msk [vmem:[#allocation3 + $0x68] sm:$0xff] %vm2475, %v2406
        %2490 = vst.msk [vmem:[#allocation3 + $0x70] sm:$0xff] %vm2475, %v2408
        %2491 = vst.msk [vmem:[#allocation3 + $0x78] sm:$0xff] %vm2475, %v2410
        %2492 = vst.msk [vmem:[#allocation3 + $0x80] sm:$0xff] %vm2475, %v2412
        %2493 = vst.msk [vmem:[#allocation3 + $0x88] sm:$0xff] %vm2475, %v2414
        %2494 = vst.msk [vmem:[#allocation3 + $0x90] sm:$0xff] %vm2475, %v2416
        %2495 = vst.msk [vmem:[#allocation3 + $0x98] sm:$0xff] %vm2475, %v2418
        %2496 = vst.msk [vmem:[#allocation3 + $0xa0] sm:$0xff] %vm2475, %v2420
        %2497 = vst.msk [vmem:[#allocation3 + $0xa8] sm:$0xff] %vm2475, %v2422
        %2498 = vst.msk [vmem:[#allocation3 + $0xb0] sm:$0xff] %vm2475, %v2424
        %2499 = vst.msk [vmem:[#allocation3 + $0xb8] sm:$0xff] %vm2475, %v2426
        %2500 = vst.msk [vmem:[#allocation3 + $0xc0] sm:$0xff] %vm2475, %v2428
        %2501 = vst.msk [vmem:[#allocation3 + $0xc8] sm:$0xff] %vm2475, %v2430
        %2502 = vst.msk [vmem:[#allocation3 + $0xd0] sm:$0xff] %vm2475, %v2432
        %2503 = vst.msk [vmem:[#allocation3 + $0xd8] sm:$0xff] %vm2475, %v2434
        %2504 = vst.msk [vmem:[#allocation3 + $0xe0] sm:$0xff] %vm2475, %v2436
        %2505 = vst.msk [vmem:[#allocation3 + $0xe8] sm:$0xff] %vm2475, %v2438
        %2506 = vst.msk [vmem:[#allocation3 + $0xf0] sm:$0xff] %vm2475, %v2440
        %2507 = vst.msk [vmem:[#allocation3 + $0xf8] sm:$0xff] %vm2475, %v2442
        %v2508 = vld [vmem:[#allocation3] sm:$0xff]
        %v2509 = vld [vmem:[#allocation3 + $0x8] sm:$0xff]
        %v2510 = vld [vmem:[#allocation3 + $0x10] sm:$0xff]
        %v2511 = vld [vmem:[#allocation3 + $0x18] sm:$0xff]
        %v2512 = vld [vmem:[#allocation3 + $0x20] sm:$0xff]
        %v2513 = vld [vmem:[#allocation3 + $0x28] sm:$0xff]
        %v2514 = vld [vmem:[#allocation3 + $0x30] sm:$0xff]
        %v2515 = vld [vmem:[#allocation3 + $0x38] sm:$0xff]
        %v2516 = vld [vmem:[#allocation3 + $0x40] sm:$0xff]
        %v2517 = vld [vmem:[#allocation3 + $0x48] sm:$0xff]
        %v2518 = vld [vmem:[#allocation3 + $0x50] sm:$0xff]
        %v2519 = vld [vmem:[#allocation3 + $0x58] sm:$0xff]
        %v2520 = vld [vmem:[#allocation3 + $0x60] sm:$0xff]
        %v2521 = vld [vmem:[#allocation3 + $0x68] sm:$0xff]
        %v2522 = vld [vmem:[#allocation3 + $0x70] sm:$0xff]
        %v2523 = vld [vmem:[#allocation3 + $0x78] sm:$0xff]
        %v2524 = vld [vmem:[#allocation3 + $0x80] sm:$0xff]
        %v2525 = vld [vmem:[#allocation3 + $0x88] sm:$0xff]
        %v2526 = vld [vmem:[#allocation3 + $0x90] sm:$0xff]
        %v2527 = vld [vmem:[#allocation3 + $0x98] sm:$0xff]
        %v2528 = vld [vmem:[#allocation3 + $0xa0] sm:$0xff]
        %v2529 = vld [vmem:[#allocation3 + $0xa8] sm:$0xff]
        %v2530 = vld [vmem:[#allocation3 + $0xb0] sm:$0xff]
        %v2531 = vld [vmem:[#allocation3 + $0xb8] sm:$0xff]
        %v2532 = vld [vmem:[#allocation3 + $0xc0] sm:$0xff]
        %v2533 = vld [vmem:[#allocation3 + $0xc8] sm:$0xff]
        %v2534 = vld [vmem:[#allocation3 + $0xd0] sm:$0xff]
        %v2535 = vld [vmem:[#allocation3 + $0xd8] sm:$0xff]
        %v2536 = vld [vmem:[#allocation3 + $0xe0] sm:$0xff]
        %v2537 = vld [vmem:[#allocation3 + $0xe8] sm:$0xff]
        %v2538 = vld [vmem:[#allocation3 + $0xf0] sm:$0xff]
        %v2539 = vld [vmem:[#allocation3 + $0xf8] sm:$0xff]
        %v2540 = vld [vmem:[%s1] sm:$0xf]
        %v2541 = vld [vmem:[%s1 + $0x4] sm:$0xf]
        %v2542 = vld [vmem:[%s1 + $0x8] sm:$0xf]
        %v2543 = vld [vmem:[%s1 + $0xc] sm:$0x3]
        %v2544 = vld [vmem:[%s2] sm:$0x1]
        %v2546 = vlaneseq
        %v2547 = vshrl.u32 %v2546, 7
        %v2548 = vsub.s32 0, %v2547
        %v2549 = vrot.slane %v2544, %v2548
        %v2555 = vunpack.c.l.b16 %v2540
        %v2556 = vunpack.c.l.b16 %v2541
        %v2557 = vunpack.c.l.b16 %v2542
        %v2558 = vunpack.c.l.b16 %v2543
        %v2559 = vpack.c.b16 %v2556, %v2555
        %v2560 = vpack.c.b16 %v2558, %v2557
        %vm2562 = vcmask 220160
        %v2564 = vsel %vm2562, %v2508, 0
        %v2567 = vsel %vm2562, %v2509, 0
        %v2570 = vsel %vm2562, %v2510, 0
        %v2573 = vsel %vm2562, %v2511, 0
        %v2576 = vsel %vm2562, %v2512, 0
        %v2579 = vsel %vm2562, %v2513, 0
        %v2582 = vsel %vm2562, %v2514, 0
        %v2585 = vsel %vm2562, %v2515, 0
        %v2588 = vsel %vm2562, %v2516, 0
        %v2591 = vsel %vm2562, %v2517, 0
        %v2594 = vsel %vm2562, %v2518, 0
        %v2597 = vsel %vm2562, %v2519, 0
        %v2600 = vsel %vm2562, %v2520, 0
        %v2603 = vsel %vm2562, %v2521, 0
        %v2606 = vsel %vm2562, %v2522, 0
        %v2609 = vsel %vm2562, %v2523, 0
        %v2612 = vsel %vm2562, %v2524, 0
        %v2615 = vsel %vm2562, %v2525, 0
        %v2618 = vsel %vm2562, %v2526, 0
        %v2621 = vsel %vm2562, %v2527, 0
        %v2624 = vsel %vm2562, %v2528, 0
        %v2627 = vsel %vm2562, %v2529, 0
        %v2630 = vsel %vm2562, %v2530, 0
        %v2633 = vsel %vm2562, %v2531, 0
        %v2636 = vsel %vm2562, %v2532, 0
        %v2639 = vsel %vm2562, %v2533, 0
        %v2642 = vsel %vm2562, %v2534, 0
        %v2645 = vsel %vm2562, %v2535, 0
        %v2648 = vsel %vm2562, %v2536, 0
        %v2651 = vsel %vm2562, %v2537, 0
        %v2654 = vsel %vm2562, %v2538, 0
        %v2657 = vsel %vm2562, %v2539, 0
        %vm2659 = vcmask 1044480
        %vm2660 = vcmask 1045504
        %v2661 = vsel %vm2659, 4294967295, 65535
        %v2662 = vsel %vm2660, %v2661, 0
        %v2664 = vand.u32 %v2560, %v2662
        %2666 = vmatprep.subr.bf16.mxu0 0
        %2667 = vmatpush1.bf16.msra.mxu0 %v2559
        %2668 = vmatprep.subr.bf16.mxu0 0
        %2669 = vmatpush1.bf16.msra.mxu0 %v2664
        %2670 = vmatprep.subr.bf16.mxu0 0
        %2671 = vmatpush1.bf16.msra.mxu0 0
        %2672 = vmatprep.subr.bf16.mxu0 0
        %2673 = vmatpush1.bf16.msra.mxu0 0
        %2674 = vmatprep.subr.bf16.mxu0 0
        %2675 = vmatpush1.bf16.msra.mxu0 0
        %2676 = vmatprep.subr.bf16.mxu0 0
        %2677 = vmatpush1.bf16.msra.mxu0 0
        %2678 = vmatprep.subr.bf16.mxu0 0
        %2679 = vmatpush1.bf16.msra.mxu0 0
        %2680 = vmatprep.subr.bf16.mxu0 0
        %2681 = vmatpush1.bf16.msra.mxu0 0
        %2682 = vmatprep.subr.bf16.mxu0 0
        %2683 = vmatpush1.bf16.msra.mxu0 0
        %2684 = vmatprep.subr.bf16.mxu0 0
        %2685 = vmatpush1.bf16.msra.mxu0 0
        %2686 = vmatprep.subr.bf16.mxu0 0
        %2687 = vmatpush1.bf16.msra.mxu0 0
        %2688 = vmatprep.subr.bf16.mxu0 0
        %2689 = vmatpush1.bf16.msra.mxu0 0
        %2690 = vmatprep.subr.bf16.mxu0 0
        %2691 = vmatpush1.bf16.msra.mxu0 0
        %2692 = vmatprep.subr.bf16.mxu0 0
        %2693 = vmatpush1.bf16.msra.mxu0 0
        %2694 = vmatprep.subr.bf16.mxu0 0
        %2695 = vmatpush1.bf16.msra.mxu0 0
        %2696 = vmatprep.subr.bf16.mxu0 0
        %2697 = vmatpush1.bf16.msra.mxu0 0
        %2698 = vmatprep.mubr.bf16.mxu0 0
        %2699 = vmatmul.mubr.bf16.gmra.mrb[0].mxu0 %v2564
        %v2700 = vpop.f32.mrb[0].mxu0
        %v2701 = vpop.f32.mrb[0].mxu0
        %v2702 = vpop.f32.mrb[0].mxu0
        %v2703 = vadd.f32 %v2549, %v2702
        %v2704 = vpop.f32.mrb[0].mxu0
        %2705 = vmatprep.mubr.bf16.mxu0 0
        %2706 = vmatmul.mubr.bf16.gmra.mrb[0].mxu0 %v2567
        %v2707 = vpop.f32.mrb[0].mxu0
        %v2708 = vadd.f32 %v2549, %v2707
        %v2709 = vpop.f32.mrb[0].mxu0
        %v2710 = vpop.f32.mrb[0].mxu0
        %v2711 = vpop.f32.mrb[0].mxu0
        %2712 = vmatprep.mubr.bf16.mxu0 0
        %2713 = vmatmul.mubr.bf16.gmra.mrb[0].mxu0 %v2570
        %v2714 = vpop.f32.mrb[0].mxu0
        %v2715 = vpop.f32.mrb[0].mxu0
        %v2716 = vpop.f32.mrb[0].mxu0
        %v2717 = vadd.f32 %v2549, %v2716
        %v2718 = vpop.f32.mrb[0].mxu0
        %2719 = vmatprep.mubr.bf16.mxu0 0
        %2720 = vmatmul.mubr.bf16.gmra.mrb[0].mxu0 %v2573
        %v2721 = vpop.f32.mrb[0].mxu0
        %v2722 = vadd.f32 %v2549, %v2721
        %v2723 = vpop.f32.mrb[0].mxu0
        %v2724 = vpop.f32.mrb[0].mxu0
        %v2725 = vpop.f32.mrb[0].mxu0
        %2726 = vmatprep.mubr.bf16.mxu0 0
        %2727 = vmatmul.mubr.bf16.gmra.mrb[0].mxu0 %v2576
        %v2728 = vpop.f32.mrb[0].mxu0
        %v2729 = vpop.f32.mrb[0].mxu0
        %v2730 = vpop.f32.mrb[0].mxu0
        %v2731 = vadd.f32 %v2549, %v2730
        %v2732 = vpop.f32.mrb[0].mxu0
        %2733 = vmatprep.mubr.bf16.mxu0 0
        %2734 = vmatmul.mubr.bf16.gmra.mrb[0].mxu0 %v2579
        %v2735 = vpop.f32.mrb[0].mxu0
        %v2736 = vadd.f32 %v2549, %v2735
        %v2737 = vpop.f32.mrb[0].mxu0
        %v2738 = vpop.f32.mrb[0].mxu0
        %v2739 = vpop.f32.mrb[0].mxu0
        %2740 = vmatprep.mubr.bf16.mxu0 0
        %2741 = vmatmul.mubr.bf16.gmra.mrb[0].mxu0 %v2582
        %v2742 = vpop.f32.mrb[0].mxu0
        %v2743 = vpop.f32.mrb[0].mxu0
        %v2744 = vpop.f32.mrb[0].mxu0
        %v2745 = vadd.f32 %v2549, %v2744
        %v2746 = vpop.f32.mrb[0].mxu0
        %2747 = vmatprep.mubr.bf16.mxu0 0
        %2748 = vmatmul.mubr.bf16.gmra.mrb[0].mxu0 %v2585
        %v2749 = vpop.f32.mrb[0].mxu0
        %v2750 = vadd.f32 %v2549, %v2749
        %v2751 = vpop.f32.mrb[0].mxu0
        %v2752 = vpop.f32.mrb[0].mxu0
        %v2753 = vpop.f32.mrb[0].mxu0
        %2754 = vmatprep.mubr.bf16.mxu0 0
        %2755 = vmatmul.mubr.bf16.gmra.mrb[0].mxu0 %v2588
        %v2756 = vpop.f32.mrb[0].mxu0
        %v2757 = vpop.f32.mrb[0].mxu0
        %v2758 = vpop.f32.mrb[0].mxu0
        %v2759 = vadd.f32 %v2549, %v2758
        %v2760 = vpop.f32.mrb[0].mxu0
        %2761 = vmatprep.mubr.bf16.mxu0 0
        %2762 = vmatmul.mubr.bf16.gmra.mrb[0].mxu0 %v2591
        %v2763 = vpop.f32.mrb[0].mxu0
        %v2764 = vadd.f32 %v2549, %v2763
        %v2765 = vpop.f32.mrb[0].mxu0
        %v2766 = vpop.f32.mrb[0].mxu0
        %v2767 = vpop.f32.mrb[0].mxu0
        %2768 = vmatprep.mubr.bf16.mxu0 0
        %2769 = vmatmul.mubr.bf16.gmra.mrb[0].mxu0 %v2594
        %v2770 = vpop.f32.mrb[0].mxu0
        %v2771 = vpop.f32.mrb[0].mxu0
        %v2772 = vpop.f32.mrb[0].mxu0
        %v2773 = vadd.f32 %v2549, %v2772
        %v2774 = vpop.f32.mrb[0].mxu0
        %2775 = vmatprep.mubr.bf16.mxu0 0
        %2776 = vmatmul.mubr.bf16.gmra.mrb[0].mxu0 %v2597
        %v2777 = vpop.f32.mrb[0].mxu0
        %v2778 = vadd.f32 %v2549, %v2777
        %v2779 = vpop.f32.mrb[0].mxu0
        %v2780 = vpop.f32.mrb[0].mxu0
        %v2781 = vpop.f32.mrb[0].mxu0
        %2782 = vmatprep.mubr.bf16.mxu0 0
        %2783 = vmatmul.mubr.bf16.gmra.mrb[0].mxu0 %v2600
        %v2784 = vpop.f32.mrb[0].mxu0
        %v2785 = vpop.f32.mrb[0].mxu0
        %v2786 = vpop.f32.mrb[0].mxu0
        %v2787 = vadd.f32 %v2549, %v2786
        %v2788 = vpop.f32.mrb[0].mxu0
        %2789 = vmatprep.mubr.bf16.mxu0 0
        %2790 = vmatmul.mubr.bf16.gmra.mrb[0].mxu0 %v2603
        %v2791 = vpop.f32.mrb[0].mxu0
        %v2792 = vadd.f32 %v2549, %v2791
        %v2793 = vpop.f32.mrb[0].mxu0
        %v2794 = vpop.f32.mrb[0].mxu0
        %v2795 = vpop.f32.mrb[0].mxu0
        %2796 = vmatprep.mubr.bf16.mxu0 0
        %2797 = vmatmul.mubr.bf16.gmra.mrb[0].mxu0 %v2606
        %v2798 = vpop.f32.mrb[0].mxu0
        %v2799 = vpop.f32.mrb[0].mxu0
        %v2800 = vpop.f32.mrb[0].mxu0
        %v2801 = vadd.f32 %v2549, %v2800
        %v2802 = vpop.f32.mrb[0].mxu0
        %2803 = vmatprep.mubr.bf16.mxu0 0
        %2804 = vmatmul.mubr.bf16.gmra.mrb[0].mxu0 %v2609
        %v2805 = vpop.f32.mrb[0].mxu0
        %v2806 = vadd.f32 %v2549, %v2805
        %v2807 = vpop.f32.mrb[0].mxu0
        %v2808 = vpop.f32.mrb[0].mxu0
        %v2809 = vpop.f32.mrb[0].mxu0
        %2810 = vmatprep.mubr.bf16.mxu0 0
        %2811 = vmatmul.mubr.bf16.gmra.mrb[0].mxu0 %v2612
        %v2812 = vpop.f32.mrb[0].mxu0
        %v2813 = vpop.f32.mrb[0].mxu0
        %v2814 = vpop.f32.mrb[0].mxu0
        %v2815 = vadd.f32 %v2549, %v2814
        %v2816 = vpop.f32.mrb[0].mxu0
        %2817 = vmatprep.mubr.bf16.mxu0 0
        %2818 = vmatmul.mubr.bf16.gmra.mrb[0].mxu0 %v2615
        %v2819 = vpop.f32.mrb[0].mxu0
        %v2820 = vadd.f32 %v2549, %v2819
        %v2821 = vpop.f32.mrb[0].mxu0
        %v2822 = vpop.f32.mrb[0].mxu0
        %v2823 = vpop.f32.mrb[0].mxu0
        %2824 = vmatprep.mubr.bf16.mxu0 0
        %2825 = vmatmul.mubr.bf16.gmra.mrb[0].mxu0 %v2618
        %v2826 = vpop.f32.mrb[0].mxu0
        %v2827 = vpop.f32.mrb[0].mxu0
        %v2828 = vpop.f32.mrb[0].mxu0
        %v2829 = vadd.f32 %v2549, %v2828
        %v2830 = vpop.f32.mrb[0].mxu0
        %2831 = vmatprep.mubr.bf16.mxu0 0
        %2832 = vmatmul.mubr.bf16.gmra.mrb[0].mxu0 %v2621
        %v2833 = vpop.f32.mrb[0].mxu0
        %v2834 = vadd.f32 %v2549, %v2833
        %v2835 = vpop.f32.mrb[0].mxu0
        %v2836 = vpop.f32.mrb[0].mxu0
        %v2837 = vpop.f32.mrb[0].mxu0
        %2838 = vmatprep.mubr.bf16.mxu0 0
        %2839 = vmatmul.mubr.bf16.gmra.mrb[0].mxu0 %v2624
        %v2840 = vpop.f32.mrb[0].mxu0
        %v2841 = vpop.f32.mrb[0].mxu0
        %v2842 = vpop.f32.mrb[0].mxu0
        %v2843 = vadd.f32 %v2549, %v2842
        %v2844 = vpop.f32.mrb[0].mxu0
        %2845 = vmatprep.mubr.bf16.mxu0 0
        %2846 = vmatmul.mubr.bf16.gmra.mrb[0].mxu0 %v2627
        %v2847 = vpop.f32.mrb[0].mxu0
        %v2848 = vadd.f32 %v2549, %v2847
        %v2849 = vpop.f32.mrb[0].mxu0
        %v2850 = vpop.f32.mrb[0].mxu0
        %v2851 = vpop.f32.mrb[0].mxu0
        %2852 = vmatprep.mubr.bf16.mxu0 0
        %2853 = vmatmul.mubr.bf16.gmra.mrb[0].mxu0 %v2630
        %v2854 = vpop.f32.mrb[0].mxu0
        %v2855 = vpop.f32.mrb[0].mxu0
        %v2856 = vpop.f32.mrb[0].mxu0
        %v2857 = vadd.f32 %v2549, %v2856
        %v2858 = vpop.f32.mrb[0].mxu0
        %2859 = vmatprep.mubr.bf16.mxu0 0
        %2860 = vmatmul.mubr.bf16.gmra.mrb[0].mxu0 %v2633
        %v2861 = vpop.f32.mrb[0].mxu0
        %v2862 = vadd.f32 %v2549, %v2861
        %v2863 = vpop.f32.mrb[0].mxu0
        %v2864 = vpop.f32.mrb[0].mxu0
        %v2865 = vpop.f32.mrb[0].mxu0
        %2866 = vmatprep.mubr.bf16.mxu0 0
        %2867 = vmatmul.mubr.bf16.gmra.mrb[0].mxu0 %v2636
        %v2868 = vpop.f32.mrb[0].mxu0
        %v2869 = vpop.f32.mrb[0].mxu0
        %v2870 = vpop.f32.mrb[0].mxu0
        %v2871 = vadd.f32 %v2549, %v2870
        %v2872 = vpop.f32.mrb[0].mxu0
        %2873 = vmatprep.mubr.bf16.mxu0 0
        %2874 = vmatmul.mubr.bf16.gmra.mrb[0].mxu0 %v2639
        %v2875 = vpop.f32.mrb[0].mxu0
        %v2876 = vadd.f32 %v2549, %v2875
        %v2877 = vpop.f32.mrb[0].mxu0
        %v2878 = vpop.f32.mrb[0].mxu0
        %v2879 = vpop.f32.mrb[0].mxu0
        %2880 = vmatprep.mubr.bf16.mxu0 0
        %2881 = vmatmul.mubr.bf16.gmra.mrb[0].mxu0 %v2642
        %v2882 = vpop.f32.mrb[0].mxu0
        %v2883 = vpop.f32.mrb[0].mxu0
        %v2884 = vpop.f32.mrb[0].mxu0
        %v2885 = vadd.f32 %v2549, %v2884
        %v2886 = vpop.f32.mrb[0].mxu0
        %2887 = vmatprep.mubr.bf16.mxu0 0
        %2888 = vmatmul.mubr.bf16.gmra.mrb[0].mxu0 %v2645
        %v2889 = vpop.f32.mrb[0].mxu0
        %v2890 = vadd.f32 %v2549, %v2889
        %v2891 = vpop.f32.mrb[0].mxu0
        %v2892 = vpop.f32.mrb[0].mxu0
        %v2893 = vpop.f32.mrb[0].mxu0
        %2894 = vmatprep.mubr.bf16.mxu0 0
        %2895 = vmatmul.mubr.bf16.gmra.mrb[0].mxu0 %v2648
        %v2896 = vpop.f32.mrb[0].mxu0
        %v2897 = vpop.f32.mrb[0].mxu0
        %v2898 = vpop.f32.mrb[0].mxu0
        %v2899 = vadd.f32 %v2549, %v2898
        %v2900 = vpop.f32.mrb[0].mxu0
        %2901 = vmatprep.mubr.bf16.mxu0 0
        %2902 = vmatmul.mubr.bf16.gmra.mrb[0].mxu0 %v2651
        %v2903 = vpop.f32.mrb[0].mxu0
        %v2904 = vadd.f32 %v2549, %v2903
        %v2905 = vpop.f32.mrb[0].mxu0
        %v2906 = vpop.f32.mrb[0].mxu0
        %v2907 = vpop.f32.mrb[0].mxu0
        %2908 = vmatprep.mubr.bf16.mxu0 0
        %2909 = vmatmul.mubr.bf16.gmra.mrb[0].mxu0 %v2654
        %v2910 = vpop.f32.mrb[0].mxu0
        %v2911 = vpop.f32.mrb[0].mxu0
        %v2912 = vpop.f32.mrb[0].mxu0
        %v2913 = vadd.f32 %v2549, %v2912
        %v2914 = vpop.f32.mrb[0].mxu0
        %2915 = vmatprep.mubr.bf16.mxu0 0
        %2916 = vmatmul.mubr.bf16.gmra.mrb[0].mxu0 %v2657
        %v2917 = vpop.f32.mrb[0].mxu0
        %v2918 = vadd.f32 %v2549, %v2917
        %v2919 = vpop.f32.mrb[0].mxu0
        %v2920 = vpop.f32.mrb[0].mxu0
        %v2921 = vpop.f32.mrb[0].mxu0
        %2922 = vdwg.mxu0
        %vm2923 = vcmask 261120
        %2924 = vst.msk [vmem:[%s163] sm:$0xff] %vm2923, %v2703
        %2925 = vst.msk [vmem:[%s163 + $0x8] sm:$0xff] %vm2923, %v2708
        %s2926 = scalar_lea.vmem %s163, 16 [#allocation4]
        %2927 = vst.msk [vmem:[%s2926] sm:$0xff] %vm2923, %v2717
        %2928 = vst.msk [vmem:[%s2926 + $0x8] sm:$0xff] %vm2923, %v2722
        %s2929 = scalar_lea.vmem %s163, 32 [#allocation4]
        %2930 = vst.msk [vmem:[%s2929] sm:$0xff] %vm2923, %v2731
        %2931 = vst.msk [vmem:[%s2929 + $0x8] sm:$0xff] %vm2923, %v2736
        %s2932 = scalar_lea.vmem %s163, 48 [#allocation4]
        %2933 = vst.msk [vmem:[%s2932] sm:$0xff] %vm2923, %v2745
        %2934 = vst.msk [vmem:[%s2932 + $0x8] sm:$0xff] %vm2923, %v2750
        %s2935 = scalar_lea.vmem %s163, 64 [#allocation4]
        %2936 = vst.msk [vmem:[%s2935] sm:$0xff] %vm2923, %v2759
        %2937 = vst.msk [vmem:[%s2935 + $0x8] sm:$0xff] %vm2923, %v2764
        %s2938 = scalar_lea.vmem %s163, 80 [#allocation4]
        %2939 = vst.msk [vmem:[%s2938] sm:$0xff] %vm2923, %v2773
        %2940 = vst.msk [vmem:[%s2938 + $0x8] sm:$0xff] %vm2923, %v2778
        %s2941 = scalar_lea.vmem %s163, 96 [#allocation4]
        %2942 = vst.msk [vmem:[%s2941] sm:$0xff] %vm2923, %v2787
        %2943 = vst.msk [vmem:[%s2941 + $0x8] sm:$0xff] %vm2923, %v2792
        %s2944 = scalar_lea.vmem %s163, 112 [#allocation4]
        %2945 = vst.msk [vmem:[%s2944] sm:$0xff] %vm2923, %v2801
        %2946 = vst.msk [vmem:[%s2944 + $0x8] sm:$0xff] %vm2923, %v2806
        %s2947 = scalar_lea.vmem %s163, 128 [#allocation4]
        %2948 = vst.msk [vmem:[%s2947] sm:$0xff] %vm2923, %v2815
        %2949 = vst.msk [vmem:[%s2947 + $0x8] sm:$0xff] %vm2923, %v2820
        %s2950 = scalar_lea.vmem %s163, 144 [#allocation4]
        %2951 = vst.msk [vmem:[%s2950] sm:$0xff] %vm2923, %v2829
        %2952 = vst.msk [vmem:[%s2950 + $0x8] sm:$0xff] %vm2923, %v2834
        %s2953 = scalar_lea.vmem %s163, 160 [#allocation4]
        %2954 = vst.msk [vmem:[%s2953] sm:$0xff] %vm2923, %v2843
        %2955 = vst.msk [vmem:[%s2953 + $0x8] sm:$0xff] %vm2923, %v2848
        %s2956 = scalar_lea.vmem %s163, 176 [#allocation4]
        %2957 = vst.msk [vmem:[%s2956] sm:$0xff] %vm2923, %v2857
        %2958 = vst.msk [vmem:[%s2956 + $0x8] sm:$0xff] %vm2923, %v2862
        %s2959 = scalar_lea.vmem %s163, 192 [#allocation4]
        %2960 = vst.msk [vmem:[%s2959] sm:$0xff] %vm2923, %v2871
        %2961 = vst.msk [vmem:[%s2959 + $0x8] sm:$0xff] %vm2923, %v2876
        %s2962 = scalar_lea.vmem %s163, 208 [#allocation4]
        %2963 = vst.msk [vmem:[%s2962] sm:$0xff] %vm2923, %v2885
        %2964 = vst.msk [vmem:[%s2962 + $0x8] sm:$0xff] %vm2923, %v2890
        %s2965 = scalar_lea.vmem %s163, 224 [#allocation4]
        %2966 = vst.msk [vmem:[%s2965] sm:$0xff] %vm2923, %v2899
        %2967 = vst.msk [vmem:[%s2965 + $0x8] sm:$0xff] %vm2923, %v2904
        %s2968 = scalar_lea.vmem %s163, 240 [#allocation4]
        %2969 = vst.msk [vmem:[%s2968] sm:$0xff] %vm2923, %v2913
        %2970 = vst.msk [vmem:[%s2968 + $0x8] sm:$0xff] %vm2923, %v2918
        %s2971 = sand.u32 %s93, 1
        %s2972 = scalar_lea.sflag [#allocation5], %s2971
        %s2973 = sand.u32 %s93, 1
        %s2974 = smul.addr %s2973, 256
        %s2975 = scalar_lea.vmem [#allocation4], %s2974
        // Predicated region
        $region33: #{conv3x3.1} parent=31 // pred_check
          %p2976 = pneg %p103
        $region34: #{conv3x3.1} parent=31 // pred_check_branch
          %2978 = sbr.rel (%p2976) target = $region36
        $region35: #{conv3x3.1} parent=31 // pred_region
          %s2980 = ssub.s32 4096, 4096
          %2981 = vsyncadd %s2972, %s2980
          %s2982 = smul.addr %s17, 32
          %s2983 = smul.addr %s2982, 128
          %s2984 = scalar_lea.hbm %s3, %s2983
          %s2985 = sshll.u32 %s2975, 4
          %s2986 = int_to_ptr.vmem [resolvable:$true] %s2985
          %2991 = dma.vmem_to_hbm [thread:$0]  %s2986, 4096, %s2984, %s2972, 128, 128, 8
        $region36: #{conv3x3.1} parent=31 // pred_fallthru
          _
      $region32: #{conv3x3.1} parent=5 // pred_fallthru
        _
      %p2992 = scmp.le.s32.totalorder 2, %s12
      // Predicated region
      $region37: #{conv3x3.1} parent=5 // pred_check
        %p2993 = pneg %p2992
      $region38: #{conv3x3.1} parent=5 // pred_check_branch
        %2995 = sbr.rel (%p2993) target = $region40
      $region39: #{conv3x3.1} parent=5 // pred_region
        %s2996 = ssub.s32 %s12, 2
        // Predicated region
        $region41: #{conv3x3.1} parent=39 // pred_check
          %p2997 = pneg %p109
        $region42: #{conv3x3.1} parent=39 // pred_check_branch
          %2999 = sbr.rel (%p2997) target = $region44
        $region43: #{conv3x3.1} parent=39 // pred_region
          %s3000 = sand.u32 %s94, 1
          %s3001 = scalar_lea.sflag [#allocation5], %s3000
          %s3002 = sand.u32 %s94, 1
          %s3003 = smul.addr %s3002, 256
          %s3004 = scalar_lea.vmem [#allocation4], %s3003
          %3005 = dma.done %s3001, 4096
        $region44: #{conv3x3.1} parent=39 // pred_fallthru
          _
      $region40: #{conv3x3.1} parent=5 // pred_fallthru
        _
    $region6: #{conv3x3.1} parent=1 // loop_footer
      %s16 = sadd.s32 1, %s12
    $region7: #{conv3x3.1} parent=1 // loop_footer_branch
      %11 = sbr.rel target = $region3
    $region8: #{conv3x3.1} parent=1 // loop_exit
      _
    %3006 = vsyncpa [#allocation5], 1
    %s3007 = scalar_lea.sflag [#allocation5], 1
    %3008 = vsyncpa %s3007, 1

</llo_original>
